<compile_context>
chip_gen: v7x
topology: tpu7x:2x2x1
jax: 0.10.0
libtpu: 0.0.40
codegen_flags: <defaults>
</compile_context>

<pallas_src>
import jax
import jax.numpy as jnp
from jax import lax
from jax.experimental import pallas as pl
from jax.experimental.pallas import tpu as pltpu


# ---------------------------------------------------------------------------
# Generation-aware block-size selection
# ---------------------------------------------------------------------------
def _num_tensorcores():
    try:
        kind = jax.devices()[0].device_kind.lower()
    except Exception:
        return 1
    if ("v7" in kind) or ("v4" in kind) or ("v5p" in kind):
        return 2
    return 1


def _pick_block(n, hw, per_elem_bytes, num_tc, vmem_budget=8 << 20):
    """Largest batch-block that fits the VMEM budget; >= num_tc grid steps if possible."""
    divisors = sorted((d for d in range(1, n + 1) if n % d == 0), reverse=True)

    def ok(d):
        if 2 * d * per_elem_bytes > vmem_budget:       # double-buffered blocks
            return False
        if d != n and (d * hw) % 128 != 0:             # lane-dim legality when tiled
            return False
        return True

    for d in divisors:                                  # prefer feeding every TC
        if ok(d) and n // d >= num_tc:
            return d
    for d in divisors:                                  # else: fattest legal block
        if ok(d):
            return d
    return 1


# ---------------------------------------------------------------------------
# Pallas kernel
# ---------------------------------------------------------------------------
def make_scffm_kernel(H, W, K, Cout, L):
    HW = H * W
    pad = K // 2
    inv_hw = 1.0 / float(HW)

    def kernel(xh_ref, low_ref, wcat_ref, bcat_ref,
               w1_ref, b1_ref, w2_ref, b2_ref,
               mask_ref, eb_ref, ebt_ref, out_ref):
        f32 = jnp.float32

        # ---- one fused MXU matmul: conv_high rows + 49 spatial-tap rows ----
        xh = xh_ref[...]                                             # (Ch, L)
        res = jnp.dot(wcat_ref[...], xh,
                      preferred_element_type=f32) + bcat_ref[...]    # (Cout+KK, L)
        h = res[:Cout, :]                                            # (Cout, L)
        # per-tap bias is already in `res`; mask AFTER bias (conv zero padding)
        m = res[Cout:, :] * mask_ref[...]                            # (KK, L)

        # ---- spatial attention: 49 in-vreg lane rolls + tree accumulate ----
        parts = []
        for kh in range(K):
            part = None
            for kw in range(K):
                t = kh * K + kw
                off = (kh - pad) * W + (kw - pad)
                row = m[t:t + 1, :]                                  # (1, L)
                r = row if off == 0 else pltpu.roll(row, (-off) % L, axis=1)
                part = r if part is None else part + r
            parts.append(part)
        acc = parts[0]
        for p in parts[1:]:
            acc = acc + p
        # b_sp was folded into the (always-valid) center tap's bias in bcat.
        sa = jax.nn.sigmoid(acc)                                     # (1, L)

        # ---- channel attention: per-batch mean -> 1x1 -> relu -> 1x1 -> sigmoid
        hmean = jnp.dot(h, ebt_ref[...],
                        preferred_element_type=f32) * inv_hw         # (Cout, Bt)
        z = jnp.maximum(jnp.dot(w1_ref[...], hmean,
                                preferred_element_type=f32) + b1_ref[...], 0.0)
        ca = jax.nn.sigmoid(jnp.dot(w2_ref[...], z,
                                    preferred_element_type=f32) + b2_ref[...])

        # ---- SC combine + feature fusion (x*ca + x*sa == x*(ca+sa)) ---------
        att = jnp.dot(ca, eb_ref[...], preferred_element_type=f32) + sa  # (Cout, L)
        xh_sc = h * att                                               # (Cout, L)

        cw = jnp.dot(xh_sc, ebt_ref[...],
                     preferred_element_type=f32) * inv_hw             # (Cout, Bt)
        lowcw = low_ref[...] * cw                                     # (Cout, Bt)
        out_ref[...] = (jnp.dot(lowcw, eb_ref[...], preferred_element_type=f32)
                        + xh_sc).astype(out_ref.dtype)

    return kernel


# ---------------------------------------------------------------------------
# Wrapper (layout plumbing + pallas_call)
# ---------------------------------------------------------------------------
def scffm_forward(x_low, x_high, params, block_n=None):
    # x_low: (N, Cl, Hl, Wl) NCHW;  x_high: (N, Ch, H, W) NCHW
    N, Cl, _, _ = x_low.shape
    _, Ch, H, W = x_high.shape
    Cout = params["w_low"].shape[0]
    Cred = params["w_ca1"].shape[0]
    K = params["w_sp"].shape[-1]
    HW = H * W
    KK = K * K
    pad = K // 2
    M = Cout + KK

    per_elem_bytes = (Ch + Cout) * HW * 4
    Bt = (_pick_block(N, HW, per_elem_bytes, _num_tensorcores())
          if block_n is None else block_n)
    assert N % Bt == 0
    G = N // Bt
    L = Bt * HW

    # ---- low path entirely in the wrapper (linearity of the 1x1 conv) ------
    w_low2 = params["w_low"].reshape(Cout, Cl)
    pooled = jnp.mean(x_low, axis=(2, 3))                            # (N, Cl)
    low_cn = (pooled @ w_low2.T + params["b_low"]).T                 # (Cout, N)
    low3 = low_cn.reshape(Cout, G, Bt).transpose(1, 0, 2)            # (G, Cout, Bt)

    # ---- high path: channels on sublanes, batch*HW on lanes ----------------
    xh2d = x_high.reshape(N, Ch, HW).transpose(1, 0, 2).reshape(Ch, N * HW)

    # ---- fuse conv_high + spatial-attention weights -------------------------
    w_high2 = params["w_high"].reshape(Cout, Ch)                     # (Cout, Ch)
    b_high = params["b_high"]                                        # (Cout,)
    wsp_taps = params["w_sp"][0].transpose(1, 2, 0).reshape(KK, Cout)  # (KK, Cout)
    wsp_fused = wsp_taps @ w_high2                                   # (KK, Ch)
    bsp_tap = wsp_taps @ b_high                                      # (KK,)
    wcat = jnp.concatenate([w_high2, wsp_fused], axis=0)             # (M, Ch)
    bcat = jnp.concatenate([b_high, bsp_tap], axis=0)                # (M,)
    center = Cout + (pad * K + pad)                                  # never masked
    bcat = bcat.at[center].add(params["b_sp"].reshape(()))
    bcat = bcat.reshape(M, 1)

    w1 = params["w_ca1"].reshape(Cred, Cout)
    b1 = params["b_ca1"].reshape(Cred, 1)
    w2 = params["w_ca2"].reshape(Cout, Cred)
    b2 = params["b_ca2"].reshape(Cout, 1)

    # ---- combined row+column validity mask (source-indexed, pre-roll) ------
    q = jnp.arange(HW, dtype=jnp.int32)
    y = q // W
    x = q % W
    outmask_rows = []
    offs = []
    for t in range(KK):
        dh = t // K - pad
        dw = t % K - pad
        offs.append(dh * W + dw)
        valid = ((y + dh >= 0) & (y + dh < H) &
                 (x + dw >= 0) & (x + dw < W)).astype(jnp.float32)
        # pre-roll form: srcmask[t, s] = outmask[t, (s - off_t) mod HW]
        outmask_rows.append(jnp.roll(valid, offs[-1]))
    srcmask = jnp.tile(jnp.stack(outmask_rows, axis=0), (1, Bt))     # (KK, L)

    # ---- batch-expansion matrix (per-batch broadcast / mean via matmul) ----
    eb = (jnp.arange(L, dtype=jnp.int32)[None, :] // HW ==
          jnp.arange(Bt, dtype=jnp.int32)[:, None]).astype(jnp.float32)  # (Bt, L)
    ebT = eb.T                                                            # (L, Bt)

    kernel = make_scffm_kernel(H, W, K, Cout, L)

    def _full(a):
        nd = a.ndim
        return pl.BlockSpec(a.shape, lambda n, _nd=nd: (0,) * _nd)

    out2d = pl.pallas_call(
        kernel,
        out_shape=jax.ShapeDtypeStruct((Cout, N * HW), jnp.float32),
        grid=(G,),
        in_specs=[
            pl.BlockSpec((Ch, L), lambda n: (0, n)),                  # xh2d
            pl.BlockSpec((pl.Squeezed(), Cout, Bt), lambda n: (n, 0, 0)),  # low3
            _full(wcat), _full(bcat),
            _full(w1), _full(b1), _full(w2), _full(b2),
            _full(srcmask), _full(eb), _full(ebT),
        ],
        out_specs=pl.BlockSpec((Cout, L), lambda n: (0, n)),
        compiler_params=pltpu.CompilerParams(
            dimension_semantics=("parallel",),
            vmem_limit_bytes=32 * 1024 * 1024),
    )(xh2d, low3, wcat, bcat, w1, b1, w2, b2, srcmask, eb, ebT)

    # (Cout, N*HW) -> (N, Cout, H, W): single wrapper-side transpose.
    return out2d.reshape(Cout, N, HW).transpose(1, 0, 2).reshape(N, Cout, H, W)


# ---------------------------------------------------------------------------
# Pure-JAX reference (mirrors the PyTorch module, NCHW)
# ---------------------------------------------------------------------------
def scffm_reference(x_low, x_high, params):
    def conv1x1(x, w, b):
        return (jnp.einsum("nihw,oi->nohw", x, w[:, :, 0, 0])
                + b[None, :, None, None])

    xl = conv1x1(x_low, params["w_low"], params["b_low"])
    xl = jnp.mean(xl, axis=(2, 3), keepdims=True)

    xh = conv1x1(x_high, params["w_high"], params["b_high"])

    pooled = jnp.mean(xh, axis=(2, 3), keepdims=True)
    z = jnp.maximum(conv1x1(pooled, params["w_ca1"], params["b_ca1"]), 0.0)
    ca = jax.nn.sigmoid(conv1x1(z, params["w_ca2"], params["b_ca2"]))

    sa_logit = lax.conv_general_dilated(
        xh, params["w_sp"], window_strides=(1, 1),
        padding=((3, 3), (3, 3)),
        dimension_numbers=("NCHW", "OIHW", "NCHW"))
    sa = jax.nn.sigmoid(sa_logit + params["b_sp"][None, :, None, None])

    xh_sc = xh * ca + xh * sa
    cw = jnp.mean(xh_sc, axis=(2, 3), keepdims=True)
    return xl * cw + xh_sc


# ---------------------------------------------------------------------------
# Deterministic parameter init (torch Conv2d weight shapes)
# ---------------------------------------------------------------------------
def init_params(key, c_low, c_high, c_out, reduction, k=7):
    keys = jax.random.split(key, 10)
    c_red = c_out // reduction

    def u(kk, shape, scale=0.2):
        return jax.random.uniform(kk, shape, jnp.float32, -1.0, 1.0) * scale

    return {
        "w_low":  u(keys[0], (c_out, c_low, 1, 1)),
        "b_low":  u(keys[1], (c_out,)),
        "w_high": u(keys[2], (c_out, c_high, 1, 1)),
        "b_high": u(keys[3], (c_out,)),
        "w_ca1":  u(keys[4], (c_red, c_out, 1, 1)),
        "b_ca1":  u(keys[5], (c_red,)),
        "w_ca2":  u(keys[6], (c_out, c_red, 1, 1)),
        "b_ca2":  u(keys[7], (c_out,)),
        "w_sp":   u(keys[8], (1, c_out, k, k), scale=0.05),
        "b_sp":   u(keys[9], (1,)),
    }


if __name__ == "__main__":
    N, C_low, C_high, C_out, reduction = 2, 8, 8, 32, 16
    Hl = Wl = 32          # low-level feature spatial size (only avg-pooled)
    H = W = 16            # high-level feature spatial size

    key = jax.random.PRNGKey(0)
    k_xl, k_xh, k_p = jax.random.split(key, 3)
    x_low = jax.random.normal(k_xl, (N, C_low, Hl, Wl), jnp.float32)
    x_high = jax.random.normal(k_xh, (N, C_high, H, W), jnp.float32)
    params = init_params(k_p, C_low, C_high, C_out, reduction)

    out = scffm_forward(x_low, x_high, params)
    out = jax.block_until_ready(out)

    ref = scffm_reference(x_low, x_high, params)
    assert out.shape == (N, C_out, H, W), out.shape
    err = float(jnp.max(jnp.abs(out - ref)))
    assert err < 2e-4, f"max abs err {err}"
    print("KERNEL_OK")
</pallas_src>

<mosaic_0001>
module attributes {stable_mosaic.version = 11 : i64} {
  func.func @kernel(%arg0: i32, %arg1: memref<8x512xf32, #tpu.memory_space<vmem>>, %arg2: memref<1x32x2xf32, #tpu.memory_space<vmem>>, %arg3: memref<81x8xf32, #tpu.memory_space<vmem>>, %arg4: memref<81x1xf32, #tpu.memory_space<vmem>>, %arg5: memref<2x32xf32, #tpu.memory_space<vmem>>, %arg6: memref<2x1xf32, #tpu.memory_space<vmem>>, %arg7: memref<32x2xf32, #tpu.memory_space<vmem>>, %arg8: memref<32x1xf32, #tpu.memory_space<vmem>>, %arg9: memref<49x512xf32, #tpu.memory_space<vmem>>, %arg10: memref<2x512xf32, #tpu.memory_space<vmem>>, %arg11: memref<512x2xf32, #tpu.memory_space<vmem>>, %arg12: memref<32x512xf32, #tpu.memory_space<vmem>>) attributes {dimension_semantics = [#tpu.dimension_semantics<parallel>], iteration_bounds = array<i64: 1>, scalar_prefetch = 0 : i64, scratch_operands = 0 : i64, tpu.core_type = #tpu.core_type<tc>, window_params = [{transform_indices = @transform_0, window_bounds = array<i64: 8, 512>}, {transform_indices = @transform_1, window_bounds = array<i64: 1, 32, 2>}, {pipeline_mode = #tpu.pipeline_mode<synchronous>, transform_indices = @transform_2, window_bounds = array<i64: 81, 8>}, {pipeline_mode = #tpu.pipeline_mode<synchronous>, transform_indices = @transform_3, window_bounds = array<i64: 81, 1>}, {pipeline_mode = #tpu.pipeline_mode<synchronous>, transform_indices = @transform_4, window_bounds = array<i64: 2, 32>}, {pipeline_mode = #tpu.pipeline_mode<synchronous>, transform_indices = @transform_5, window_bounds = array<i64: 2, 1>}, {pipeline_mode = #tpu.pipeline_mode<synchronous>, transform_indices = @transform_6, window_bounds = array<i64: 32, 2>}, {pipeline_mode = #tpu.pipeline_mode<synchronous>, transform_indices = @transform_7, window_bounds = array<i64: 32, 1>}, {pipeline_mode = #tpu.pipeline_mode<synchronous>, transform_indices = @transform_8, window_bounds = array<i64: 49, 512>}, {pipeline_mode = #tpu.pipeline_mode<synchronous>, transform_indices = @transform_9, window_bounds = array<i64: 2, 512>}, {pipeline_mode = #tpu.pipeline_mode<synchronous>, transform_indices = @transform_10, window_bounds = array<i64: 512, 2>}, {transform_indices = @transform_11, window_bounds = array<i64: 32, 512>}]} {
    %c0 = arith.constant 0 : index
    %c0_0 = arith.constant 0 : index
    %0 = vector.load %arg1[%c0, %c0_0] : memref<8x512xf32, #tpu.memory_space<vmem>>, vector<8x512xf32>
    %c0_1 = arith.constant 0 : index
    %c0_2 = arith.constant 0 : index
    %1 = vector.load %arg3[%c0_1, %c0_2] : memref<81x8xf32, #tpu.memory_space<vmem>>, vector<81x8xf32>
    %cst = arith.constant dense<0.000000e+00> : vector<81x512xf32>
    %2 = tpu.matmul %1, %0, %cst {dimension_numbers = #tpu.dot_dimension_numbers<[1], [0], [0], [1], [0, 0, 1, 1], [], []>} : vector<81x8xf32>, vector<8x512xf32>, vector<81x512xf32> -> vector<81x512xf32>
    %c0_3 = arith.constant 0 : index
    %c0_4 = arith.constant 0 : index
    %3 = vector.load %arg4[%c0_3, %c0_4] : memref<81x1xf32, #tpu.memory_space<vmem>>, vector<81x1xf32>
    %4 = vector.broadcast %3 : vector<81x1xf32> to vector<81x512xf32>
    %5 = arith.addf %2, %4 : vector<81x512xf32>
    %6 = vector.extract_strided_slice %5 {offsets = [0, 0], sizes = [32, 512], strides = [1, 1]} : vector<81x512xf32> to vector<32x512xf32>
    %7 = vector.extract_strided_slice %5 {offsets = [32, 0], sizes = [49, 512], strides = [1, 1]} : vector<81x512xf32> to vector<49x512xf32>
    %c0_5 = arith.constant 0 : index
    %c0_6 = arith.constant 0 : index
    %8 = vector.load %arg9[%c0_5, %c0_6] : memref<49x512xf32, #tpu.memory_space<vmem>>, vector<49x512xf32>
    %9 = arith.mulf %7, %8 : vector<49x512xf32>
    %10 = vector.extract_strided_slice %9 {offsets = [0, 0], sizes = [1, 512], strides = [1, 1]} : vector<49x512xf32> to vector<1x512xf32>
    %c51_i32 = arith.constant 51 : i32
    %11 = tpu.dynamic_rotate %10 by %c51_i32 dim 1 : vector<1x512xf32>, i32 -> vector<1x512xf32>
    %12 = vector.extract_strided_slice %9 {offsets = [1, 0], sizes = [1, 512], strides = [1, 1]} : vector<49x512xf32> to vector<1x512xf32>
    %c50_i32 = arith.constant 50 : i32
    %13 = tpu.dynamic_rotate %12 by %c50_i32 dim 1 : vector<1x512xf32>, i32 -> vector<1x512xf32>
    %14 = arith.addf %11, %13 : vector<1x512xf32>
    %15 = vector.extract_strided_slice %9 {offsets = [2, 0], sizes = [1, 512], strides = [1, 1]} : vector<49x512xf32> to vector<1x512xf32>
    %c49_i32 = arith.constant 49 : i32
    %16 = tpu.dynamic_rotate %15 by %c49_i32 dim 1 : vector<1x512xf32>, i32 -> vector<1x512xf32>
    %17 = arith.addf %14, %16 : vector<1x512xf32>
    %18 = vector.extract_strided_slice %9 {offsets = [3, 0], sizes = [1, 512], strides = [1, 1]} : vector<49x512xf32> to vector<1x512xf32>
    %c48_i32 = arith.constant 48 : i32
    %19 = tpu.dynamic_rotate %18 by %c48_i32 dim 1 : vector<1x512xf32>, i32 -> vector<1x512xf32>
    %20 = arith.addf %17, %19 : vector<1x512xf32>
    %21 = vector.extract_strided_slice %9 {offsets = [4, 0], sizes = [1, 512], strides = [1, 1]} : vector<49x512xf32> to vector<1x512xf32>
    %c47_i32 = arith.constant 47 : i32
    %22 = tpu.dynamic_rotate %21 by %c47_i32 dim 1 : vector<1x512xf32>, i32 -> vector<1x512xf32>
    %23 = arith.addf %20, %22 : vector<1x512xf32>
    %24 = vector.extract_strided_slice %9 {offsets = [5, 0], sizes = [1, 512], strides = [1, 1]} : vector<49x512xf32> to vector<1x512xf32>
    %c46_i32 = arith.constant 46 : i32
    %25 = tpu.dynamic_rotate %24 by %c46_i32 dim 1 : vector<1x512xf32>, i32 -> vector<1x512xf32>
    %26 = arith.addf %23, %25 : vector<1x512xf32>
    %27 = vector.extract_strided_slice %9 {offsets = [6, 0], sizes = [1, 512], strides = [1, 1]} : vector<49x512xf32> to vector<1x512xf32>
    %c45_i32 = arith.constant 45 : i32
    %28 = tpu.dynamic_rotate %27 by %c45_i32 dim 1 : vector<1x512xf32>, i32 -> vector<1x512xf32>
    %29 = arith.addf %26, %28 : vector<1x512xf32>
    %30 = vector.extract_strided_slice %9 {offsets = [7, 0], sizes = [1, 512], strides = [1, 1]} : vector<49x512xf32> to vector<1x512xf32>
    %c35_i32 = arith.constant 35 : i32
    %31 = tpu.dynamic_rotate %30 by %c35_i32 dim 1 : vector<1x512xf32>, i32 -> vector<1x512xf32>
    %32 = vector.extract_strided_slice %9 {offsets = [8, 0], sizes = [1, 512], strides = [1, 1]} : vector<49x512xf32> to vector<1x512xf32>
    %c34_i32 = arith.constant 34 : i32
    %33 = tpu.dynamic_rotate %32 by %c34_i32 dim 1 : vector<1x512xf32>, i32 -> vector<1x512xf32>
    %34 = arith.addf %31, %33 : vector<1x512xf32>
    %35 = vector.extract_strided_slice %9 {offsets = [9, 0], sizes = [1, 512], strides = [1, 1]} : vector<49x512xf32> to vector<1x512xf32>
    %c33_i32 = arith.constant 33 : i32
    %36 = tpu.dynamic_rotate %35 by %c33_i32 dim 1 : vector<1x512xf32>, i32 -> vector<1x512xf32>
    %37 = arith.addf %34, %36 : vector<1x512xf32>
    %38 = vector.extract_strided_slice %9 {offsets = [10, 0], sizes = [1, 512], strides = [1, 1]} : vector<49x512xf32> to vector<1x512xf32>
    %c32_i32 = arith.constant 32 : i32
    %39 = tpu.dynamic_rotate %38 by %c32_i32 dim 1 : vector<1x512xf32>, i32 -> vector<1x512xf32>
    %40 = arith.addf %37, %39 : vector<1x512xf32>
    %41 = vector.extract_strided_slice %9 {offsets = [11, 0], sizes = [1, 512], strides = [1, 1]} : vector<49x512xf32> to vector<1x512xf32>
    %c31_i32 = arith.constant 31 : i32
    %42 = tpu.dynamic_rotate %41 by %c31_i32 dim 1 : vector<1x512xf32>, i32 -> vector<1x512xf32>
    %43 = arith.addf %40, %42 : vector<1x512xf32>
    %44 = vector.extract_strided_slice %9 {offsets = [12, 0], sizes = [1, 512], strides = [1, 1]} : vector<49x512xf32> to vector<1x512xf32>
    %c30_i32 = arith.constant 30 : i32
    %45 = tpu.dynamic_rotate %44 by %c30_i32 dim 1 : vector<1x512xf32>, i32 -> vector<1x512xf32>
    %46 = arith.addf %43, %45 : vector<1x512xf32>
    %47 = vector.extract_strided_slice %9 {offsets = [13, 0], sizes = [1, 512], strides = [1, 1]} : vector<49x512xf32> to vector<1x512xf32>
    %c29_i32 = arith.constant 29 : i32
    %48 = tpu.dynamic_rotate %47 by %c29_i32 dim 1 : vector<1x512xf32>, i32 -> vector<1x512xf32>
    %49 = arith.addf %46, %48 : vector<1x512xf32>
    %50 = vector.extract_strided_slice %9 {offsets = [14, 0], sizes = [1, 512], strides = [1, 1]} : vector<49x512xf32> to vector<1x512xf32>
    %c19_i32 = arith.constant 19 : i32
    %51 = tpu.dynamic_rotate %50 by %c19_i32 dim 1 : vector<1x512xf32>, i32 -> vector<1x512xf32>
    %52 = vector.extract_strided_slice %9 {offsets = [15, 0], sizes = [1, 512], strides = [1, 1]} : vector<49x512xf32> to vector<1x512xf32>
    %c18_i32 = arith.constant 18 : i32
    %53 = tpu.dynamic_rotate %52 by %c18_i32 dim 1 : vector<1x512xf32>, i32 -> vector<1x512xf32>
    %54 = arith.addf %51, %53 : vector<1x512xf32>
    %55 = vector.extract_strided_slice %9 {offsets = [16, 0], sizes = [1, 512], strides = [1, 1]} : vector<49x512xf32> to vector<1x512xf32>
    %c17_i32 = arith.constant 17 : i32
    %56 = tpu.dynamic_rotate %55 by %c17_i32 dim 1 : vector<1x512xf32>, i32 -> vector<1x512xf32>
    %57 = arith.addf %54, %56 : vector<1x512xf32>
    %58 = vector.extract_strided_slice %9 {offsets = [17, 0], sizes = [1, 512], strides = [1, 1]} : vector<49x512xf32> to vector<1x512xf32>
    %c16_i32 = arith.constant 16 : i32
    %59 = tpu.dynamic_rotate %58 by %c16_i32 dim 1 : vector<1x512xf32>, i32 -> vector<1x512xf32>
    %60 = arith.addf %57, %59 : vector<1x512xf32>
    %61 = vector.extract_strided_slice %9 {offsets = [18, 0], sizes = [1, 512], strides = [1, 1]} : vector<49x512xf32> to vector<1x512xf32>
    %c15_i32 = arith.constant 15 : i32
    %62 = tpu.dynamic_rotate %61 by %c15_i32 dim 1 : vector<1x512xf32>, i32 -> vector<1x512xf32>
    %63 = arith.addf %60, %62 : vector<1x512xf32>
    %64 = vector.extract_strided_slice %9 {offsets = [19, 0], sizes = [1, 512], strides = [1, 1]} : vector<49x512xf32> to vector<1x512xf32>
    %c14_i32 = arith.constant 14 : i32
    %65 = tpu.dynamic_rotate %64 by %c14_i32 dim 1 : vector<1x512xf32>, i32 -> vector<1x512xf32>
    %66 = arith.addf %63, %65 : vector<1x512xf32>
    %67 = vector.extract_strided_slice %9 {offsets = [20, 0], sizes = [1, 512], strides = [1, 1]} : vector<49x512xf32> to vector<1x512xf32>
    %c13_i32 = arith.constant 13 : i32
    %68 = tpu.dynamic_rotate %67 by %c13_i32 dim 1 : vector<1x512xf32>, i32 -> vector<1x512xf32>
    %69 = arith.addf %66, %68 : vector<1x512xf32>
    %70 = vector.extract_strided_slice %9 {offsets = [21, 0], sizes = [1, 512], strides = [1, 1]} : vector<49x512xf32> to vector<1x512xf32>
    %c3_i32 = arith.constant 3 : i32
    %71 = tpu.dynamic_rotate %70 by %c3_i32 dim 1 : vector<1x512xf32>, i32 -> vector<1x512xf32>
    %72 = vector.extract_strided_slice %9 {offsets = [22, 0], sizes = [1, 512], strides = [1, 1]} : vector<49x512xf32> to vector<1x512xf32>
    %c2_i32 = arith.constant 2 : i32
    %73 = tpu.dynamic_rotate %72 by %c2_i32 dim 1 : vector<1x512xf32>, i32 -> vector<1x512xf32>
    %74 = arith.addf %71, %73 : vector<1x512xf32>
    %75 = vector.extract_strided_slice %9 {offsets = [23, 0], sizes = [1, 512], strides = [1, 1]} : vector<49x512xf32> to vector<1x512xf32>
    %c1_i32 = arith.constant 1 : i32
    %76 = tpu.dynamic_rotate %75 by %c1_i32 dim 1 : vector<1x512xf32>, i32 -> vector<1x512xf32>
    %77 = arith.addf %74, %76 : vector<1x512xf32>
    %78 = vector.extract_strided_slice %9 {offsets = [24, 0], sizes = [1, 512], strides = [1, 1]} : vector<49x512xf32> to vector<1x512xf32>
    %79 = arith.addf %77, %78 : vector<1x512xf32>
    %80 = vector.extract_strided_slice %9 {offsets = [25, 0], sizes = [1, 512], strides = [1, 1]} : vector<49x512xf32> to vector<1x512xf32>
    %c511_i32 = arith.constant 511 : i32
    %81 = tpu.dynamic_rotate %80 by %c511_i32 dim 1 : vector<1x512xf32>, i32 -> vector<1x512xf32>
    %82 = arith.addf %79, %81 : vector<1x512xf32>
    %83 = vector.extract_strided_slice %9 {offsets = [26, 0], sizes = [1, 512], strides = [1, 1]} : vector<49x512xf32> to vector<1x512xf32>
    %c510_i32 = arith.constant 510 : i32
    %84 = tpu.dynamic_rotate %83 by %c510_i32 dim 1 : vector<1x512xf32>, i32 -> vector<1x512xf32>
    %85 = arith.addf %82, %84 : vector<1x512xf32>
    %86 = vector.extract_strided_slice %9 {offsets = [27, 0], sizes = [1, 512], strides = [1, 1]} : vector<49x512xf32> to vector<1x512xf32>
    %c509_i32 = arith.constant 509 : i32
    %87 = tpu.dynamic_rotate %86 by %c509_i32 dim 1 : vector<1x512xf32>, i32 -> vector<1x512xf32>
    %88 = arith.addf %85, %87 : vector<1x512xf32>
    %89 = vector.extract_strided_slice %9 {offsets = [28, 0], sizes = [1, 512], strides = [1, 1]} : vector<49x512xf32> to vector<1x512xf32>
    %c499_i32 = arith.constant 499 : i32
    %90 = tpu.dynamic_rotate %89 by %c499_i32 dim 1 : vector<1x512xf32>, i32 -> vector<1x512xf32>
    %91 = vector.extract_strided_slice %9 {offsets = [29, 0], sizes = [1, 512], strides = [1, 1]} : vector<49x512xf32> to vector<1x512xf32>
    %c498_i32 = arith.constant 498 : i32
    %92 = tpu.dynamic_rotate %91 by %c498_i32 dim 1 : vector<1x512xf32>, i32 -> vector<1x512xf32>
    %93 = arith.addf %90, %92 : vector<1x512xf32>
    %94 = vector.extract_strided_slice %9 {offsets = [30, 0], sizes = [1, 512], strides = [1, 1]} : vector<49x512xf32> to vector<1x512xf32>
    %c497_i32 = arith.constant 497 : i32
    %95 = tpu.dynamic_rotate %94 by %c497_i32 dim 1 : vector<1x512xf32>, i32 -> vector<1x512xf32>
    %96 = arith.addf %93, %95 : vector<1x512xf32>
    %97 = vector.extract_strided_slice %9 {offsets = [31, 0], sizes = [1, 512], strides = [1, 1]} : vector<49x512xf32> to vector<1x512xf32>
    %c496_i32 = arith.constant 496 : i32
    %98 = tpu.dynamic_rotate %97 by %c496_i32 dim 1 : vector<1x512xf32>, i32 -> vector<1x512xf32>
    %99 = arith.addf %96, %98 : vector<1x512xf32>
    %100 = vector.extract_strided_slice %9 {offsets = [32, 0], sizes = [1, 512], strides = [1, 1]} : vector<49x512xf32> to vector<1x512xf32>
    %c495_i32 = arith.constant 495 : i32
    %101 = tpu.dynamic_rotate %100 by %c495_i32 dim 1 : vector<1x512xf32>, i32 -> vector<1x512xf32>
    %102 = arith.addf %99, %101 : vector<1x512xf32>
    %103 = vector.extract_strided_slice %9 {offsets = [33, 0], sizes = [1, 512], strides = [1, 1]} : vector<49x512xf32> to vector<1x512xf32>
    %c494_i32 = arith.constant 494 : i32
    %104 = tpu.dynamic_rotate %103 by %c494_i32 dim 1 : vector<1x512xf32>, i32 -> vector<1x512xf32>
    %105 = arith.addf %102, %104 : vector<1x512xf32>
    %106 = vector.extract_strided_slice %9 {offsets = [34, 0], sizes = [1, 512], strides = [1, 1]} : vector<49x512xf32> to vector<1x512xf32>
    %c493_i32 = arith.constant 493 : i32
    %107 = tpu.dynamic_rotate %106 by %c493_i32 dim 1 : vector<1x512xf32>, i32 -> vector<1x512xf32>
    %108 = arith.addf %105, %107 : vector<1x512xf32>
    %109 = vector.extract_strided_slice %9 {offsets = [35, 0], sizes = [1, 512], strides = [1, 1]} : vector<49x512xf32> to vector<1x512xf32>
    %c483_i32 = arith.constant 483 : i32
    %110 = tpu.dynamic_rotate %109 by %c483_i32 dim 1 : vector<1x512xf32>, i32 -> vector<1x512xf32>
    %111 = vector.extract_strided_slice %9 {offsets = [36, 0], sizes = [1, 512], strides = [1, 1]} : vector<49x512xf32> to vector<1x512xf32>
    %c482_i32 = arith.constant 482 : i32
    %112 = tpu.dynamic_rotate %111 by %c482_i32 dim 1 : vector<1x512xf32>, i32 -> vector<1x512xf32>
    %113 = arith.addf %110, %112 : vector<1x512xf32>
    %114 = vector.extract_strided_slice %9 {offsets = [37, 0], sizes = [1, 512], strides = [1, 1]} : vector<49x512xf32> to vector<1x512xf32>
    %c481_i32 = arith.constant 481 : i32
    %115 = tpu.dynamic_rotate %114 by %c481_i32 dim 1 : vector<1x512xf32>, i32 -> vector<1x512xf32>
    %116 = arith.addf %113, %115 : vector<1x512xf32>
    %117 = vector.extract_strided_slice %9 {offsets = [38, 0], sizes = [1, 512], strides = [1, 1]} : vector<49x512xf32> to vector<1x512xf32>
    %c480_i32 = arith.constant 480 : i32
    %118 = tpu.dynamic_rotate %117 by %c480_i32 dim 1 : vector<1x512xf32>, i32 -> vector<1x512xf32>
    %119 = arith.addf %116, %118 : vector<1x512xf32>
    %120 = vector.extract_strided_slice %9 {offsets = [39, 0], sizes = [1, 512], strides = [1, 1]} : vector<49x512xf32> to vector<1x512xf32>
    %c479_i32 = arith.constant 479 : i32
    %121 = tpu.dynamic_rotate %120 by %c479_i32 dim 1 : vector<1x512xf32>, i32 -> vector<1x512xf32>
    %122 = arith.addf %119, %121 : vector<1x512xf32>
    %123 = vector.extract_strided_slice %9 {offsets = [40, 0], sizes = [1, 512], strides = [1, 1]} : vector<49x512xf32> to vector<1x512xf32>
    %c478_i32 = arith.constant 478 : i32
    %124 = tpu.dynamic_rotate %123 by %c478_i32 dim 1 : vector<1x512xf32>, i32 -> vector<1x512xf32>
    %125 = arith.addf %122, %124 : vector<1x512xf32>
    %126 = vector.extract_strided_slice %9 {offsets = [41, 0], sizes = [1, 512], strides = [1, 1]} : vector<49x512xf32> to vector<1x512xf32>
    %c477_i32 = arith.constant 477 : i32
    %127 = tpu.dynamic_rotate %126 by %c477_i32 dim 1 : vector<1x512xf32>, i32 -> vector<1x512xf32>
    %128 = arith.addf %125, %127 : vector<1x512xf32>
    %129 = vector.extract_strided_slice %9 {offsets = [42, 0], sizes = [1, 512], strides = [1, 1]} : vector<49x512xf32> to vector<1x512xf32>
    %c467_i32 = arith.constant 467 : i32
    %130 = tpu.dynamic_rotate %129 by %c467_i32 dim 1 : vector<1x512xf32>, i32 -> vector<1x512xf32>
    %131 = vector.extract_strided_slice %9 {offsets = [43, 0], sizes = [1, 512], strides = [1, 1]} : vector<49x512xf32> to vector<1x512xf32>
    %c466_i32 = arith.constant 466 : i32
    %132 = tpu.dynamic_rotate %131 by %c466_i32 dim 1 : vector<1x512xf32>, i32 -> vector<1x512xf32>
    %133 = arith.addf %130, %132 : vector<1x512xf32>
    %134 = vector.extract_strided_slice %9 {offsets = [44, 0], sizes = [1, 512], strides = [1, 1]} : vector<49x512xf32> to vector<1x512xf32>
    %c465_i32 = arith.constant 465 : i32
    %135 = tpu.dynamic_rotate %134 by %c465_i32 dim 1 : vector<1x512xf32>, i32 -> vector<1x512xf32>
    %136 = arith.addf %133, %135 : vector<1x512xf32>
    %137 = vector.extract_strided_slice %9 {offsets = [45, 0], sizes = [1, 512], strides = [1, 1]} : vector<49x512xf32> to vector<1x512xf32>
    %c464_i32 = arith.constant 464 : i32
    %138 = tpu.dynamic_rotate %137 by %c464_i32 dim 1 : vector<1x512xf32>, i32 -> vector<1x512xf32>
    %139 = arith.addf %136, %138 : vector<1x512xf32>
    %140 = vector.extract_strided_slice %9 {offsets = [46, 0], sizes = [1, 512], strides = [1, 1]} : vector<49x512xf32> to vector<1x512xf32>
    %c463_i32 = arith.constant 463 : i32
    %141 = tpu.dynamic_rotate %140 by %c463_i32 dim 1 : vector<1x512xf32>, i32 -> vector<1x512xf32>
    %142 = arith.addf %139, %141 : vector<1x512xf32>
    %143 = vector.extract_strided_slice %9 {offsets = [47, 0], sizes = [1, 512], strides = [1, 1]} : vector<49x512xf32> to vector<1x512xf32>
    %c462_i32 = arith.constant 462 : i32
    %144 = tpu.dynamic_rotate %143 by %c462_i32 dim 1 : vector<1x512xf32>, i32 -> vector<1x512xf32>
    %145 = arith.addf %142, %144 : vector<1x512xf32>
    %146 = vector.extract_strided_slice %9 {offsets = [48, 0], sizes = [1, 512], strides = [1, 1]} : vector<49x512xf32> to vector<1x512xf32>
    %c461_i32 = arith.constant 461 : i32
    %147 = tpu.dynamic_rotate %146 by %c461_i32 dim 1 : vector<1x512xf32>, i32 -> vector<1x512xf32>
    %148 = arith.addf %145, %147 : vector<1x512xf32>
    %149 = arith.addf %29, %49 : vector<1x512xf32>
    %150 = arith.addf %149, %69 : vector<1x512xf32>
    %151 = arith.addf %150, %88 : vector<1x512xf32>
    %152 = arith.addf %151, %108 : vector<1x512xf32>
    %153 = arith.addf %152, %128 : vector<1x512xf32>
    %154 = arith.addf %153, %148 : vector<1x512xf32>
    %155 = arith.negf %154 : vector<1x512xf32>
    %156 = math.exp %155 : vector<1x512xf32>
    %cst_7 = arith.constant 1.000000e+00 : f32
    %157 = vector.broadcast %cst_7 : f32 to vector<1x512xf32>
    %158 = arith.addf %157, %156 : vector<1x512xf32>
    %159 = arith.divf %157, %158 : vector<1x512xf32>
    %c0_8 = arith.constant 0 : index
    %c0_9 = arith.constant 0 : index
    %160 = vector.load %arg11[%c0_8, %c0_9] : memref<512x2xf32, #tpu.memory_space<vmem>>, vector<512x2xf32>
    %cst_10 = arith.constant dense<0.000000e+00> : vector<32x2xf32>
    %161 = tpu.matmul %6, %160, %cst_10 {dimension_numbers = #tpu.dot_dimension_numbers<[1], [0], [0], [1], [0, 0, 1, 1], [], []>} : vector<32x512xf32>, vector<512x2xf32>, vector<32x2xf32> -> vector<32x2xf32>
    %cst_11 = arith.constant 3.906250e-03 : f32
    %162 = vector.broadcast %cst_11 : f32 to vector<32x2xf32>
    %163 = arith.mulf %161, %162 : vector<32x2xf32>
    %c0_12 = arith.constant 0 : index
    %c0_13 = arith.constant 0 : index
    %164 = vector.load %arg5[%c0_12, %c0_13] : memref<2x32xf32, #tpu.memory_space<vmem>>, vector<2x32xf32>
    %cst_14 = arith.constant dense<0.000000e+00> : vector<2x2xf32>
    %165 = tpu.matmul %164, %163, %cst_14 {dimension_numbers = #tpu.dot_dimension_numbers<[1], [0], [0], [1], [0, 0, 1, 1], [], []>} : vector<2x32xf32>, vector<32x2xf32>, vector<2x2xf32> -> vector<2x2xf32>
    %c0_15 = arith.constant 0 : index
    %c0_16 = arith.constant 0 : index
    %166 = vector.load %arg6[%c0_15, %c0_16] : memref<2x1xf32, #tpu.memory_space<vmem>>, vector<2x1xf32>
    %167 = vector.broadcast %166 : vector<2x1xf32> to vector<2x2xf32>
    %168 = arith.addf %165, %167 : vector<2x2xf32>
    %cst_17 = arith.constant 0.000000e+00 : f32
    %169 = vector.broadcast %cst_17 : f32 to vector<2x2xf32>
    %170 = arith.maximumf %168, %169 : vector<2x2xf32>
    %c0_18 = arith.constant 0 : index
    %c0_19 = arith.constant 0 : index
    %171 = vector.load %arg7[%c0_18, %c0_19] : memref<32x2xf32, #tpu.memory_space<vmem>>, vector<32x2xf32>
    %cst_20 = arith.constant dense<0.000000e+00> : vector<32x2xf32>
    %172 = tpu.matmul %171, %170, %cst_20 {dimension_numbers = #tpu.dot_dimension_numbers<[1], [0], [0], [1], [0, 0, 1, 1], [], []>} : vector<32x2xf32>, vector<2x2xf32>, vector<32x2xf32> -> vector<32x2xf32>
    %c0_21 = arith.constant 0 : index
    %c0_22 = arith.constant 0 : index
    %173 = vector.load %arg8[%c0_21, %c0_22] : memref<32x1xf32, #tpu.memory_space<vmem>>, vector<32x1xf32>
    %174 = vector.broadcast %173 : vector<32x1xf32> to vector<32x2xf32>
    %175 = arith.addf %172, %174 : vector<32x2xf32>
    %176 = arith.negf %175 : vector<32x2xf32>
    %177 = math.exp %176 : vector<32x2xf32>
    %cst_23 = arith.constant 1.000000e+00 : f32
    %178 = vector.broadcast %cst_23 : f32 to vector<32x2xf32>
    %179 = arith.addf %178, %177 : vector<32x2xf32>
    %180 = arith.divf %178, %179 : vector<32x2xf32>
    %c0_24 = arith.constant 0 : index
    %c0_25 = arith.constant 0 : index
    %181 = vector.load %arg10[%c0_24, %c0_25] : memref<2x512xf32, #tpu.memory_space<vmem>>, vector<2x512xf32>
    %cst_26 = arith.constant dense<0.000000e+00> : vector<32x512xf32>
    %182 = tpu.matmul %180, %181, %cst_26 {dimension_numbers = #tpu.dot_dimension_numbers<[1], [0], [0], [1], [0, 0, 1, 1], [], []>} : vector<32x2xf32>, vector<2x512xf32>, vector<32x512xf32> -> vector<32x512xf32>
    %183 = vector.broadcast %159 : vector<1x512xf32> to vector<32x512xf32>
    %184 = arith.addf %182, %183 : vector<32x512xf32>
    %185 = arith.mulf %6, %184 : vector<32x512xf32>
    %c0_27 = arith.constant 0 : index
    %c0_28 = arith.constant 0 : index
    %186 = vector.load %arg11[%c0_27, %c0_28] : memref<512x2xf32, #tpu.memory_space<vmem>>, vector<512x2xf32>
    %cst_29 = arith.constant dense<0.000000e+00> : vector<32x2xf32>
    %187 = tpu.matmul %185, %186, %cst_29 {dimension_numbers = #tpu.dot_dimension_numbers<[1], [0], [0], [1], [0, 0, 1, 1], [], []>} : vector<32x512xf32>, vector<512x2xf32>, vector<32x2xf32> -> vector<32x2xf32>
    %cst_30 = arith.constant 3.906250e-03 : f32
    %188 = vector.broadcast %cst_30 : f32 to vector<32x2xf32>
    %189 = arith.mulf %187, %188 : vector<32x2xf32>
    %c0_31 = arith.constant 0 : index
    %c0_32 = arith.constant 0 : index
    %c0_33 = arith.constant 0 : index
    %190 = vector.load %arg2[%c0_31, %c0_32, %c0_33] : memref<1x32x2xf32, #tpu.memory_space<vmem>>, vector<1x32x2xf32>
    %191 = vector.shape_cast %190 : vector<1x32x2xf32> to vector<32x2xf32>
    %192 = arith.mulf %191, %189 : vector<32x2xf32>
    %c0_34 = arith.constant 0 : index
    %c0_35 = arith.constant 0 : index
    %193 = vector.load %arg10[%c0_34, %c0_35] : memref<2x512xf32, #tpu.memory_space<vmem>>, vector<2x512xf32>
    %cst_36 = arith.constant dense<0.000000e+00> : vector<32x512xf32>
    %194 = tpu.matmul %192, %193, %cst_36 {dimension_numbers = #tpu.dot_dimension_numbers<[1], [0], [0], [1], [0, 0, 1, 1], [], []>} : vector<32x2xf32>, vector<2x512xf32>, vector<32x512xf32> -> vector<32x512xf32>
    %195 = arith.addf %194, %185 : vector<32x512xf32>
    %c0_37 = arith.constant 0 : index
    %c0_38 = arith.constant 0 : index
    %196 = vector.load %arg12[%c0_37, %c0_38] : memref<32x512xf32, #tpu.memory_space<vmem>>, vector<32x512xf32>
    tpu.vector_store %arg12[%c0_37, %c0_38], %195 {strides = array<i32>} : memref<32x512xf32, #tpu.memory_space<vmem>>, vector<32x512xf32>,
    return
  }
  func.func @transform_0(%arg0: i32) -> (i32, i32) {
    %c0_i32 = arith.constant 0 : i32
    %c0_i32_0 = arith.constant 0 : i32
    return %c0_i32, %arg0 : i32, i32
  }
  func.func @transform_1(%arg0: i32) -> (i32, i32, i32) {
    %c0_i32 = arith.constant 0 : i32
    %c0_i32_0 = arith.constant 0 : i32
    %c0_i32_1 = arith.constant 0 : i32
    return %arg0, %c0_i32, %c0_i32_0 : i32, i32, i32
  }
  func.func @transform_2(%arg0: i32) -> (i32, i32) {
    %c0_i32 = arith.constant 0 : i32
    %c0_i32_0 = arith.constant 0 : i32
    %c0_i32_1 = arith.constant 0 : i32
    return %c0_i32, %c0_i32_0 : i32, i32
  }
  func.func @transform_3(%arg0: i32) -> (i32, i32) {
    %c0_i32 = arith.constant 0 : i32
    %c0_i32_0 = arith.constant 0 : i32
    %c0_i32_1 = arith.constant 0 : i32
    return %c0_i32, %c0_i32_0 : i32, i32
  }
  func.func @transform_4(%arg0: i32) -> (i32, i32) {
    %c0_i32 = arith.constant 0 : i32
    %c0_i32_0 = arith.constant 0 : i32
    %c0_i32_1 = arith.constant 0 : i32
    return %c0_i32, %c0_i32_0 : i32, i32
  }
  func.func @transform_5(%arg0: i32) -> (i32, i32) {
    %c0_i32 = arith.constant 0 : i32
    %c0_i32_0 = arith.constant 0 : i32
    %c0_i32_1 = arith.constant 0 : i32
    return %c0_i32, %c0_i32_0 : i32, i32
  }
  func.func @transform_6(%arg0: i32) -> (i32, i32) {
    %c0_i32 = arith.constant 0 : i32
    %c0_i32_0 = arith.constant 0 : i32
    %c0_i32_1 = arith.constant 0 : i32
    return %c0_i32, %c0_i32_0 : i32, i32
  }
  func.func @transform_7(%arg0: i32) -> (i32, i32) {
    %c0_i32 = arith.constant 0 : i32
    %c0_i32_0 = arith.constant 0 : i32
    %c0_i32_1 = arith.constant 0 : i32
    return %c0_i32, %c0_i32_0 : i32, i32
  }
  func.func @transform_8(%arg0: i32) -> (i32, i32) {
    %c0_i32 = arith.constant 0 : i32
    %c0_i32_0 = arith.constant 0 : i32
    %c0_i32_1 = arith.constant 0 : i32
    return %c0_i32, %c0_i32_0 : i32, i32
  }
  func.func @transform_9(%arg0: i32) -> (i32, i32) {
    %c0_i32 = arith.constant 0 : i32
    %c0_i32_0 = arith.constant 0 : i32
    %c0_i32_1 = arith.constant 0 : i32
    return %c0_i32, %c0_i32_0 : i32, i32
  }
  func.func @transform_10(%arg0: i32) -> (i32, i32) {
    %c0_i32 = arith.constant 0 : i32
    %c0_i32_0 = arith.constant 0 : i32
    %c0_i32_1 = arith.constant 0 : i32
    return %c0_i32, %c0_i32_0 : i32, i32
  }
  func.func @transform_11(%arg0: i32) -> (i32, i32) {
    %c0_i32 = arith.constant 0 : i32
    %c0_i32_0 = arith.constant 0 : i32
    return %c0_i32, %arg0 : i32, i32
  }
}

</mosaic_0001>

<llo_original>
// kernel: tpu_custom_call.1
$region0: #{tpu_custom_call.1}
  #allocation0 [shape = 'u32[]', space=smem, size = 0x4, offset = 0x4, fixed_abs, tag = 'smem constant byte address 0x4 - core index']
  #allocation1 [shape = 'u32[144,128]{1,0:T(1,128)}', space=vmem, size = 0x12000, scoped, tag = 'internal scratch']
  %s0 = inlined_call_operand.vmem [shape: f32[8,512], index: 0, kind: input, shape index: {}]
  %s1 = inlined_call_operand.vmem [shape: f32[1,32,2], index: 1, kind: input, shape index: {}]
  %s2 = inlined_call_operand.vmem [shape: f32[81,8], index: 2, kind: input, shape index: {}]
  %s3 = inlined_call_operand.vmem [shape: f32[81,1], index: 3, kind: input, shape index: {}]
  %s4 = inlined_call_operand.vmem [shape: f32[2,32], index: 4, kind: input, shape index: {}]
  %s5 = inlined_call_operand.vmem [shape: f32[2,1], index: 5, kind: input, shape index: {}]
  %s6 = inlined_call_operand.vmem [shape: f32[32,2], index: 6, kind: input, shape index: {}]
  %s7 = inlined_call_operand.vmem [shape: f32[32,1], index: 7, kind: input, shape index: {}]
  %s8 = inlined_call_operand.vmem [shape: f32[49,512], index: 8, kind: input, shape index: {}]
  %s9 = inlined_call_operand.vmem [shape: f32[2,512], index: 9, kind: input, shape index: {}]
  %s10 = inlined_call_operand.vmem [shape: f32[512,2], index: 10, kind: input, shape index: {}]
  %s11 = inlined_call_operand.hbm [shape: f32[32,512], index: 11, kind: output, shape index: {}]
  %s12 = sld [smem:[#allocation0]]
  $region54: #{tpu_custom_call.1} parent=0
    _
  %s14 = ssub.s32 1, %s12
  %s15 = scalar_select 0, %s14, %s12
  $region1: #{tpu_custom_call.1} parent=0
    #allocation2 [shape = 'u8[65536]{0}', space=vmem, size = 0x10000, scoped, tag = 'output window, operand 0, single buffered']
    #allocation3 [shape = 's32[1]{0}', space=sflag, size = 0x4, scoped, tag = 'scoped memory for tpu_custom_call.1']
    %16 = vsyncpa [#allocation3], 0
    // Predicated region
    $region2: #{tpu_custom_call.1} parent=1 // pred_check
      _
    $region3: #{tpu_custom_call.1} parent=1 // pred_check_branch
      %18 = sbr.rel (0) target = $region5
    $region4: #{tpu_custom_call.1} parent=1 // pred_region
      _
    $region5: #{tpu_custom_call.1} parent=1 // pred_fallthru
      _
    // Predicated region
    $region6: #{tpu_custom_call.1} parent=1 // pred_check
      _
    $region7: #{tpu_custom_call.1} parent=1 // pred_check_branch
      %20 = sbr.rel (0) target = $region9
    $region8: #{tpu_custom_call.1} parent=1 // pred_region
      _
    $region9: #{tpu_custom_call.1} parent=1 // pred_fallthru
      _
    // Predicated region
    $region10: #{tpu_custom_call.1} parent=1 // pred_check
      _
    $region11: #{tpu_custom_call.1} parent=1 // pred_check_branch
      %22 = sbr.rel (0) target = $region13
    $region12: #{tpu_custom_call.1} parent=1 // pred_region
      _
    $region13: #{tpu_custom_call.1} parent=1 // pred_fallthru
      _
    // Predicated region
    $region14: #{tpu_custom_call.1} parent=1 // pred_check
      _
    $region15: #{tpu_custom_call.1} parent=1 // pred_check_branch
      %24 = sbr.rel (0) target = $region17
    $region16: #{tpu_custom_call.1} parent=1 // pred_region
      _
    $region17: #{tpu_custom_call.1} parent=1 // pred_fallthru
      _
    // Predicated region
    $region18: #{tpu_custom_call.1} parent=1 // pred_check
      _
    $region19: #{tpu_custom_call.1} parent=1 // pred_check_branch
      %26 = sbr.rel (0) target = $region21
    $region20: #{tpu_custom_call.1} parent=1 // pred_region
      _
    $region21: #{tpu_custom_call.1} parent=1 // pred_fallthru
      _
    // Predicated region
    $region22: #{tpu_custom_call.1} parent=1 // pred_check
      _
    $region23: #{tpu_custom_call.1} parent=1 // pred_check_branch
      %28 = sbr.rel (0) target = $region25
    $region24: #{tpu_custom_call.1} parent=1 // pred_region
      _
    $region25: #{tpu_custom_call.1} parent=1 // pred_fallthru
      _
    // Predicated region
    $region26: #{tpu_custom_call.1} parent=1 // pred_check
      _
    $region27: #{tpu_custom_call.1} parent=1 // pred_check_branch
      %30 = sbr.rel (0) target = $region29
    $region28: #{tpu_custom_call.1} parent=1 // pred_region
      _
    $region29: #{tpu_custom_call.1} parent=1 // pred_fallthru
      _
    // Predicated region
    $region30: #{tpu_custom_call.1} parent=1 // pred_check
      _
    $region31: #{tpu_custom_call.1} parent=1 // pred_check_branch
      %32 = sbr.rel (0) target = $region33
    $region32: #{tpu_custom_call.1} parent=1 // pred_region
      _
    $region33: #{tpu_custom_call.1} parent=1 // pred_fallthru
      _
    // Predicated region
    $region34: #{tpu_custom_call.1} parent=1 // pred_check
      _
    $region35: #{tpu_custom_call.1} parent=1 // pred_check_branch
      %34 = sbr.rel (0) target = $region37
    $region36: #{tpu_custom_call.1} parent=1 // pred_region
      _
    $region37: #{tpu_custom_call.1} parent=1 // pred_fallthru
      _
    // Predicated region
    $region38: #{tpu_custom_call.1} parent=1 // pred_check
      _
    $region39: #{tpu_custom_call.1} parent=1 // pred_check_branch
      %36 = sbr.rel (0) target = $region41
    $region40: #{tpu_custom_call.1} parent=1 // pred_region
      _
    $region41: #{tpu_custom_call.1} parent=1 // pred_fallthru
      _
    // Predicated region
    $region42: #{tpu_custom_call.1} parent=1 // pred_check
      _
    $region43: #{tpu_custom_call.1} parent=1 // pred_check_branch
      %38 = sbr.rel (0) target = $region45
    $region44: #{tpu_custom_call.1} parent=1 // pred_region
      _
    $region45: #{tpu_custom_call.1} parent=1 // pred_fallthru
      _
    %v39 = vld [vmem:[%s0] sm:$0xff]
    %v40 = vld [vmem:[%s0 + $0x8] sm:$0xff]
    %v41 = vld [vmem:[%s0 + $0x10] sm:$0xff]
    %v42 = vld [vmem:[%s0 + $0x18] sm:$0xff]
    %v43 = vld [vmem:[%s2] sm:$0xff]
    %v44 = vld [vmem:[%s2 + $0x8] sm:$0xff]
    %v45 = vld [vmem:[%s2 + $0x10] sm:$0xff]
    %v46 = vld [vmem:[%s2 + $0x18] sm:$0xff]
    %v47 = vld [vmem:[%s2 + $0x20] sm:$0xff]
    %v48 = vld [vmem:[%s2 + $0x28] sm:$0xff]
    %v49 = vld [vmem:[%s2 + $0x30] sm:$0xff]
    %v50 = vld [vmem:[%s2 + $0x38] sm:$0xff]
    %v51 = vld [vmem:[%s2 + $0x40] sm:$0xff]
    %v52 = vld [vmem:[%s2 + $0x48] sm:$0xff]
    %v53 = vld [vmem:[%s2 + $0x50] sm:$0x1]
    %v54 = vld [vmem:[%s3] sm:$0xff]
    %v55 = vld [vmem:[%s3 + $0x8] sm:$0xff]
    %v56 = vld [vmem:[%s3 + $0x10] sm:$0xff]
    %v57 = vld [vmem:[%s3 + $0x18] sm:$0xff]
    %v58 = vld [vmem:[%s3 + $0x20] sm:$0xff]
    %v59 = vld [vmem:[%s3 + $0x28] sm:$0xff]
    %v60 = vld [vmem:[%s3 + $0x30] sm:$0xff]
    %v61 = vld [vmem:[%s3 + $0x38] sm:$0xff]
    %v62 = vld [vmem:[%s3 + $0x40] sm:$0xff]
    %v63 = vld [vmem:[%s3 + $0x48] sm:$0xff]
    %v64 = vld [vmem:[%s3 + $0x50] sm:$0x1]
    %66 = vset.pattern.permute.xlu0 0
    %67 = vperm.xlu0 %66, %v54
    %v68 = vpop.permute.xlu0 %67
    %71 = vset.pattern.permute.xlu0 0
    %72 = vperm.xlu0 %71, %v55
    %v73 = vpop.permute.xlu0 %72
    %76 = vset.pattern.permute.xlu0 0
    %77 = vperm.xlu0 %76, %v56
    %v78 = vpop.permute.xlu0 %77
    %81 = vset.pattern.permute.xlu0 0
    %82 = vperm.xlu0 %81, %v57
    %v83 = vpop.permute.xlu0 %82
    %86 = vset.pattern.permute.xlu0 0
    %87 = vperm.xlu0 %86, %v58
    %v88 = vpop.permute.xlu0 %87
    %91 = vset.pattern.permute.xlu0 0
    %92 = vperm.xlu0 %91, %v59
    %v93 = vpop.permute.xlu0 %92
    %96 = vset.pattern.permute.xlu0 0
    %97 = vperm.xlu0 %96, %v60
    %v98 = vpop.permute.xlu0 %97
    %101 = vset.pattern.permute.xlu0 0
    %102 = vperm.xlu0 %101, %v61
    %v103 = vpop.permute.xlu0 %102
    %106 = vset.pattern.permute.xlu0 0
    %107 = vperm.xlu0 %106, %v62
    %v108 = vpop.permute.xlu0 %107
    %111 = vset.pattern.permute.xlu0 0
    %112 = vperm.xlu0 %111, %v63
    %v113 = vpop.permute.xlu0 %112
    %116 = vset.pattern.permute.xlu0 0
    %117 = vperm.xlu0 %116, %v64
    %v118 = vpop.permute.xlu0 %117
    %vm120 = vcmask 64512
    %v122 = vsel %vm120, %v43, 0
    %v125 = vsel %vm120, %v44, 0
    %v128 = vsel %vm120, %v45, 0
    %v131 = vsel %vm120, %v46, 0
    %v134 = vsel %vm120, %v47, 0
    %v137 = vsel %vm120, %v48, 0
    %v140 = vsel %vm120, %v49, 0
    %v143 = vsel %vm120, %v50, 0
    %v146 = vsel %vm120, %v51, 0
    %v149 = vsel %vm120, %v52, 0
    %v152 = vsel %vm120, %v53, 0
    %154 = vmatprep.subr.mxu0 %v40
    %155 = vmatpush1.msra.mxu0 %v39
    %156 = vmatprep.subr.mxu0 0.0
    %157 = vmatpush1.msra.mxu0 0.0
    %158 = vmatprep.subr.mxu0 0.0
    %159 = vmatpush1.msra.mxu0 0.0
    %160 = vmatprep.subr.mxu0 0.0
    %161 = vmatpush1.msra.mxu0 0.0
    %162 = vmatprep.subr.mxu0 0.0
    %163 = vmatpush1.msra.mxu0 0.0
    %164 = vmatprep.subr.mxu0 0.0
    %165 = vmatpush1.msra.mxu0 0.0
    %166 = vmatprep.subr.mxu0 0.0
    %167 = vmatpush1.msra.mxu0 0.0
    %168 = vmatprep.subr.mxu0 0.0
    %169 = vmatpush1.msra.mxu0 0.0
    %170 = vmatprep.subr.mxu0 0.0
    %171 = vmatpush1.msra.mxu0 0.0
    %172 = vmatprep.subr.mxu0 0.0
    %173 = vmatpush1.msra.mxu0 0.0
    %174 = vmatprep.subr.mxu0 0.0
    %175 = vmatpush1.msra.mxu0 0.0
    %176 = vmatprep.subr.mxu0 0.0
    %177 = vmatpush1.msra.mxu0 0.0
    %178 = vmatprep.subr.mxu0 0.0
    %179 = vmatpush1.msra.mxu0 0.0
    %180 = vmatprep.subr.mxu0 0.0
    %181 = vmatpush1.msra.mxu0 0.0
    %182 = vmatprep.subr.mxu0 0.0
    %183 = vmatpush1.msra.mxu0 0.0
    %184 = vmatprep.subr.mxu0 0.0
    %185 = vmatpush1.msra.mxu0 0.0
    %186 = vmatprep.subr.mxu0 0.0
    %187 = vmatpush1.msra.mxu0 0.0
    %188 = vmatprep.subr.mxu0 0.0
    %189 = vmatpush1.msra.mxu0 0.0
    %190 = vmatprep.subr.mxu0 0.0
    %191 = vmatpush1.msra.mxu0 0.0
    %192 = vmatprep.subr.mxu0 0.0
    %193 = vmatpush1.msra.mxu0 0.0
    %194 = vmatprep.subr.mxu0 0.0
    %195 = vmatpush1.msra.mxu0 0.0
    %196 = vmatprep.subr.mxu0 0.0
    %197 = vmatpush1.msra.mxu0 0.0
    %198 = vmatprep.subr.mxu0 0.0
    %199 = vmatpush1.msra.mxu0 0.0
    %200 = vmatprep.subr.mxu0 0.0
    %201 = vmatpush1.msra.mxu0 0.0
    %202 = vmatprep.subr.mxu0 0.0
    %203 = vmatpush1.msra.mxu0 0.0
    %204 = vmatprep.subr.mxu0 0.0
    %205 = vmatpush1.msra.mxu0 0.0
    %206 = vmatprep.subr.mxu0 0.0
    %207 = vmatpush1.msra.mxu0 0.0
    %208 = vmatprep.subr.mxu0 0.0
    %209 = vmatpush1.msra.mxu0 0.0
    %210 = vmatprep.subr.mxu0 0.0
    %211 = vmatpush1.msra.mxu0 0.0
    %212 = vmatprep.subr.mxu0 0.0
    %213 = vmatpush1.msra.mxu0 0.0
    %214 = vmatprep.subr.mxu0 0.0
    %215 = vmatpush1.msra.mxu0 0.0
    %216 = vmatprep.subr.mxu0 0.0
    %217 = vmatpush1.msra.mxu0 0.0
    %218 = vmatprep.mubr.f32.mxu0 0.0
    %219 = vmatmul.mubr.f32.gmra.mrb[0].mxu0 %v122
    %v220 = vpop.f32.mrb[0].mxu0
    %v221 = vadd.f32 %v68, %v220
    %v222 = vpop.f32.mrb[0].mxu0
    %v223 = vadd.f32 %v68, %v222
    %224 = vmatprep.mubr.f32.mxu0 0.0
    %225 = vmatmul.mubr.f32.gmra.mrb[0].mxu0 %v125
    %v226 = vpop.f32.mrb[0].mxu0
    %v227 = vadd.f32 %v73, %v226
    %v228 = vpop.f32.mrb[0].mxu0
    %v229 = vadd.f32 %v73, %v228
    %230 = vmatprep.mubr.f32.mxu0 0.0
    %231 = vmatmul.mubr.f32.gmra.mrb[0].mxu0 %v128
    %v232 = vpop.f32.mrb[0].mxu0
    %v233 = vadd.f32 %v78, %v232
    %v234 = vpop.f32.mrb[0].mxu0
    %v235 = vadd.f32 %v78, %v234
    %236 = vmatprep.mubr.f32.mxu0 0.0
    %237 = vmatmul.mubr.f32.gmra.mrb[0].mxu0 %v131
    %v238 = vpop.f32.mrb[0].mxu0
    %v239 = vadd.f32 %v83, %v238
    %v240 = vpop.f32.mrb[0].mxu0
    %v241 = vadd.f32 %v83, %v240
    %242 = vmatprep.mubr.f32.mxu0 0.0
    %243 = vmatmul.mubr.f32.gmra.mrb[0].mxu0 %v134
    %v244 = vpop.f32.mrb[0].mxu0
    %v245 = vadd.f32 %v88, %v244
    %v246 = vpop.f32.mrb[0].mxu0
    %v247 = vadd.f32 %v88, %v246
    %248 = vmatprep.mubr.f32.mxu0 0.0
    %249 = vmatmul.mubr.f32.gmra.mrb[0].mxu0 %v137
    %v250 = vpop.f32.mrb[0].mxu0
    %v251 = vadd.f32 %v93, %v250
    %v252 = vpop.f32.mrb[0].mxu0
    %v253 = vadd.f32 %v93, %v252
    %254 = vmatprep.mubr.f32.mxu0 0.0
    %255 = vmatmul.mubr.f32.gmra.mrb[0].mxu0 %v140
    %v256 = vpop.f32.mrb[0].mxu0
    %v257 = vadd.f32 %v98, %v256
    %v258 = vpop.f32.mrb[0].mxu0
    %v259 = vadd.f32 %v98, %v258
    %260 = vmatprep.mubr.f32.mxu0 0.0
    %261 = vmatmul.mubr.f32.gmra.mrb[0].mxu0 %v143
    %v262 = vpop.f32.mrb[0].mxu0
    %v263 = vadd.f32 %v103, %v262
    %v264 = vpop.f32.mrb[0].mxu0
    %v265 = vadd.f32 %v103, %v264
    %266 = vmatprep.mubr.f32.mxu0 0.0
    %267 = vmatmul.mubr.f32.gmra.mrb[0].mxu0 %v146
    %v268 = vpop.f32.mrb[0].mxu0
    %v269 = vadd.f32 %v108, %v268
    %v270 = vpop.f32.mrb[0].mxu0
    %v271 = vadd.f32 %v108, %v270
    %272 = vmatprep.mubr.f32.mxu0 0.0
    %273 = vmatmul.mubr.f32.gmra.mrb[0].mxu0 %v149
    %v274 = vpop.f32.mrb[0].mxu0
    %v275 = vadd.f32 %v113, %v274
    %v276 = vpop.f32.mrb[0].mxu0
    %v277 = vadd.f32 %v113, %v276
    %278 = vmatprep.mubr.f32.mxu0 0.0
    %279 = vmatmul.mubr.f32.gmra.mrb[0].mxu0 %v152
    %v280 = vpop.f32.mrb[0].mxu0
    %v281 = vadd.f32 %v118, %v280
    %v282 = vpop.f32.mrb[0].mxu0
    %v283 = vadd.f32 %v118, %v282
    %284 = vdwg.mxu0
    %285 = vmatprep.subr.mxu0 %v42
    %286 = vmatpush1.msra.mxu0 %v41
    %287 = vmatprep.subr.mxu0 0.0
    %288 = vmatpush1.msra.mxu0 0.0
    %289 = vmatprep.subr.mxu0 0.0
    %290 = vmatpush1.msra.mxu0 0.0
    %291 = vmatprep.subr.mxu0 0.0
    %292 = vmatpush1.msra.mxu0 0.0
    %293 = vmatprep.subr.mxu0 0.0
    %294 = vmatpush1.msra.mxu0 0.0
    %295 = vmatprep.subr.mxu0 0.0
    %296 = vmatpush1.msra.mxu0 0.0
    %297 = vmatprep.subr.mxu0 0.0
    %298 = vmatpush1.msra.mxu0 0.0
    %299 = vmatprep.subr.mxu0 0.0
    %300 = vmatpush1.msra.mxu0 0.0
    %301 = vmatprep.subr.mxu0 0.0
    %302 = vmatpush1.msra.mxu0 0.0
    %303 = vmatprep.subr.mxu0 0.0
    %304 = vmatpush1.msra.mxu0 0.0
    %305 = vmatprep.subr.mxu0 0.0
    %306 = vmatpush1.msra.mxu0 0.0
    %307 = vmatprep.subr.mxu0 0.0
    %308 = vmatpush1.msra.mxu0 0.0
    %309 = vmatprep.subr.mxu0 0.0
    %310 = vmatpush1.msra.mxu0 0.0
    %311 = vmatprep.subr.mxu0 0.0
    %312 = vmatpush1.msra.mxu0 0.0
    %313 = vmatprep.subr.mxu0 0.0
    %314 = vmatpush1.msra.mxu0 0.0
    %315 = vmatprep.subr.mxu0 0.0
    %316 = vmatpush1.msra.mxu0 0.0
    %317 = vmatprep.subr.mxu0 0.0
    %318 = vmatpush1.msra.mxu0 0.0
    %319 = vmatprep.subr.mxu0 0.0
    %320 = vmatpush1.msra.mxu0 0.0
    %321 = vmatprep.subr.mxu0 0.0
    %322 = vmatpush1.msra.mxu0 0.0
    %323 = vmatprep.subr.mxu0 0.0
    %324 = vmatpush1.msra.mxu0 0.0
    %325 = vmatprep.subr.mxu0 0.0
    %326 = vmatpush1.msra.mxu0 0.0
    %327 = vmatprep.subr.mxu0 0.0
    %328 = vmatpush1.msra.mxu0 0.0
    %329 = vmatprep.subr.mxu0 0.0
    %330 = vmatpush1.msra.mxu0 0.0
    %331 = vmatprep.subr.mxu0 0.0
    %332 = vmatpush1.msra.mxu0 0.0
    %333 = vmatprep.subr.mxu0 0.0
    %334 = vmatpush1.msra.mxu0 0.0
    %335 = vmatprep.subr.mxu0 0.0
    %336 = vmatpush1.msra.mxu0 0.0
    %337 = vmatprep.subr.mxu0 0.0
    %338 = vmatpush1.msra.mxu0 0.0
    %339 = vmatprep.subr.mxu0 0.0
    %340 = vmatpush1.msra.mxu0 0.0
    %341 = vmatprep.subr.mxu0 0.0
    %342 = vmatpush1.msra.mxu0 0.0
    %343 = vmatprep.subr.mxu0 0.0
    %344 = vmatpush1.msra.mxu0 0.0
    %345 = vmatprep.subr.mxu0 0.0
    %346 = vmatpush1.msra.mxu0 0.0
    %347 = vmatprep.subr.mxu0 0.0
    %348 = vmatpush1.msra.mxu0 0.0
    %349 = vmatprep.mubr.f32.mxu0 0.0
    %350 = vmatmul.mubr.f32.gmra.mrb[0].mxu0 %v122
    %v351 = vpop.f32.mrb[0].mxu0
    %v352 = vadd.f32 %v68, %v351
    %v353 = vpop.f32.mrb[0].mxu0
    %v354 = vadd.f32 %v68, %v353
    %355 = vmatprep.mubr.f32.mxu0 0.0
    %356 = vmatmul.mubr.f32.gmra.mrb[0].mxu0 %v125
    %v357 = vpop.f32.mrb[0].mxu0
    %v358 = vadd.f32 %v73, %v357
    %v359 = vpop.f32.mrb[0].mxu0
    %v360 = vadd.f32 %v73, %v359
    %361 = vmatprep.mubr.f32.mxu0 0.0
    %362 = vmatmul.mubr.f32.gmra.mrb[0].mxu0 %v128
    %v363 = vpop.f32.mrb[0].mxu0
    %v364 = vadd.f32 %v78, %v363
    %v365 = vpop.f32.mrb[0].mxu0
    %v366 = vadd.f32 %v78, %v365
    %367 = vmatprep.mubr.f32.mxu0 0.0
    %368 = vmatmul.mubr.f32.gmra.mrb[0].mxu0 %v131
    %v369 = vpop.f32.mrb[0].mxu0
    %v370 = vadd.f32 %v83, %v369
    %v371 = vpop.f32.mrb[0].mxu0
    %v372 = vadd.f32 %v83, %v371
    %373 = vmatprep.mubr.f32.mxu0 0.0
    %374 = vmatmul.mubr.f32.gmra.mrb[0].mxu0 %v134
    %v375 = vpop.f32.mrb[0].mxu0
    %v376 = vadd.f32 %v88, %v375
    %v377 = vpop.f32.mrb[0].mxu0
    %v378 = vadd.f32 %v88, %v377
    %379 = vmatprep.mubr.f32.mxu0 0.0
    %380 = vmatmul.mubr.f32.gmra.mrb[0].mxu0 %v137
    %v381 = vpop.f32.mrb[0].mxu0
    %v382 = vadd.f32 %v93, %v381
    %v383 = vpop.f32.mrb[0].mxu0
    %v384 = vadd.f32 %v93, %v383
    %385 = vmatprep.mubr.f32.mxu0 0.0
    %386 = vmatmul.mubr.f32.gmra.mrb[0].mxu0 %v140
    %v387 = vpop.f32.mrb[0].mxu0
    %v388 = vadd.f32 %v98, %v387
    %v389 = vpop.f32.mrb[0].mxu0
    %v390 = vadd.f32 %v98, %v389
    %391 = vmatprep.mubr.f32.mxu0 0.0
    %392 = vmatmul.mubr.f32.gmra.mrb[0].mxu0 %v143
    %v393 = vpop.f32.mrb[0].mxu0
    %v394 = vadd.f32 %v103, %v393
    %v395 = vpop.f32.mrb[0].mxu0
    %v396 = vadd.f32 %v103, %v395
    %397 = vmatprep.mubr.f32.mxu0 0.0
    %398 = vmatmul.mubr.f32.gmra.mrb[0].mxu0 %v146
    %v399 = vpop.f32.mrb[0].mxu0
    %v400 = vadd.f32 %v108, %v399
    %v401 = vpop.f32.mrb[0].mxu0
    %v402 = vadd.f32 %v108, %v401
    %403 = vmatprep.mubr.f32.mxu0 0.0
    %404 = vmatmul.mubr.f32.gmra.mrb[0].mxu0 %v149
    %v405 = vpop.f32.mrb[0].mxu0
    %v406 = vadd.f32 %v113, %v405
    %v407 = vpop.f32.mrb[0].mxu0
    %v408 = vadd.f32 %v113, %v407
    %409 = vmatprep.mubr.f32.mxu0 0.0
    %410 = vmatmul.mubr.f32.gmra.mrb[0].mxu0 %v152
    %v411 = vpop.f32.mrb[0].mxu0
    %v412 = vadd.f32 %v118, %v411
    %v413 = vpop.f32.mrb[0].mxu0
    %v414 = vadd.f32 %v118, %v413
    %415 = vdwg.mxu0
    %v416 = vld [vmem:[%s8] sm:$0xff]
    %v417 = vld [vmem:[%s8 + $0x8] sm:$0xff]
    %v418 = vld [vmem:[%s8 + $0x10] sm:$0xff]
    %v419 = vld [vmem:[%s8 + $0x18] sm:$0xff]
    %v420 = vld [vmem:[%s8 + $0x20] sm:$0xff]
    %v421 = vld [vmem:[%s8 + $0x28] sm:$0xff]
    %v422 = vld [vmem:[%s8 + $0x30] sm:$0xff]
    %v423 = vld [vmem:[%s8 + $0x38] sm:$0xff]
    %v424 = vld [vmem:[%s8 + $0x40] sm:$0xff]
    %v425 = vld [vmem:[%s8 + $0x48] sm:$0xff]
    %v426 = vld [vmem:[%s8 + $0x50] sm:$0xff]
    %v427 = vld [vmem:[%s8 + $0x58] sm:$0xff]
    %v428 = vld [vmem:[%s8 + $0x60] sm:$0xff]
    %v429 = vld [vmem:[%s8 + $0x68] sm:$0xff]
    %v430 = vld [vmem:[%s8 + $0x70] sm:$0xff]
    %v431 = vld [vmem:[%s8 + $0x78] sm:$0xff]
    %v432 = vld [vmem:[%s8 + $0x80] sm:$0xff]
    %v433 = vld [vmem:[%s8 + $0x88] sm:$0xff]
    %v434 = vld [vmem:[%s8 + $0x90] sm:$0xff]
    %v435 = vld [vmem:[%s8 + $0x98] sm:$0xff]
    %v436 = vld [vmem:[%s8 + $0xa0] sm:$0xff]
    %v437 = vld [vmem:[%s8 + $0xa8] sm:$0xff]
    %v438 = vld [vmem:[%s8 + $0xb0] sm:$0xff]
    %v439 = vld [vmem:[%s8 + $0xb8] sm:$0xff]
    %v440 = vld [vmem:[%s8 + $0xc0] sm:$0x1]
    %v441 = vld [vmem:[%s8 + $0xc8] sm:$0x1]
    %v442 = vld [vmem:[%s8 + $0xd0] sm:$0x1]
    %v443 = vld [vmem:[%s8 + $0xd8] sm:$0x1]
    %v444 = vmul.f32 %v245, %v416
    %v445 = vmul.f32 %v247, %v417
    %v446 = vmul.f32 %v376, %v418
    %v447 = vmul.f32 %v378, %v419
    %v448 = vmul.f32 %v251, %v420
    %v449 = vmul.f32 %v253, %v421
    %v450 = vmul.f32 %v382, %v422
    %v451 = vmul.f32 %v384, %v423
    %v452 = vmul.f32 %v257, %v424
    %v453 = vmul.f32 %v259, %v425
    %v454 = vmul.f32 %v388, %v426
    %v455 = vmul.f32 %v390, %v427
    %v456 = vmul.f32 %v263, %v428
    %v457 = vmul.f32 %v265, %v429
    %v458 = vmul.f32 %v394, %v430
    %v459 = vmul.f32 %v396, %v431
    %v460 = vmul.f32 %v269, %v432
    %v461 = vmul.f32 %v271, %v433
    %v462 = vmul.f32 %v400, %v434
    %v463 = vmul.f32 %v402, %v435
    %v464 = vmul.f32 %v275, %v436
    %v465 = vmul.f32 %v277, %v437
    %v466 = vmul.f32 %v406, %v438
    %v467 = vmul.f32 %v408, %v439
    %v468 = vmul.f32 %v281, %v440
    %v469 = vmul.f32 %v283, %v441
    %v470 = vmul.f32 %v412, %v442
    %v471 = vmul.f32 %v414, %v443
    %472 = vrot.lane.b32.xlu0 %v444, 51
    %v473 = vpop.permute.xlu0 %472
    %474 = vrot.lane.b32.xlu0 %v445, 51
    %v475 = vpop.permute.xlu0 %474
    %476 = vrot.lane.b32.xlu0 %v446, 51
    %v477 = vpop.permute.xlu0 %476
    %478 = vrot.lane.b32.xlu0 %v447, 51
    %v479 = vpop.permute.xlu0 %478
    %v480 = vlaneseq
    %v481 = vand.u32 %v480, 127
    %vm482 = vcmp.lt.s32.totalorder %v481, 51
    %v483 = vsel %vm482, %v477, %v479
    %v484 = vsel %vm482, %v475, %v477
    %v485 = vsel %vm482, %v473, %v475
    %v486 = vsel %vm482, %v479, %v473
    %v491 = vrot.slane %v444, 1
    %v492 = vrot.slane %v445, 1
    %v493 = vrot.slane %v446, 1
    %v494 = vrot.slane %v447, 1
    %499 = vrot.lane.b32.xlu0 %v491, 50
    %v500 = vpop.permute.xlu0 %499
    %501 = vrot.lane.b32.xlu0 %v492, 50
    %v502 = vpop.permute.xlu0 %501
    %503 = vrot.lane.b32.xlu0 %v493, 50
    %v504 = vpop.permute.xlu0 %503
    %505 = vrot.lane.b32.xlu0 %v494, 50
    %v506 = vpop.permute.xlu0 %505
    %vm507 = vcmp.lt.s32.totalorder %v481, 50
    %v508 = vsel %vm507, %v504, %v506
    %v509 = vsel %vm507, %v502, %v504
    %v510 = vsel %vm507, %v500, %v502
    %v511 = vsel %vm507, %v506, %v500
    %v512 = vadd.f32 %v486, %v511
    %v513 = vadd.f32 %v485, %v510
    %v514 = vadd.f32 %v484, %v509
    %v515 = vadd.f32 %v483, %v508
    %v516 = vrot.slane %v444, 2
    %v517 = vrot.slane %v445, 2
    %v518 = vrot.slane %v446, 2
    %v519 = vrot.slane %v447, 2
    %524 = vrot.lane.b32.xlu0 %v516, 49
    %v525 = vpop.permute.xlu0 %524
    %526 = vrot.lane.b32.xlu0 %v517, 49
    %v527 = vpop.permute.xlu0 %526
    %528 = vrot.lane.b32.xlu0 %v518, 49
    %v529 = vpop.permute.xlu0 %528
    %530 = vrot.lane.b32.xlu0 %v519, 49
    %v531 = vpop.permute.xlu0 %530
    %vm532 = vcmp.lt.s32.totalorder %v481, 49
    %v533 = vsel %vm532, %v529, %v531
    %v534 = vsel %vm532, %v527, %v529
    %v535 = vsel %vm532, %v525, %v527
    %v536 = vsel %vm532, %v531, %v525
    %v537 = vadd.f32 %v512, %v536
    %v538 = vadd.f32 %v513, %v535
    %v539 = vadd.f32 %v514, %v534
    %v540 = vadd.f32 %v515, %v533
    %v541 = vrot.slane %v444, 3
    %v542 = vrot.slane %v445, 3
    %v543 = vrot.slane %v446, 3
    %v544 = vrot.slane %v447, 3
    %549 = vrot.lane.b32.xlu0 %v541, 48
    %v550 = vpop.permute.xlu0 %549
    %551 = vrot.lane.b32.xlu0 %v542, 48
    %v552 = vpop.permute.xlu0 %551
    %553 = vrot.lane.b32.xlu0 %v543, 48
    %v554 = vpop.permute.xlu0 %553
    %555 = vrot.lane.b32.xlu0 %v544, 48
    %v556 = vpop.permute.xlu0 %555
    %vm557 = vcmp.lt.s32.totalorder %v481, 48
    %v558 = vsel %vm557, %v554, %v556
    %v559 = vsel %vm557, %v552, %v554
    %v560 = vsel %vm557, %v550, %v552
    %v561 = vsel %vm557, %v556, %v550
    %v562 = vadd.f32 %v537, %v561
    %v563 = vadd.f32 %v538, %v560
    %v564 = vadd.f32 %v539, %v559
    %v565 = vadd.f32 %v540, %v558
    %v566 = vrot.slane %v444, 4
    %v567 = vrot.slane %v445, 4
    %v568 = vrot.slane %v446, 4
    %v569 = vrot.slane %v447, 4
    %574 = vrot.lane.b32.xlu0 %v566, 47
    %v575 = vpop.permute.xlu0 %574
    %576 = vrot.lane.b32.xlu0 %v567, 47
    %v577 = vpop.permute.xlu0 %576
    %578 = vrot.lane.b32.xlu0 %v568, 47
    %v579 = vpop.permute.xlu0 %578
    %580 = vrot.lane.b32.xlu0 %v569, 47
    %v581 = vpop.permute.xlu0 %580
    %vm582 = vcmp.lt.s32.totalorder %v481, 47
    %v583 = vsel %vm582, %v579, %v581
    %v584 = vsel %vm582, %v577, %v579
    %v585 = vsel %vm582, %v575, %v577
    %v586 = vsel %vm582, %v581, %v575
    %v587 = vadd.f32 %v562, %v586
    %v588 = vadd.f32 %v563, %v585
    %v589 = vadd.f32 %v564, %v584
    %v590 = vadd.f32 %v565, %v583
    %v591 = vrot.slane %v444, 5
    %v592 = vrot.slane %v445, 5
    %v593 = vrot.slane %v446, 5
    %v594 = vrot.slane %v447, 5
    %599 = vrot.lane.b32.xlu0 %v591, 46
    %v600 = vpop.permute.xlu0 %599
    %601 = vrot.lane.b32.xlu0 %v592, 46
    %v602 = vpop.permute.xlu0 %601
    %603 = vrot.lane.b32.xlu0 %v593, 46
    %v604 = vpop.permute.xlu0 %603
    %605 = vrot.lane.b32.xlu0 %v594, 46
    %v606 = vpop.permute.xlu0 %605
    %vm607 = vcmp.lt.s32.totalorder %v481, 46
    %v608 = vsel %vm607, %v604, %v606
    %v609 = vsel %vm607, %v602, %v604
    %v610 = vsel %vm607, %v600, %v602
    %v611 = vsel %vm607, %v606, %v600
    %v612 = vadd.f32 %v587, %v611
    %v613 = vadd.f32 %v588, %v610
    %v614 = vadd.f32 %v589, %v609
    %v615 = vadd.f32 %v590, %v608
    %v616 = vrot.slane %v444, 6
    %v617 = vrot.slane %v445, 6
    %v618 = vrot.slane %v446, 6
    %v619 = vrot.slane %v447, 6
    %624 = vrot.lane.b32.xlu0 %v616, 45
    %v625 = vpop.permute.xlu0 %624
    %626 = vrot.lane.b32.xlu0 %v617, 45
    %v627 = vpop.permute.xlu0 %626
    %628 = vrot.lane.b32.xlu0 %v618, 45
    %v629 = vpop.permute.xlu0 %628
    %630 = vrot.lane.b32.xlu0 %v619, 45
    %v631 = vpop.permute.xlu0 %630
    %vm632 = vcmp.lt.s32.totalorder %v481, 45
    %v633 = vsel %vm632, %v629, %v631
    %v634 = vsel %vm632, %v627, %v629
    %v635 = vsel %vm632, %v625, %v627
    %v636 = vsel %vm632, %v631, %v625
    %v637 = vadd.f32 %v612, %v636
    %v638 = vadd.f32 %v613, %v635
    %v639 = vadd.f32 %v614, %v634
    %v640 = vadd.f32 %v615, %v633
    %v641 = vrot.slane %v444, 7
    %v642 = vrot.slane %v445, 7
    %v643 = vrot.slane %v446, 7
    %v644 = vrot.slane %v447, 7
    %649 = vrot.lane.b32.xlu0 %v641, 35
    %v650 = vpop.permute.xlu0 %649
    %651 = vrot.lane.b32.xlu0 %v642, 35
    %v652 = vpop.permute.xlu0 %651
    %653 = vrot.lane.b32.xlu0 %v643, 35
    %v654 = vpop.permute.xlu0 %653
    %655 = vrot.lane.b32.xlu0 %v644, 35
    %v656 = vpop.permute.xlu0 %655
    %vm657 = vcmp.lt.s32.totalorder %v481, 35
    %v658 = vsel %vm657, %v654, %v656
    %v659 = vsel %vm657, %v652, %v654
    %v660 = vsel %vm657, %v650, %v652
    %v661 = vsel %vm657, %v656, %v650
    %662 = vrot.lane.b32.xlu0 %v448, 34
    %v663 = vpop.permute.xlu0 %662
    %664 = vrot.lane.b32.xlu0 %v449, 34
    %v665 = vpop.permute.xlu0 %664
    %666 = vrot.lane.b32.xlu0 %v450, 34
    %v667 = vpop.permute.xlu0 %666
    %668 = vrot.lane.b32.xlu0 %v451, 34
    %v669 = vpop.permute.xlu0 %668
    %vm670 = vcmp.lt.s32.totalorder %v481, 34
    %v671 = vsel %vm670, %v667, %v669
    %v672 = vsel %vm670, %v665, %v667
    %v673 = vsel %vm670, %v663, %v665
    %v674 = vsel %vm670, %v669, %v663
    %v675 = vadd.f32 %v661, %v674
    %v676 = vadd.f32 %v660, %v673
    %v677 = vadd.f32 %v659, %v672
    %v678 = vadd.f32 %v658, %v671
    %v683 = vrot.slane %v448, 1
    %v684 = vrot.slane %v449, 1
    %v685 = vrot.slane %v450, 1
    %v686 = vrot.slane %v451, 1
    %691 = vrot.lane.b32.xlu0 %v683, 33
    %v692 = vpop.permute.xlu0 %691
    %693 = vrot.lane.b32.xlu0 %v684, 33
    %v694 = vpop.permute.xlu0 %693
    %695 = vrot.lane.b32.xlu0 %v685, 33
    %v696 = vpop.permute.xlu0 %695
    %697 = vrot.lane.b32.xlu0 %v686, 33
    %v698 = vpop.permute.xlu0 %697
    %vm699 = vcmp.lt.s32.totalorder %v481, 33
    %v700 = vsel %vm699, %v696, %v698
    %v701 = vsel %vm699, %v694, %v696
    %v702 = vsel %vm699, %v692, %v694
    %v703 = vsel %vm699, %v698, %v692
    %v704 = vadd.f32 %v675, %v703
    %v705 = vadd.f32 %v676, %v702
    %v706 = vadd.f32 %v677, %v701
    %v707 = vadd.f32 %v678, %v700
    %v708 = vrot.slane %v448, 2
    %v709 = vrot.slane %v449, 2
    %v710 = vrot.slane %v450, 2
    %v711 = vrot.slane %v451, 2
    %716 = vrot.lane.b32.xlu0 %v708, 32
    %v717 = vpop.permute.xlu0 %716
    %718 = vrot.lane.b32.xlu0 %v709, 32
    %v719 = vpop.permute.xlu0 %718
    %720 = vrot.lane.b32.xlu0 %v710, 32
    %v721 = vpop.permute.xlu0 %720
    %722 = vrot.lane.b32.xlu0 %v711, 32
    %v723 = vpop.permute.xlu0 %722
    %vm724 = vcmp.lt.s32.totalorder %v481, 32
    %v725 = vsel %vm724, %v721, %v723
    %v726 = vsel %vm724, %v719, %v721
    %v727 = vsel %vm724, %v717, %v719
    %v728 = vsel %vm724, %v723, %v717
    %v729 = vadd.f32 %v704, %v728
    %v730 = vadd.f32 %v705, %v727
    %v731 = vadd.f32 %v706, %v726
    %v732 = vadd.f32 %v707, %v725
    %v733 = vrot.slane %v448, 3
    %v734 = vrot.slane %v449, 3
    %v735 = vrot.slane %v450, 3
    %v736 = vrot.slane %v451, 3
    %741 = vrot.lane.b32.xlu0 %v733, 31
    %v742 = vpop.permute.xlu0 %741
    %743 = vrot.lane.b32.xlu0 %v734, 31
    %v744 = vpop.permute.xlu0 %743
    %745 = vrot.lane.b32.xlu0 %v735, 31
    %v746 = vpop.permute.xlu0 %745
    %747 = vrot.lane.b32.xlu0 %v736, 31
    %v748 = vpop.permute.xlu0 %747
    %vm749 = vcmp.lt.s32.totalorder %v481, 31
    %v750 = vsel %vm749, %v746, %v748
    %v751 = vsel %vm749, %v744, %v746
    %v752 = vsel %vm749, %v742, %v744
    %v753 = vsel %vm749, %v748, %v742
    %v754 = vadd.f32 %v729, %v753
    %v755 = vadd.f32 %v730, %v752
    %v756 = vadd.f32 %v731, %v751
    %v757 = vadd.f32 %v732, %v750
    %v758 = vrot.slane %v448, 4
    %v759 = vrot.slane %v449, 4
    %v760 = vrot.slane %v450, 4
    %v761 = vrot.slane %v451, 4
    %766 = vrot.lane.b32.xlu0 %v758, 30
    %v767 = vpop.permute.xlu0 %766
    %768 = vrot.lane.b32.xlu0 %v759, 30
    %v769 = vpop.permute.xlu0 %768
    %770 = vrot.lane.b32.xlu0 %v760, 30
    %v771 = vpop.permute.xlu0 %770
    %772 = vrot.lane.b32.xlu0 %v761, 30
    %v773 = vpop.permute.xlu0 %772
    %vm774 = vcmp.lt.s32.totalorder %v481, 30
    %v775 = vsel %vm774, %v771, %v773
    %v776 = vsel %vm774, %v769, %v771
    %v777 = vsel %vm774, %v767, %v769
    %v778 = vsel %vm774, %v773, %v767
    %v779 = vadd.f32 %v754, %v778
    %v780 = vadd.f32 %v755, %v777
    %v781 = vadd.f32 %v756, %v776
    %v782 = vadd.f32 %v757, %v775
    %v783 = vrot.slane %v448, 5
    %v784 = vrot.slane %v449, 5
    %v785 = vrot.slane %v450, 5
    %v786 = vrot.slane %v451, 5
    %791 = vrot.lane.b32.xlu0 %v783, 29
    %v792 = vpop.permute.xlu0 %791
    %793 = vrot.lane.b32.xlu0 %v784, 29
    %v794 = vpop.permute.xlu0 %793
    %795 = vrot.lane.b32.xlu0 %v785, 29
    %v796 = vpop.permute.xlu0 %795
    %797 = vrot.lane.b32.xlu0 %v786, 29
    %v798 = vpop.permute.xlu0 %797
    %vm799 = vcmp.lt.s32.totalorder %v481, 29
    %v800 = vsel %vm799, %v796, %v798
    %v801 = vsel %vm799, %v794, %v796
    %v802 = vsel %vm799, %v792, %v794
    %v803 = vsel %vm799, %v798, %v792
    %v804 = vadd.f32 %v779, %v803
    %v805 = vadd.f32 %v780, %v802
    %v806 = vadd.f32 %v781, %v801
    %v807 = vadd.f32 %v782, %v800
    %v808 = vrot.slane %v448, 6
    %v809 = vrot.slane %v449, 6
    %v810 = vrot.slane %v450, 6
    %v811 = vrot.slane %v451, 6
    %816 = vrot.lane.b32.xlu0 %v808, 19
    %v817 = vpop.permute.xlu0 %816
    %818 = vrot.lane.b32.xlu0 %v809, 19
    %v819 = vpop.permute.xlu0 %818
    %820 = vrot.lane.b32.xlu0 %v810, 19
    %v821 = vpop.permute.xlu0 %820
    %822 = vrot.lane.b32.xlu0 %v811, 19
    %v823 = vpop.permute.xlu0 %822
    %vm824 = vcmp.lt.s32.totalorder %v481, 19
    %v825 = vsel %vm824, %v821, %v823
    %v826 = vsel %vm824, %v819, %v821
    %v827 = vsel %vm824, %v817, %v819
    %v828 = vsel %vm824, %v823, %v817
    %v829 = vrot.slane %v448, 7
    %v830 = vrot.slane %v449, 7
    %v831 = vrot.slane %v450, 7
    %v832 = vrot.slane %v451, 7
    %837 = vrot.lane.b32.xlu0 %v829, 18
    %v838 = vpop.permute.xlu0 %837
    %839 = vrot.lane.b32.xlu0 %v830, 18
    %v840 = vpop.permute.xlu0 %839
    %841 = vrot.lane.b32.xlu0 %v831, 18
    %v842 = vpop.permute.xlu0 %841
    %843 = vrot.lane.b32.xlu0 %v832, 18
    %v844 = vpop.permute.xlu0 %843
    %vm845 = vcmp.lt.s32.totalorder %v481, 18
    %v846 = vsel %vm845, %v842, %v844
    %v847 = vsel %vm845, %v840, %v842
    %v848 = vsel %vm845, %v838, %v840
    %v849 = vsel %vm845, %v844, %v838
    %v850 = vadd.f32 %v828, %v849
    %v851 = vadd.f32 %v827, %v848
    %v852 = vadd.f32 %v826, %v847
    %v853 = vadd.f32 %v825, %v846
    %854 = vrot.lane.b32.xlu0 %v452, 17
    %v855 = vpop.permute.xlu0 %854
    %856 = vrot.lane.b32.xlu0 %v453, 17
    %v857 = vpop.permute.xlu0 %856
    %858 = vrot.lane.b32.xlu0 %v454, 17
    %v859 = vpop.permute.xlu0 %858
    %860 = vrot.lane.b32.xlu0 %v455, 17
    %v861 = vpop.permute.xlu0 %860
    %vm862 = vcmp.lt.s32.totalorder %v481, 17
    %v863 = vsel %vm862, %v859, %v861
    %v864 = vsel %vm862, %v857, %v859
    %v865 = vsel %vm862, %v855, %v857
    %v866 = vsel %vm862, %v861, %v855
    %v867 = vadd.f32 %v850, %v866
    %v868 = vadd.f32 %v851, %v865
    %v869 = vadd.f32 %v852, %v864
    %v870 = vadd.f32 %v853, %v863
    %v875 = vrot.slane %v452, 1
    %v876 = vrot.slane %v453, 1
    %v877 = vrot.slane %v454, 1
    %v878 = vrot.slane %v455, 1
    %883 = vrot.lane.b32.xlu0 %v875, 16
    %v884 = vpop.permute.xlu0 %883
    %885 = vrot.lane.b32.xlu0 %v876, 16
    %v886 = vpop.permute.xlu0 %885
    %887 = vrot.lane.b32.xlu0 %v877, 16
    %v888 = vpop.permute.xlu0 %887
    %889 = vrot.lane.b32.xlu0 %v878, 16
    %v890 = vpop.permute.xlu0 %889
    %vm891 = vcmp.lt.s32.totalorder %v481, 16
    %v892 = vsel %vm891, %v888, %v890
    %v893 = vsel %vm891, %v886, %v888
    %v894 = vsel %vm891, %v884, %v886
    %v895 = vsel %vm891, %v890, %v884
    %v896 = vadd.f32 %v867, %v895
    %v897 = vadd.f32 %v868, %v894
    %v898 = vadd.f32 %v869, %v893
    %v899 = vadd.f32 %v870, %v892
    %v900 = vrot.slane %v452, 2
    %v901 = vrot.slane %v453, 2
    %v902 = vrot.slane %v454, 2
    %v903 = vrot.slane %v455, 2
    %908 = vrot.lane.b32.xlu0 %v900, 15
    %v909 = vpop.permute.xlu0 %908
    %910 = vrot.lane.b32.xlu0 %v901, 15
    %v911 = vpop.permute.xlu0 %910
    %912 = vrot.lane.b32.xlu0 %v902, 15
    %v913 = vpop.permute.xlu0 %912
    %914 = vrot.lane.b32.xlu0 %v903, 15
    %v915 = vpop.permute.xlu0 %914
    %vm916 = vcmp.lt.s32.totalorder %v481, 15
    %v917 = vsel %vm916, %v913, %v915
    %v918 = vsel %vm916, %v911, %v913
    %v919 = vsel %vm916, %v909, %v911
    %v920 = vsel %vm916, %v915, %v909
    %v921 = vadd.f32 %v896, %v920
    %v922 = vadd.f32 %v897, %v919
    %v923 = vadd.f32 %v898, %v918
    %v924 = vadd.f32 %v899, %v917
    %v925 = vrot.slane %v452, 3
    %v926 = vrot.slane %v453, 3
    %v927 = vrot.slane %v454, 3
    %v928 = vrot.slane %v455, 3
    %933 = vrot.lane.b32.xlu0 %v925, 14
    %v934 = vpop.permute.xlu0 %933
    %935 = vrot.lane.b32.xlu0 %v926, 14
    %v936 = vpop.permute.xlu0 %935
    %937 = vrot.lane.b32.xlu0 %v927, 14
    %v938 = vpop.permute.xlu0 %937
    %939 = vrot.lane.b32.xlu0 %v928, 14
    %v940 = vpop.permute.xlu0 %939
    %vm941 = vcmp.lt.s32.totalorder %v481, 14
    %v942 = vsel %vm941, %v938, %v940
    %v943 = vsel %vm941, %v936, %v938
    %v944 = vsel %vm941, %v934, %v936
    %v945 = vsel %vm941, %v940, %v934
    %v946 = vadd.f32 %v921, %v945
    %v947 = vadd.f32 %v922, %v944
    %v948 = vadd.f32 %v923, %v943
    %v949 = vadd.f32 %v924, %v942
    %v950 = vrot.slane %v452, 4
    %v951 = vrot.slane %v453, 4
    %v952 = vrot.slane %v454, 4
    %v953 = vrot.slane %v455, 4
    %958 = vrot.lane.b32.xlu0 %v950, 13
    %v959 = vpop.permute.xlu0 %958
    %960 = vrot.lane.b32.xlu0 %v951, 13
    %v961 = vpop.permute.xlu0 %960
    %962 = vrot.lane.b32.xlu0 %v952, 13
    %v963 = vpop.permute.xlu0 %962
    %964 = vrot.lane.b32.xlu0 %v953, 13
    %v965 = vpop.permute.xlu0 %964
    %vm966 = vcmp.lt.s32.totalorder %v481, 13
    %v967 = vsel %vm966, %v963, %v965
    %v968 = vsel %vm966, %v961, %v963
    %v969 = vsel %vm966, %v959, %v961
    %v970 = vsel %vm966, %v965, %v959
    %v971 = vadd.f32 %v946, %v970
    %v972 = vadd.f32 %v947, %v969
    %v973 = vadd.f32 %v948, %v968
    %v974 = vadd.f32 %v949, %v967
    %v975 = vrot.slane %v452, 5
    %v976 = vrot.slane %v453, 5
    %v977 = vrot.slane %v454, 5
    %v978 = vrot.slane %v455, 5
    %983 = vrot.lane.b32.xlu0 %v975, 3
    %v984 = vpop.permute.xlu0 %983
    %985 = vrot.lane.b32.xlu0 %v976, 3
    %v986 = vpop.permute.xlu0 %985
    %987 = vrot.lane.b32.xlu0 %v977, 3
    %v988 = vpop.permute.xlu0 %987
    %989 = vrot.lane.b32.xlu0 %v978, 3
    %v990 = vpop.permute.xlu0 %989
    %vm991 = vcmp.lt.s32.totalorder %v481, 3
    %v992 = vsel %vm991, %v988, %v990
    %v993 = vsel %vm991, %v986, %v988
    %v994 = vsel %vm991, %v984, %v986
    %v995 = vsel %vm991, %v990, %v984
    %v996 = vrot.slane %v452, 6
    %v997 = vrot.slane %v453, 6
    %v998 = vrot.slane %v454, 6
    %v999 = vrot.slane %v455, 6
    %1004 = vrot.lane.b32.xlu0 %v996, 2
    %v1005 = vpop.permute.xlu0 %1004
    %1006 = vrot.lane.b32.xlu0 %v997, 2
    %v1007 = vpop.permute.xlu0 %1006
    %1008 = vrot.lane.b32.xlu0 %v998, 2
    %v1009 = vpop.permute.xlu0 %1008
    %1010 = vrot.lane.b32.xlu0 %v999, 2
    %v1011 = vpop.permute.xlu0 %1010
    %vm1012 = vcmp.lt.s32.totalorder %v481, 2
    %v1013 = vsel %vm1012, %v1009, %v1011
    %v1014 = vsel %vm1012, %v1007, %v1009
    %v1015 = vsel %vm1012, %v1005, %v1007
    %v1016 = vsel %vm1012, %v1011, %v1005
    %v1017 = vadd.f32 %v995, %v1016
    %v1018 = vadd.f32 %v994, %v1015
    %v1019 = vadd.f32 %v993, %v1014
    %v1020 = vadd.f32 %v992, %v1013
    %v1021 = vrot.slane %v452, 7
    %v1022 = vrot.slane %v453, 7
    %v1023 = vrot.slane %v454, 7
    %v1024 = vrot.slane %v455, 7
    %1029 = vrot.lane.b32.xlu0 %v1021, 1
    %v1030 = vpop.permute.xlu0 %1029
    %1031 = vrot.lane.b32.xlu0 %v1022, 1
    %v1032 = vpop.permute.xlu0 %1031
    %1033 = vrot.lane.b32.xlu0 %v1023, 1
    %v1034 = vpop.permute.xlu0 %1033
    %1035 = vrot.lane.b32.xlu0 %v1024, 1
    %v1036 = vpop.permute.xlu0 %1035
    %vm1037 = vcmp.lt.s32.totalorder %v481, 1
    %v1038 = vsel %vm1037, %v1034, %v1036
    %v1039 = vsel %vm1037, %v1032, %v1034
    %v1040 = vsel %vm1037, %v1030, %v1032
    %v1041 = vsel %vm1037, %v1036, %v1030
    %v1042 = vadd.f32 %v1017, %v1041
    %v1043 = vadd.f32 %v1018, %v1040
    %v1044 = vadd.f32 %v1019, %v1039
    %v1045 = vadd.f32 %v1020, %v1038
    %v1046 = vadd.f32 %v1042, %v456
    %v1047 = vadd.f32 %v1043, %v457
    %v1048 = vadd.f32 %v1044, %v458
    %v1049 = vadd.f32 %v1045, %v459
    %v1054 = vrot.slane %v456, 1
    %v1055 = vrot.slane %v457, 1
    %v1056 = vrot.slane %v458, 1
    %v1057 = vrot.slane %v459, 1
    %1062 = vrot.lane.b32.xlu0 %v1054, 127
    %v1063 = vpop.permute.xlu0 %1062
    %1064 = vrot.lane.b32.xlu0 %v1055, 127
    %v1065 = vpop.permute.xlu0 %1064
    %1066 = vrot.lane.b32.xlu0 %v1056, 127
    %v1067 = vpop.permute.xlu0 %1066
    %1068 = vrot.lane.b32.xlu0 %v1057, 127
    %v1069 = vpop.permute.xlu0 %1068
    %vm1070 = vcmp.lt.s32.totalorder %v481, 127
    %v1071 = vsel %vm1070, %v1067, %v1069
    %v1072 = vsel %vm1070, %v1065, %v1067
    %v1073 = vsel %vm1070, %v1063, %v1065
    %v1074 = vsel %vm1070, %v1069, %v1063
    %v1075 = vadd.f32 %v1046, %v1073
    %v1076 = vadd.f32 %v1047, %v1072
    %v1077 = vadd.f32 %v1048, %v1071
    %v1078 = vadd.f32 %v1049, %v1074
    %v1079 = vrot.slane %v456, 2
    %v1080 = vrot.slane %v457, 2
    %v1081 = vrot.slane %v458, 2
    %v1082 = vrot.slane %v459, 2
    %1087 = vrot.lane.b32.xlu0 %v1079, 126
    %v1088 = vpop.permute.xlu0 %1087
    %1089 = vrot.lane.b32.xlu0 %v1080, 126
    %v1090 = vpop.permute.xlu0 %1089
    %1091 = vrot.lane.b32.xlu0 %v1081, 126
    %v1092 = vpop.permute.xlu0 %1091
    %1093 = vrot.lane.b32.xlu0 %v1082, 126
    %v1094 = vpop.permute.xlu0 %1093
    %vm1095 = vcmp.lt.s32.totalorder %v481, 126
    %v1096 = vsel %vm1095, %v1092, %v1094
    %v1097 = vsel %vm1095, %v1090, %v1092
    %v1098 = vsel %vm1095, %v1088, %v1090
    %v1099 = vsel %vm1095, %v1094, %v1088
    %v1100 = vadd.f32 %v1075, %v1098
    %v1101 = vadd.f32 %v1076, %v1097
    %v1102 = vadd.f32 %v1077, %v1096
    %v1103 = vadd.f32 %v1078, %v1099
    %v1104 = vrot.slane %v456, 3
    %v1105 = vrot.slane %v457, 3
    %v1106 = vrot.slane %v458, 3
    %v1107 = vrot.slane %v459, 3
    %1112 = vrot.lane.b32.xlu0 %v1104, 125
    %v1113 = vpop.permute.xlu0 %1112
    %1114 = vrot.lane.b32.xlu0 %v1105, 125
    %v1115 = vpop.permute.xlu0 %1114
    %1116 = vrot.lane.b32.xlu0 %v1106, 125
    %v1117 = vpop.permute.xlu0 %1116
    %1118 = vrot.lane.b32.xlu0 %v1107, 125
    %v1119 = vpop.permute.xlu0 %1118
    %vm1120 = vcmp.lt.s32.totalorder %v481, 125
    %v1121 = vsel %vm1120, %v1117, %v1119
    %v1122 = vsel %vm1120, %v1115, %v1117
    %v1123 = vsel %vm1120, %v1113, %v1115
    %v1124 = vsel %vm1120, %v1119, %v1113
    %v1125 = vadd.f32 %v1100, %v1123
    %v1126 = vadd.f32 %v1101, %v1122
    %v1127 = vadd.f32 %v1102, %v1121
    %v1128 = vadd.f32 %v1103, %v1124
    %v1129 = vrot.slane %v456, 4
    %v1130 = vrot.slane %v457, 4
    %v1131 = vrot.slane %v458, 4
    %v1132 = vrot.slane %v459, 4
    %1137 = vrot.lane.b32.xlu0 %v1129, 115
    %v1138 = vpop.permute.xlu0 %1137
    %1139 = vrot.lane.b32.xlu0 %v1130, 115
    %v1140 = vpop.permute.xlu0 %1139
    %1141 = vrot.lane.b32.xlu0 %v1131, 115
    %v1142 = vpop.permute.xlu0 %1141
    %1143 = vrot.lane.b32.xlu0 %v1132, 115
    %v1144 = vpop.permute.xlu0 %1143
    %vm1145 = vcmp.lt.s32.totalorder %v481, 115
    %v1146 = vsel %vm1145, %v1142, %v1144
    %v1147 = vsel %vm1145, %v1140, %v1142
    %v1148 = vsel %vm1145, %v1138, %v1140
    %v1149 = vsel %vm1145, %v1144, %v1138
    %v1150 = vrot.slane %v456, 5
    %v1151 = vrot.slane %v457, 5
    %v1152 = vrot.slane %v458, 5
    %v1153 = vrot.slane %v459, 5
    %1158 = vrot.lane.b32.xlu0 %v1150, 114
    %v1159 = vpop.permute.xlu0 %1158
    %1160 = vrot.lane.b32.xlu0 %v1151, 114
    %v1161 = vpop.permute.xlu0 %1160
    %1162 = vrot.lane.b32.xlu0 %v1152, 114
    %v1163 = vpop.permute.xlu0 %1162
    %1164 = vrot.lane.b32.xlu0 %v1153, 114
    %v1165 = vpop.permute.xlu0 %1164
    %vm1166 = vcmp.lt.s32.totalorder %v481, 114
    %v1167 = vsel %vm1166, %v1163, %v1165
    %v1168 = vsel %vm1166, %v1161, %v1163
    %v1169 = vsel %vm1166, %v1159, %v1161
    %v1170 = vsel %vm1166, %v1165, %v1159
    %v1171 = vadd.f32 %v1148, %v1169
    %v1172 = vadd.f32 %v1147, %v1168
    %v1173 = vadd.f32 %v1146, %v1167
    %v1174 = vadd.f32 %v1149, %v1170
    %v1175 = vrot.slane %v456, 6
    %v1176 = vrot.slane %v457, 6
    %v1177 = vrot.slane %v458, 6
    %v1178 = vrot.slane %v459, 6
    %1183 = vrot.lane.b32.xlu0 %v1175, 113
    %v1184 = vpop.permute.xlu0 %1183
    %1185 = vrot.lane.b32.xlu0 %v1176, 113
    %v1186 = vpop.permute.xlu0 %1185
    %1187 = vrot.lane.b32.xlu0 %v1177, 113
    %v1188 = vpop.permute.xlu0 %1187
    %1189 = vrot.lane.b32.xlu0 %v1178, 113
    %v1190 = vpop.permute.xlu0 %1189
    %vm1191 = vcmp.lt.s32.totalorder %v481, 113
    %v1192 = vsel %vm1191, %v1188, %v1190
    %v1193 = vsel %vm1191, %v1186, %v1188
    %v1194 = vsel %vm1191, %v1184, %v1186
    %v1195 = vsel %vm1191, %v1190, %v1184
    %v1196 = vadd.f32 %v1171, %v1194
    %v1197 = vadd.f32 %v1172, %v1193
    %v1198 = vadd.f32 %v1173, %v1192
    %v1199 = vadd.f32 %v1174, %v1195
    %v1200 = vrot.slane %v456, 7
    %v1201 = vrot.slane %v457, 7
    %v1202 = vrot.slane %v458, 7
    %v1203 = vrot.slane %v459, 7
    %1208 = vrot.lane.b32.xlu0 %v1200, 112
    %v1209 = vpop.permute.xlu0 %1208
    %1210 = vrot.lane.b32.xlu0 %v1201, 112
    %v1211 = vpop.permute.xlu0 %1210
    %1212 = vrot.lane.b32.xlu0 %v1202, 112
    %v1213 = vpop.permute.xlu0 %1212
    %1214 = vrot.lane.b32.xlu0 %v1203, 112
    %v1215 = vpop.permute.xlu0 %1214
    %vm1216 = vcmp.lt.s32.totalorder %v481, 112
    %v1217 = vsel %vm1216, %v1213, %v1215
    %v1218 = vsel %vm1216, %v1211, %v1213
    %v1219 = vsel %vm1216, %v1209, %v1211
    %v1220 = vsel %vm1216, %v1215, %v1209
    %v1221 = vadd.f32 %v1196, %v1219
    %v1222 = vadd.f32 %v1197, %v1218
    %v1223 = vadd.f32 %v1198, %v1217
    %v1224 = vadd.f32 %v1199, %v1220
    %1225 = vrot.lane.b32.xlu0 %v460, 111
    %v1226 = vpop.permute.xlu0 %1225
    %1227 = vrot.lane.b32.xlu0 %v461, 111
    %v1228 = vpop.permute.xlu0 %1227
    %1229 = vrot.lane.b32.xlu0 %v462, 111
    %v1230 = vpop.permute.xlu0 %1229
    %1231 = vrot.lane.b32.xlu0 %v463, 111
    %v1232 = vpop.permute.xlu0 %1231
    %vm1233 = vcmp.lt.s32.totalorder %v481, 111
    %v1234 = vsel %vm1233, %v1230, %v1232
    %v1235 = vsel %vm1233, %v1228, %v1230
    %v1236 = vsel %vm1233, %v1226, %v1228
    %v1237 = vsel %vm1233, %v1232, %v1226
    %v1238 = vadd.f32 %v1221, %v1236
    %v1239 = vadd.f32 %v1222, %v1235
    %v1240 = vadd.f32 %v1223, %v1234
    %v1241 = vadd.f32 %v1224, %v1237
    %v1246 = vrot.slane %v460, 1
    %v1247 = vrot.slane %v461, 1
    %v1248 = vrot.slane %v462, 1
    %v1249 = vrot.slane %v463, 1
    %1254 = vrot.lane.b32.xlu0 %v1246, 110
    %v1255 = vpop.permute.xlu0 %1254
    %1256 = vrot.lane.b32.xlu0 %v1247, 110
    %v1257 = vpop.permute.xlu0 %1256
    %1258 = vrot.lane.b32.xlu0 %v1248, 110
    %v1259 = vpop.permute.xlu0 %1258
    %1260 = vrot.lane.b32.xlu0 %v1249, 110
    %v1261 = vpop.permute.xlu0 %1260
    %vm1262 = vcmp.lt.s32.totalorder %v481, 110
    %v1263 = vsel %vm1262, %v1259, %v1261
    %v1264 = vsel %vm1262, %v1257, %v1259
    %v1265 = vsel %vm1262, %v1255, %v1257
    %v1266 = vsel %vm1262, %v1261, %v1255
    %v1267 = vadd.f32 %v1238, %v1265
    %v1268 = vadd.f32 %v1239, %v1264
    %v1269 = vadd.f32 %v1240, %v1263
    %v1270 = vadd.f32 %v1241, %v1266
    %v1271 = vrot.slane %v460, 2
    %v1272 = vrot.slane %v461, 2
    %v1273 = vrot.slane %v462, 2
    %v1274 = vrot.slane %v463, 2
    %1279 = vrot.lane.b32.xlu0 %v1271, 109
    %v1280 = vpop.permute.xlu0 %1279
    %1281 = vrot.lane.b32.xlu0 %v1272, 109
    %v1282 = vpop.permute.xlu0 %1281
    %1283 = vrot.lane.b32.xlu0 %v1273, 109
    %v1284 = vpop.permute.xlu0 %1283
    %1285 = vrot.lane.b32.xlu0 %v1274, 109
    %v1286 = vpop.permute.xlu0 %1285
    %vm1287 = vcmp.lt.s32.totalorder %v481, 109
    %v1288 = vsel %vm1287, %v1284, %v1286
    %v1289 = vsel %vm1287, %v1282, %v1284
    %v1290 = vsel %vm1287, %v1280, %v1282
    %v1291 = vsel %vm1287, %v1286, %v1280
    %v1292 = vadd.f32 %v1267, %v1290
    %v1293 = vadd.f32 %v1268, %v1289
    %v1294 = vadd.f32 %v1269, %v1288
    %v1295 = vadd.f32 %v1270, %v1291
    %v1296 = vrot.slane %v460, 3
    %v1297 = vrot.slane %v461, 3
    %v1298 = vrot.slane %v462, 3
    %v1299 = vrot.slane %v463, 3
    %1304 = vrot.lane.b32.xlu0 %v1296, 99
    %v1305 = vpop.permute.xlu0 %1304
    %1306 = vrot.lane.b32.xlu0 %v1297, 99
    %v1307 = vpop.permute.xlu0 %1306
    %1308 = vrot.lane.b32.xlu0 %v1298, 99
    %v1309 = vpop.permute.xlu0 %1308
    %1310 = vrot.lane.b32.xlu0 %v1299, 99
    %v1311 = vpop.permute.xlu0 %1310
    %vm1312 = vcmp.lt.s32.totalorder %v481, 99
    %v1313 = vsel %vm1312, %v1309, %v1311
    %v1314 = vsel %vm1312, %v1307, %v1309
    %v1315 = vsel %vm1312, %v1305, %v1307
    %v1316 = vsel %vm1312, %v1311, %v1305
    %v1317 = vrot.slane %v460, 4
    %v1318 = vrot.slane %v461, 4
    %v1319 = vrot.slane %v462, 4
    %v1320 = vrot.slane %v463, 4
    %1325 = vrot.lane.b32.xlu0 %v1317, 98
    %v1326 = vpop.permute.xlu0 %1325
    %1327 = vrot.lane.b32.xlu0 %v1318, 98
    %v1328 = vpop.permute.xlu0 %1327
    %1329 = vrot.lane.b32.xlu0 %v1319, 98
    %v1330 = vpop.permute.xlu0 %1329
    %1331 = vrot.lane.b32.xlu0 %v1320, 98
    %v1332 = vpop.permute.xlu0 %1331
    %vm1333 = vcmp.lt.s32.totalorder %v481, 98
    %v1334 = vsel %vm1333, %v1330, %v1332
    %v1335 = vsel %vm1333, %v1328, %v1330
    %v1336 = vsel %vm1333, %v1326, %v1328
    %v1337 = vsel %vm1333, %v1332, %v1326
    %v1338 = vadd.f32 %v1315, %v1336
    %v1339 = vadd.f32 %v1314, %v1335
    %v1340 = vadd.f32 %v1313, %v1334
    %v1341 = vadd.f32 %v1316, %v1337
    %v1342 = vrot.slane %v460, 5
    %v1343 = vrot.slane %v461, 5
    %v1344 = vrot.slane %v462, 5
    %v1345 = vrot.slane %v463, 5
    %1350 = vrot.lane.b32.xlu0 %v1342, 97
    %v1351 = vpop.permute.xlu0 %1350
    %1352 = vrot.lane.b32.xlu0 %v1343, 97
    %v1353 = vpop.permute.xlu0 %1352
    %1354 = vrot.lane.b32.xlu0 %v1344, 97
    %v1355 = vpop.permute.xlu0 %1354
    %1356 = vrot.lane.b32.xlu0 %v1345, 97
    %v1357 = vpop.permute.xlu0 %1356
    %vm1358 = vcmp.lt.s32.totalorder %v481, 97
    %v1359 = vsel %vm1358, %v1355, %v1357
    %v1360 = vsel %vm1358, %v1353, %v1355
    %v1361 = vsel %vm1358, %v1351, %v1353
    %v1362 = vsel %vm1358, %v1357, %v1351
    %v1363 = vadd.f32 %v1338, %v1361
    %v1364 = vadd.f32 %v1339, %v1360
    %v1365 = vadd.f32 %v1340, %v1359
    %v1366 = vadd.f32 %v1341, %v1362
    %v1367 = vrot.slane %v460, 6
    %v1368 = vrot.slane %v461, 6
    %v1369 = vrot.slane %v462, 6
    %v1370 = vrot.slane %v463, 6
    %1375 = vrot.lane.b32.xlu0 %v1367, 96
    %v1376 = vpop.permute.xlu0 %1375
    %1377 = vrot.lane.b32.xlu0 %v1368, 96
    %v1378 = vpop.permute.xlu0 %1377
    %1379 = vrot.lane.b32.xlu0 %v1369, 96
    %v1380 = vpop.permute.xlu0 %1379
    %1381 = vrot.lane.b32.xlu0 %v1370, 96
    %v1382 = vpop.permute.xlu0 %1381
    %vm1383 = vcmp.lt.s32.totalorder %v481, 96
    %v1384 = vsel %vm1383, %v1380, %v1382
    %v1385 = vsel %vm1383, %v1378, %v1380
    %v1386 = vsel %vm1383, %v1376, %v1378
    %v1387 = vsel %vm1383, %v1382, %v1376
    %v1388 = vadd.f32 %v1363, %v1386
    %v1389 = vadd.f32 %v1364, %v1385
    %v1390 = vadd.f32 %v1365, %v1384
    %v1391 = vadd.f32 %v1366, %v1387
    %v1392 = vrot.slane %v460, 7
    %v1393 = vrot.slane %v461, 7
    %v1394 = vrot.slane %v462, 7
    %v1395 = vrot.slane %v463, 7
    %1400 = vrot.lane.b32.xlu0 %v1392, 95
    %v1401 = vpop.permute.xlu0 %1400
    %1402 = vrot.lane.b32.xlu0 %v1393, 95
    %v1403 = vpop.permute.xlu0 %1402
    %1404 = vrot.lane.b32.xlu0 %v1394, 95
    %v1405 = vpop.permute.xlu0 %1404
    %1406 = vrot.lane.b32.xlu0 %v1395, 95
    %v1407 = vpop.permute.xlu0 %1406
    %vm1408 = vcmp.lt.s32.totalorder %v481, 95
    %v1409 = vsel %vm1408, %v1405, %v1407
    %v1410 = vsel %vm1408, %v1403, %v1405
    %v1411 = vsel %vm1408, %v1401, %v1403
    %v1412 = vsel %vm1408, %v1407, %v1401
    %v1413 = vadd.f32 %v1388, %v1411
    %v1414 = vadd.f32 %v1389, %v1410
    %v1415 = vadd.f32 %v1390, %v1409
    %v1416 = vadd.f32 %v1391, %v1412
    %1417 = vrot.lane.b32.xlu0 %v464, 94
    %v1418 = vpop.permute.xlu0 %1417
    %1419 = vrot.lane.b32.xlu0 %v465, 94
    %v1420 = vpop.permute.xlu0 %1419
    %1421 = vrot.lane.b32.xlu0 %v466, 94
    %v1422 = vpop.permute.xlu0 %1421
    %1423 = vrot.lane.b32.xlu0 %v467, 94
    %v1424 = vpop.permute.xlu0 %1423
    %vm1425 = vcmp.lt.s32.totalorder %v481, 94
    %v1426 = vsel %vm1425, %v1422, %v1424
    %v1427 = vsel %vm1425, %v1420, %v1422
    %v1428 = vsel %vm1425, %v1418, %v1420
    %v1429 = vsel %vm1425, %v1424, %v1418
    %v1430 = vadd.f32 %v1413, %v1428
    %v1431 = vadd.f32 %v1414, %v1427
    %v1432 = vadd.f32 %v1415, %v1426
    %v1433 = vadd.f32 %v1416, %v1429
    %v1438 = vrot.slane %v464, 1
    %v1439 = vrot.slane %v465, 1
    %v1440 = vrot.slane %v466, 1
    %v1441 = vrot.slane %v467, 1
    %1446 = vrot.lane.b32.xlu0 %v1438, 93
    %v1447 = vpop.permute.xlu0 %1446
    %1448 = vrot.lane.b32.xlu0 %v1439, 93
    %v1449 = vpop.permute.xlu0 %1448
    %1450 = vrot.lane.b32.xlu0 %v1440, 93
    %v1451 = vpop.permute.xlu0 %1450
    %1452 = vrot.lane.b32.xlu0 %v1441, 93
    %v1453 = vpop.permute.xlu0 %1452
    %vm1454 = vcmp.lt.s32.totalorder %v481, 93
    %v1455 = vsel %vm1454, %v1451, %v1453
    %v1456 = vsel %vm1454, %v1449, %v1451
    %v1457 = vsel %vm1454, %v1447, %v1449
    %v1458 = vsel %vm1454, %v1453, %v1447
    %v1459 = vadd.f32 %v1430, %v1457
    %v1460 = vadd.f32 %v1431, %v1456
    %v1461 = vadd.f32 %v1432, %v1455
    %v1462 = vadd.f32 %v1433, %v1458
    %v1463 = vrot.slane %v464, 2
    %v1464 = vrot.slane %v465, 2
    %v1465 = vrot.slane %v466, 2
    %v1466 = vrot.slane %v467, 2
    %1471 = vrot.lane.b32.xlu0 %v1463, 83
    %v1472 = vpop.permute.xlu0 %1471
    %1473 = vrot.lane.b32.xlu0 %v1464, 83
    %v1474 = vpop.permute.xlu0 %1473
    %1475 = vrot.lane.b32.xlu0 %v1465, 83
    %v1476 = vpop.permute.xlu0 %1475
    %1477 = vrot.lane.b32.xlu0 %v1466, 83
    %v1478 = vpop.permute.xlu0 %1477
    %vm1479 = vcmp.lt.s32.totalorder %v481, 83
    %v1480 = vsel %vm1479, %v1476, %v1478
    %v1481 = vsel %vm1479, %v1474, %v1476
    %v1482 = vsel %vm1479, %v1472, %v1474
    %v1483 = vsel %vm1479, %v1478, %v1472
    %v1484 = vrot.slane %v464, 3
    %v1485 = vrot.slane %v465, 3
    %v1486 = vrot.slane %v466, 3
    %v1487 = vrot.slane %v467, 3
    %1492 = vrot.lane.b32.xlu0 %v1484, 82
    %v1493 = vpop.permute.xlu0 %1492
    %1494 = vrot.lane.b32.xlu0 %v1485, 82
    %v1495 = vpop.permute.xlu0 %1494
    %1496 = vrot.lane.b32.xlu0 %v1486, 82
    %v1497 = vpop.permute.xlu0 %1496
    %1498 = vrot.lane.b32.xlu0 %v1487, 82
    %v1499 = vpop.permute.xlu0 %1498
    %vm1500 = vcmp.lt.s32.totalorder %v481, 82
    %v1501 = vsel %vm1500, %v1497, %v1499
    %v1502 = vsel %vm1500, %v1495, %v1497
    %v1503 = vsel %vm1500, %v1493, %v1495
    %v1504 = vsel %vm1500, %v1499, %v1493
    %v1505 = vadd.f32 %v1482, %v1503
    %v1506 = vadd.f32 %v1481, %v1502
    %v1507 = vadd.f32 %v1480, %v1501
    %v1508 = vadd.f32 %v1483, %v1504
    %v1509 = vrot.slane %v464, 4
    %v1510 = vrot.slane %v465, 4
    %v1511 = vrot.slane %v466, 4
    %v1512 = vrot.slane %v467, 4
    %1517 = vrot.lane.b32.xlu0 %v1509, 81
    %v1518 = vpop.permute.xlu0 %1517
    %1519 = vrot.lane.b32.xlu0 %v1510, 81
    %v1520 = vpop.permute.xlu0 %1519
    %1521 = vrot.lane.b32.xlu0 %v1511, 81
    %v1522 = vpop.permute.xlu0 %1521
    %1523 = vrot.lane.b32.xlu0 %v1512, 81
    %v1524 = vpop.permute.xlu0 %1523
    %vm1525 = vcmp.lt.s32.totalorder %v481, 81
    %v1526 = vsel %vm1525, %v1522, %v1524
    %v1527 = vsel %vm1525, %v1520, %v1522
    %v1528 = vsel %vm1525, %v1518, %v1520
    %v1529 = vsel %vm1525, %v1524, %v1518
    %v1530 = vadd.f32 %v1505, %v1528
    %v1531 = vadd.f32 %v1506, %v1527
    %v1532 = vadd.f32 %v1507, %v1526
    %v1533 = vadd.f32 %v1508, %v1529
    %v1534 = vrot.slane %v464, 5
    %v1535 = vrot.slane %v465, 5
    %v1536 = vrot.slane %v466, 5
    %v1537 = vrot.slane %v467, 5
    %1542 = vrot.lane.b32.xlu0 %v1534, 80
    %v1543 = vpop.permute.xlu0 %1542
    %1544 = vrot.lane.b32.xlu0 %v1535, 80
    %v1545 = vpop.permute.xlu0 %1544
    %1546 = vrot.lane.b32.xlu0 %v1536, 80
    %v1547 = vpop.permute.xlu0 %1546
    %1548 = vrot.lane.b32.xlu0 %v1537, 80
    %v1549 = vpop.permute.xlu0 %1548
    %vm1550 = vcmp.lt.s32.totalorder %v481, 80
    %v1551 = vsel %vm1550, %v1547, %v1549
    %v1552 = vsel %vm1550, %v1545, %v1547
    %v1553 = vsel %vm1550, %v1543, %v1545
    %v1554 = vsel %vm1550, %v1549, %v1543
    %v1555 = vadd.f32 %v1530, %v1553
    %v1556 = vadd.f32 %v1531, %v1552
    %v1557 = vadd.f32 %v1532, %v1551
    %v1558 = vadd.f32 %v1533, %v1554
    %v1559 = vrot.slane %v464, 6
    %v1560 = vrot.slane %v465, 6
    %v1561 = vrot.slane %v466, 6
    %v1562 = vrot.slane %v467, 6
    %1567 = vrot.lane.b32.xlu0 %v1559, 79
    %v1568 = vpop.permute.xlu0 %1567
    %1569 = vrot.lane.b32.xlu0 %v1560, 79
    %v1570 = vpop.permute.xlu0 %1569
    %1571 = vrot.lane.b32.xlu0 %v1561, 79
    %v1572 = vpop.permute.xlu0 %1571
    %1573 = vrot.lane.b32.xlu0 %v1562, 79
    %v1574 = vpop.permute.xlu0 %1573
    %vm1575 = vcmp.lt.s32.totalorder %v481, 79
    %v1576 = vsel %vm1575, %v1572, %v1574
    %v1577 = vsel %vm1575, %v1570, %v1572
    %v1578 = vsel %vm1575, %v1568, %v1570
    %v1579 = vsel %vm1575, %v1574, %v1568
    %v1580 = vadd.f32 %v1555, %v1578
    %v1581 = vadd.f32 %v1556, %v1577
    %v1582 = vadd.f32 %v1557, %v1576
    %v1583 = vadd.f32 %v1558, %v1579
    %v1584 = vrot.slane %v464, 7
    %v1585 = vrot.slane %v465, 7
    %v1586 = vrot.slane %v466, 7
    %v1587 = vrot.slane %v467, 7
    %1592 = vrot.lane.b32.xlu0 %v1584, 78
    %v1593 = vpop.permute.xlu0 %1592
    %1594 = vrot.lane.b32.xlu0 %v1585, 78
    %v1595 = vpop.permute.xlu0 %1594
    %1596 = vrot.lane.b32.xlu0 %v1586, 78
    %v1597 = vpop.permute.xlu0 %1596
    %1598 = vrot.lane.b32.xlu0 %v1587, 78
    %v1599 = vpop.permute.xlu0 %1598
    %vm1600 = vcmp.lt.s32.totalorder %v481, 78
    %v1601 = vsel %vm1600, %v1597, %v1599
    %v1602 = vsel %vm1600, %v1595, %v1597
    %v1603 = vsel %vm1600, %v1593, %v1595
    %v1604 = vsel %vm1600, %v1599, %v1593
    %v1605 = vadd.f32 %v1580, %v1603
    %v1606 = vadd.f32 %v1581, %v1602
    %v1607 = vadd.f32 %v1582, %v1601
    %v1608 = vadd.f32 %v1583, %v1604
    %1609 = vrot.lane.b32.xlu0 %v468, 77
    %v1610 = vpop.permute.xlu0 %1609
    %1611 = vrot.lane.b32.xlu0 %v469, 77
    %v1612 = vpop.permute.xlu0 %1611
    %1613 = vrot.lane.b32.xlu0 %v470, 77
    %v1614 = vpop.permute.xlu0 %1613
    %1615 = vrot.lane.b32.xlu0 %v471, 77
    %v1616 = vpop.permute.xlu0 %1615
    %vm1617 = vcmp.lt.s32.totalorder %v481, 77
    %v1618 = vsel %vm1617, %v1614, %v1616
    %v1619 = vsel %vm1617, %v1612, %v1614
    %v1620 = vsel %vm1617, %v1610, %v1612
    %v1621 = vsel %vm1617, %v1616, %v1610
    %v1622 = vadd.f32 %v1605, %v1620
    %v1623 = vadd.f32 %v1606, %v1619
    %v1624 = vadd.f32 %v1607, %v1618
    %v1625 = vadd.f32 %v1608, %v1621
    %v1626 = vadd.f32 %v637, %v804
    %v1627 = vadd.f32 %v638, %v805
    %v1628 = vadd.f32 %v639, %v806
    %v1629 = vadd.f32 %v640, %v807
    %v1630 = vadd.f32 %v1626, %v971
    %v1631 = vadd.f32 %v1627, %v972
    %v1632 = vadd.f32 %v1628, %v973
    %v1633 = vadd.f32 %v1629, %v974
    %v1634 = vadd.f32 %v1630, %v1125
    %v1635 = vadd.f32 %v1631, %v1126
    %v1636 = vadd.f32 %v1632, %v1127
    %v1637 = vadd.f32 %v1633, %v1128
    %v1638 = vadd.f32 %v1634, %v1292
    %v1639 = vadd.f32 %v1635, %v1293
    %v1640 = vadd.f32 %v1636, %v1294
    %v1641 = vadd.f32 %v1637, %v1295
    %v1642 = vadd.f32 %v1638, %v1459
    %v1643 = vadd.f32 %v1639, %v1460
    %v1644 = vadd.f32 %v1640, %v1461
    %v1645 = vadd.f32 %v1641, %v1462
    %v1646 = vadd.f32 %v1642, %v1622
    %v1647 = vadd.f32 %v1643, %v1623
    %v1648 = vadd.f32 %v1644, %v1624
    %v1649 = vadd.f32 %v1645, %v1625
    %v1650 = vxor.u32 %v1646, 2147483648
    %v1651 = vxor.u32 %v1647, 2147483648
    %v1652 = vxor.u32 %v1648, 2147483648
    %v1653 = vxor.u32 %v1649, 2147483648
    %v1654 = vmul.f32 %v1650, 1.442695
    %v1655 = vpow.pop %v1654
    %v1656 = vmul.f32 %v1651, 1.442695
    %v1657 = vpow.pop %v1656
    %v1658 = vmul.f32 %v1652, 1.442695
    %v1659 = vpow.pop %v1658
    %v1660 = vmul.f32 %v1653, 1.442695
    %v1661 = vpow.pop %v1660
    %v1662 = vadd.f32 %v1655, 1.0
    %v1663 = vadd.f32 %v1657, 1.0
    %v1664 = vadd.f32 %v1659, 1.0
    %v1665 = vadd.f32 %v1661, 1.0
    %v1666 = vrcp.pop %v1662
    %v1667 = vmul.f32 1.0, %v1666
    %v1668 = vrcp.pop %v1663
    %v1669 = vmul.f32 1.0, %v1668
    %v1670 = vrcp.pop %v1664
    %v1671 = vmul.f32 1.0, %v1670
    %v1672 = vrcp.pop %v1665
    %v1673 = vmul.f32 1.0, %v1672
    %v1674 = vld [vmem:[%s10] sm:$0xff]
    %v1675 = vld [vmem:[%s10 + $0x8] sm:$0xff]
    %v1676 = vld [vmem:[%s10 + $0x10] sm:$0xff]
    %v1677 = vld [vmem:[%s10 + $0x18] sm:$0xff]
    %v1678 = vld [vmem:[%s10 + $0x20] sm:$0xff]
    %v1679 = vld [vmem:[%s10 + $0x28] sm:$0xff]
    %v1680 = vld [vmem:[%s10 + $0x30] sm:$0xff]
    %v1681 = vld [vmem:[%s10 + $0x38] sm:$0xff]
    %v1682 = vld [vmem:[%s10 + $0x40] sm:$0xff]
    %v1683 = vld [vmem:[%s10 + $0x48] sm:$0xff]
    %v1684 = vld [vmem:[%s10 + $0x50] sm:$0xff]
    %v1685 = vld [vmem:[%s10 + $0x58] sm:$0xff]
    %v1686 = vld [vmem:[%s10 + $0x60] sm:$0xff]
    %v1687 = vld [vmem:[%s10 + $0x68] sm:$0xff]
    %v1688 = vld [vmem:[%s10 + $0x70] sm:$0xff]
    %v1689 = vld [vmem:[%s10 + $0x78] sm:$0xff]
    %v1690 = vld [vmem:[%s10 + $0x80] sm:$0xff]
    %v1691 = vld [vmem:[%s10 + $0x88] sm:$0xff]
    %v1692 = vld [vmem:[%s10 + $0x90] sm:$0xff]
    %v1693 = vld [vmem:[%s10 + $0x98] sm:$0xff]
    %v1694 = vld [vmem:[%s10 + $0xa0] sm:$0xff]
    %v1695 = vld [vmem:[%s10 + $0xa8] sm:$0xff]
    %v1696 = vld [vmem:[%s10 + $0xb0] sm:$0xff]
    %v1697 = vld [vmem:[%s10 + $0xb8] sm:$0xff]
    %v1698 = vld [vmem:[%s10 + $0xc0] sm:$0xff]
    %v1699 = vld [vmem:[%s10 + $0xc8] sm:$0xff]
    %v1700 = vld [vmem:[%s10 + $0xd0] sm:$0xff]
    %v1701 = vld [vmem:[%s10 + $0xd8] sm:$0xff]
    %v1702 = vld [vmem:[%s10 + $0xe0] sm:$0xff]
    %v1703 = vld [vmem:[%s10 + $0xe8] sm:$0xff]
    %v1704 = vld [vmem:[%s10 + $0xf0] sm:$0xff]
    %v1705 = vld [vmem:[%s10 + $0xf8] sm:$0xff]
    %v1706 = vld [vmem:[%s10 + $0x100] sm:$0xff]
    %v1707 = vld [vmem:[%s10 + $0x108] sm:$0xff]
    %v1708 = vld [vmem:[%s10 + $0x110] sm:$0xff]
    %v1709 = vld [vmem:[%s10 + $0x118] sm:$0xff]
    %v1710 = vld [vmem:[%s10 + $0x120] sm:$0xff]
    %v1711 = vld [vmem:[%s10 + $0x128] sm:$0xff]
    %v1712 = vld [vmem:[%s10 + $0x130] sm:$0xff]
    %v1713 = vld [vmem:[%s10 + $0x138] sm:$0xff]
    %v1714 = vld [vmem:[%s10 + $0x140] sm:$0xff]
    %v1715 = vld [vmem:[%s10 + $0x148] sm:$0xff]
    %v1716 = vld [vmem:[%s10 + $0x150] sm:$0xff]
    %v1717 = vld [vmem:[%s10 + $0x158] sm:$0xff]
    %v1718 = vld [vmem:[%s10 + $0x160] sm:$0xff]
    %v1719 = vld [vmem:[%s10 + $0x168] sm:$0xff]
    %v1720 = vld [vmem:[%s10 + $0x170] sm:$0xff]
    %v1721 = vld [vmem:[%s10 + $0x178] sm:$0xff]
    %v1722 = vld [vmem:[%s10 + $0x180] sm:$0xff]
    %v1723 = vld [vmem:[%s10 + $0x188] sm:$0xff]
    %v1724 = vld [vmem:[%s10 + $0x190] sm:$0xff]
    %v1725 = vld [vmem:[%s10 + $0x198] sm:$0xff]
    %v1726 = vld [vmem:[%s10 + $0x1a0] sm:$0xff]
    %v1727 = vld [vmem:[%s10 + $0x1a8] sm:$0xff]
    %v1728 = vld [vmem:[%s10 + $0x1b0] sm:$0xff]
    %v1729 = vld [vmem:[%s10 + $0x1b8] sm:$0xff]
    %v1730 = vld [vmem:[%s10 + $0x1c0] sm:$0xff]
    %v1731 = vld [vmem:[%s10 + $0x1c8] sm:$0xff]
    %v1732 = vld [vmem:[%s10 + $0x1d0] sm:$0xff]
    %v1733 = vld [vmem:[%s10 + $0x1d8] sm:$0xff]
    %v1734 = vld [vmem:[%s10 + $0x1e0] sm:$0xff]
    %v1735 = vld [vmem:[%s10 + $0x1e8] sm:$0xff]
    %v1736 = vld [vmem:[%s10 + $0x1f0] sm:$0xff]
    %v1737 = vld [vmem:[%s10 + $0x1f8] sm:$0xff]
    %1738 = vmatprep.subr.mxu0 0.0
    %1739 = vmatpush1.msra.mxu0 %v1674
    %1740 = vmatprep.subr.mxu0 0.0
    %1741 = vmatpush1.msra.mxu0 %v1675
    %1742 = vmatprep.subr.mxu0 0.0
    %1743 = vmatpush1.msra.mxu0 %v1676
    %1744 = vmatprep.subr.mxu0 0.0
    %1745 = vmatpush1.msra.mxu0 %v1677
    %1746 = vmatprep.subr.mxu0 0.0
    %1747 = vmatpush1.msra.mxu0 %v1678
    %1748 = vmatprep.subr.mxu0 0.0
    %1749 = vmatpush1.msra.mxu0 %v1679
    %1750 = vmatprep.subr.mxu0 0.0
    %1751 = vmatpush1.msra.mxu0 %v1680
    %1752 = vmatprep.subr.mxu0 0.0
    %1753 = vmatpush1.msra.mxu0 %v1681
    %1754 = vmatprep.subr.mxu0 0.0
    %1755 = vmatpush1.msra.mxu0 %v1682
    %1756 = vmatprep.subr.mxu0 0.0
    %1757 = vmatpush1.msra.mxu0 %v1683
    %1758 = vmatprep.subr.mxu0 0.0
    %1759 = vmatpush1.msra.mxu0 %v1684
    %1760 = vmatprep.subr.mxu0 0.0
    %1761 = vmatpush1.msra.mxu0 %v1685
    %1762 = vmatprep.subr.mxu0 0.0
    %1763 = vmatpush1.msra.mxu0 %v1686
    %1764 = vmatprep.subr.mxu0 0.0
    %1765 = vmatpush1.msra.mxu0 %v1687
    %1766 = vmatprep.subr.mxu0 0.0
    %1767 = vmatpush1.msra.mxu0 %v1688
    %1768 = vmatprep.subr.mxu0 0.0
    %1769 = vmatpush1.msra.mxu0 %v1689
    %1770 = vmatprep.subr.mxu0 0.0
    %1771 = vmatpush1.msra.mxu0 %v1690
    %1772 = vmatprep.subr.mxu0 0.0
    %1773 = vmatpush1.msra.mxu0 %v1691
    %1774 = vmatprep.subr.mxu0 0.0
    %1775 = vmatpush1.msra.mxu0 %v1692
    %1776 = vmatprep.subr.mxu0 0.0
    %1777 = vmatpush1.msra.mxu0 %v1693
    %1778 = vmatprep.subr.mxu0 0.0
    %1779 = vmatpush1.msra.mxu0 %v1694
    %1780 = vmatprep.subr.mxu0 0.0
    %1781 = vmatpush1.msra.mxu0 %v1695
    %1782 = vmatprep.subr.mxu0 0.0
    %1783 = vmatpush1.msra.mxu0 %v1696
    %1784 = vmatprep.subr.mxu0 0.0
    %1785 = vmatpush1.msra.mxu0 %v1697
    %1786 = vmatprep.subr.mxu0 0.0
    %1787 = vmatpush1.msra.mxu0 %v1698
    %1788 = vmatprep.subr.mxu0 0.0
    %1789 = vmatpush1.msra.mxu0 %v1699
    %1790 = vmatprep.subr.mxu0 0.0
    %1791 = vmatpush1.msra.mxu0 %v1700
    %1792 = vmatprep.subr.mxu0 0.0
    %1793 = vmatpush1.msra.mxu0 %v1701
    %1794 = vmatprep.subr.mxu0 0.0
    %1795 = vmatpush1.msra.mxu0 %v1702
    %1796 = vmatprep.subr.mxu0 0.0
    %1797 = vmatpush1.msra.mxu0 %v1703
    %1798 = vmatprep.subr.mxu0 0.0
    %1799 = vmatpush1.msra.mxu0 %v1704
    %1800 = vmatprep.subr.mxu0 0.0
    %1801 = vmatpush1.msra.mxu0 %v1705
    %1802 = vmatprep.mubr.f32.mxu0 %v223
    %1803 = vmatmul.mubr.f32.gmra.mrb[0].mxu0 %v221
    %v1804 = vpop.f32.mrb[0].mxu0
    %v1805 = vadd.f32 0.0, %v1804
    %v1806 = vpop.f32.mrb[0].mxu0
    %1807 = vmatprep.mubr.f32.mxu0 %v229
    %1808 = vmatmul.mubr.f32.gmra.mrb[0].mxu0 %v227
    %v1809 = vpop.f32.mrb[0].mxu0
    %v1810 = vadd.f32 0.0, %v1809
    %v1811 = vpop.f32.mrb[0].mxu0
    %1812 = vmatprep.mubr.f32.mxu0 %v235
    %1813 = vmatmul.mubr.f32.gmra.mrb[0].mxu0 %v233
    %v1814 = vpop.f32.mrb[0].mxu0
    %v1815 = vadd.f32 0.0, %v1814
    %v1816 = vpop.f32.mrb[0].mxu0
    %1817 = vmatprep.mubr.f32.mxu0 %v241
    %1818 = vmatmul.mubr.f32.gmra.mrb[0].mxu0 %v239
    %v1819 = vpop.f32.mrb[0].mxu0
    %v1820 = vadd.f32 0.0, %v1819
    %v1821 = vpop.f32.mrb[0].mxu0
    %1822 = vdwg.mxu0
    %1823 = vmatprep.subr.mxu0 0.0
    %1824 = vmatpush1.msra.mxu0 %v1706
    %1825 = vmatprep.subr.mxu0 0.0
    %1826 = vmatpush1.msra.mxu0 %v1707
    %1827 = vmatprep.subr.mxu0 0.0
    %1828 = vmatpush1.msra.mxu0 %v1708
    %1829 = vmatprep.subr.mxu0 0.0
    %1830 = vmatpush1.msra.mxu0 %v1709
    %1831 = vmatprep.subr.mxu0 0.0
    %1832 = vmatpush1.msra.mxu0 %v1710
    %1833 = vmatprep.subr.mxu0 0.0
    %1834 = vmatpush1.msra.mxu0 %v1711
    %1835 = vmatprep.subr.mxu0 0.0
    %1836 = vmatpush1.msra.mxu0 %v1712
    %1837 = vmatprep.subr.mxu0 0.0
    %1838 = vmatpush1.msra.mxu0 %v1713
    %1839 = vmatprep.subr.mxu0 0.0
    %1840 = vmatpush1.msra.mxu0 %v1714
    %1841 = vmatprep.subr.mxu0 0.0
    %1842 = vmatpush1.msra.mxu0 %v1715
    %1843 = vmatprep.subr.mxu0 0.0
    %1844 = vmatpush1.msra.mxu0 %v1716
    %1845 = vmatprep.subr.mxu0 0.0
    %1846 = vmatpush1.msra.mxu0 %v1717
    %1847 = vmatprep.subr.mxu0 0.0
    %1848 = vmatpush1.msra.mxu0 %v1718
    %1849 = vmatprep.subr.mxu0 0.0
    %1850 = vmatpush1.msra.mxu0 %v1719
    %1851 = vmatprep.subr.mxu0 0.0
    %1852 = vmatpush1.msra.mxu0 %v1720
    %1853 = vmatprep.subr.mxu0 0.0
    %1854 = vmatpush1.msra.mxu0 %v1721
    %1855 = vmatprep.subr.mxu0 0.0
    %1856 = vmatpush1.msra.mxu0 %v1722
    %1857 = vmatprep.subr.mxu0 0.0
    %1858 = vmatpush1.msra.mxu0 %v1723
    %1859 = vmatprep.subr.mxu0 0.0
    %1860 = vmatpush1.msra.mxu0 %v1724
    %1861 = vmatprep.subr.mxu0 0.0
    %1862 = vmatpush1.msra.mxu0 %v1725
    %1863 = vmatprep.subr.mxu0 0.0
    %1864 = vmatpush1.msra.mxu0 %v1726
    %1865 = vmatprep.subr.mxu0 0.0
    %1866 = vmatpush1.msra.mxu0 %v1727
    %1867 = vmatprep.subr.mxu0 0.0
    %1868 = vmatpush1.msra.mxu0 %v1728
    %1869 = vmatprep.subr.mxu0 0.0
    %1870 = vmatpush1.msra.mxu0 %v1729
    %1871 = vmatprep.subr.mxu0 0.0
    %1872 = vmatpush1.msra.mxu0 %v1730
    %1873 = vmatprep.subr.mxu0 0.0
    %1874 = vmatpush1.msra.mxu0 %v1731
    %1875 = vmatprep.subr.mxu0 0.0
    %1876 = vmatpush1.msra.mxu0 %v1732
    %1877 = vmatprep.subr.mxu0 0.0
    %1878 = vmatpush1.msra.mxu0 %v1733
    %1879 = vmatprep.subr.mxu0 0.0
    %1880 = vmatpush1.msra.mxu0 %v1734
    %1881 = vmatprep.subr.mxu0 0.0
    %1882 = vmatpush1.msra.mxu0 %v1735
    %1883 = vmatprep.subr.mxu0 0.0
    %1884 = vmatpush1.msra.mxu0 %v1736
    %1885 = vmatprep.subr.mxu0 0.0
    %1886 = vmatpush1.msra.mxu0 %v1737
    %1887 = vmatprep.mubr.f32.mxu0 %v354
    %1888 = vmatmul.mubr.f32.gmra.mrb[0].mxu0 %v352
    %v1889 = vpop.f32.mrb[0].mxu0
    %v1890 = vadd.f32 %v1805, %v1889
    %v1891 = vpop.f32.mrb[0].mxu0
    %1892 = vmatprep.mubr.f32.mxu0 %v360
    %1893 = vmatmul.mubr.f32.gmra.mrb[0].mxu0 %v358
    %v1894 = vpop.f32.mrb[0].mxu0
    %v1895 = vadd.f32 %v1810, %v1894
    %v1896 = vpop.f32.mrb[0].mxu0
    %1897 = vmatprep.mubr.f32.mxu0 %v366
    %1898 = vmatmul.mubr.f32.gmra.mrb[0].mxu0 %v364
    %v1899 = vpop.f32.mrb[0].mxu0
    %v1900 = vadd.f32 %v1815, %v1899
    %v1901 = vpop.f32.mrb[0].mxu0
    %1902 = vmatprep.mubr.f32.mxu0 %v372
    %1903 = vmatmul.mubr.f32.gmra.mrb[0].mxu0 %v370
    %v1904 = vpop.f32.mrb[0].mxu0
    %v1905 = vadd.f32 %v1820, %v1904
    %v1906 = vpop.f32.mrb[0].mxu0
    %1907 = vdwg.mxu0
    %v1908 = vmul.f32 %v1890, 0.00390625
    %v1909 = vmul.f32 %v1895, 0.00390625
    %v1910 = vmul.f32 %v1900, 0.00390625
    %v1911 = vmul.f32 %v1905, 0.00390625
    %v1912 = vld [vmem:[%s4] sm:$0x3]
    %v1913 = vld [vmem:[%s5] sm:$0x3]
    %1915 = vset.pattern.permute.xlu0 0
    %1916 = vperm.xlu0 %1915, %v1913
    %v1917 = vpop.permute.xlu0 %1916
    %vm1919 = vcmask 261120
    %v1921 = vsel %vm1919, %v1912, 0
    %1923 = vmatprep.subr.mxu0 0.0
    %1924 = vmatpush1.msra.mxu0 %v1908
    %1925 = vmatprep.subr.mxu0 0.0
    %1926 = vmatpush1.msra.mxu0 %v1909
    %1927 = vmatprep.subr.mxu0 0.0
    %1928 = vmatpush1.msra.mxu0 %v1910
    %1929 = vmatprep.subr.mxu0 0.0
    %1930 = vmatpush1.msra.mxu0 %v1911
    %1931 = vmatprep.subr.mxu0 0.0
    %1932 = vmatpush1.msra.mxu0 0.0
    %1933 = vmatprep.subr.mxu0 0.0
    %1934 = vmatpush1.msra.mxu0 0.0
    %1935 = vmatprep.subr.mxu0 0.0
    %1936 = vmatpush1.msra.mxu0 0.0
    %1937 = vmatprep.subr.mxu0 0.0
    %1938 = vmatpush1.msra.mxu0 0.0
    %1939 = vmatprep.subr.mxu0 0.0
    %1940 = vmatpush1.msra.mxu0 0.0
    %1941 = vmatprep.subr.mxu0 0.0
    %1942 = vmatpush1.msra.mxu0 0.0
    %1943 = vmatprep.subr.mxu0 0.0
    %1944 = vmatpush1.msra.mxu0 0.0
    %1945 = vmatprep.subr.mxu0 0.0
    %1946 = vmatpush1.msra.mxu0 0.0
    %1947 = vmatprep.subr.mxu0 0.0
    %1948 = vmatpush1.msra.mxu0 0.0
    %1949 = vmatprep.subr.mxu0 0.0
    %1950 = vmatpush1.msra.mxu0 0.0
    %1951 = vmatprep.subr.mxu0 0.0
    %1952 = vmatpush1.msra.mxu0 0.0
    %1953 = vmatprep.subr.mxu0 0.0
    %1954 = vmatpush1.msra.mxu0 0.0
    %1955 = vmatprep.subr.mxu0 0.0
    %1956 = vmatpush1.msra.mxu0 0.0
    %1957 = vmatprep.subr.mxu0 0.0
    %1958 = vmatpush1.msra.mxu0 0.0
    %1959 = vmatprep.subr.mxu0 0.0
    %1960 = vmatpush1.msra.mxu0 0.0
    %1961 = vmatprep.subr.mxu0 0.0
    %1962 = vmatpush1.msra.mxu0 0.0
    %1963 = vmatprep.subr.mxu0 0.0
    %1964 = vmatpush1.msra.mxu0 0.0
    %1965 = vmatprep.subr.mxu0 0.0
    %1966 = vmatpush1.msra.mxu0 0.0
    %1967 = vmatprep.subr.mxu0 0.0
    %1968 = vmatpush1.msra.mxu0 0.0
    %1969 = vmatprep.subr.mxu0 0.0
    %1970 = vmatpush1.msra.mxu0 0.0
    %1971 = vmatprep.subr.mxu0 0.0
    %1972 = vmatpush1.msra.mxu0 0.0
    %1973 = vmatprep.subr.mxu0 0.0
    %1974 = vmatpush1.msra.mxu0 0.0
    %1975 = vmatprep.subr.mxu0 0.0
    %1976 = vmatpush1.msra.mxu0 0.0
    %1977 = vmatprep.subr.mxu0 0.0
    %1978 = vmatpush1.msra.mxu0 0.0
    %1979 = vmatprep.subr.mxu0 0.0
    %1980 = vmatpush1.msra.mxu0 0.0
    %1981 = vmatprep.subr.mxu0 0.0
    %1982 = vmatpush1.msra.mxu0 0.0
    %1983 = vmatprep.subr.mxu0 0.0
    %1984 = vmatpush1.msra.mxu0 0.0
    %1985 = vmatprep.subr.mxu0 0.0
    %1986 = vmatpush1.msra.mxu0 0.0
    %1987 = vmatprep.mubr.f32.mxu0 0.0
    %1988 = vmatmul.mubr.f32.gmra.mrb[0].mxu0 %v1921
    %v1989 = vpop.f32.mrb[0].mxu0
    %v1990 = vadd.f32 %v1917, %v1989
    %v1991 = vpop.f32.mrb[0].mxu0
    %1992 = vdwg.mxu0
    %v1993 = vmax.f32 %v1990, 0.0
    %v1994 = vld [vmem:[%s6] sm:$0xff]
    %v1995 = vld [vmem:[%s6 + $0x8] sm:$0xff]
    %v1996 = vld [vmem:[%s6 + $0x10] sm:$0xff]
    %v1997 = vld [vmem:[%s6 + $0x18] sm:$0xff]
    %v1998 = vld [vmem:[%s7] sm:$0xff]
    %v1999 = vld [vmem:[%s7 + $0x8] sm:$0xff]
    %v2000 = vld [vmem:[%s7 + $0x10] sm:$0xff]
    %v2001 = vld [vmem:[%s7 + $0x18] sm:$0xff]
    %2003 = vset.pattern.permute.xlu0 0
    %2004 = vperm.xlu0 %2003, %v1998
    %v2005 = vpop.permute.xlu0 %2004
    %2008 = vset.pattern.permute.xlu0 0
    %2009 = vperm.xlu0 %2008, %v1999
    %v2010 = vpop.permute.xlu0 %2009
    %2013 = vset.pattern.permute.xlu0 0
    %2014 = vperm.xlu0 %2013, %v2000
    %v2015 = vpop.permute.xlu0 %2014
    %2018 = vset.pattern.permute.xlu0 0
    %2019 = vperm.xlu0 %2018, %v2001
    %v2020 = vpop.permute.xlu0 %2019
    %vm2022 = vcmask 15360
    %v2024 = vsel %vm2022, %v1994, 0
    %v2027 = vsel %vm2022, %v1995, 0
    %v2030 = vsel %vm2022, %v1996, 0
    %v2033 = vsel %vm2022, %v1997, 0
    %vm2035 = vcmask 1041408
    %v2037 = vsel %vm2035, %v1993, 0
    %2039 = vmatprep.subr.mxu0 0.0
    %2040 = vmatpush1.msra.mxu0 %v2037
    %2041 = vmatprep.subr.mxu0 0.0
    %2042 = vmatpush1.msra.mxu0 0.0
    %2043 = vmatprep.subr.mxu0 0.0
    %2044 = vmatpush1.msra.mxu0 0.0
    %2045 = vmatprep.subr.mxu0 0.0
    %2046 = vmatpush1.msra.mxu0 0.0
    %2047 = vmatprep.subr.mxu0 0.0
    %2048 = vmatpush1.msra.mxu0 0.0
    %2049 = vmatprep.subr.mxu0 0.0
    %2050 = vmatpush1.msra.mxu0 0.0
    %2051 = vmatprep.subr.mxu0 0.0
    %2052 = vmatpush1.msra.mxu0 0.0
    %2053 = vmatprep.subr.mxu0 0.0
    %2054 = vmatpush1.msra.mxu0 0.0
    %2055 = vmatprep.subr.mxu0 0.0
    %2056 = vmatpush1.msra.mxu0 0.0
    %2057 = vmatprep.subr.mxu0 0.0
    %2058 = vmatpush1.msra.mxu0 0.0
    %2059 = vmatprep.subr.mxu0 0.0
    %2060 = vmatpush1.msra.mxu0 0.0
    %2061 = vmatprep.subr.mxu0 0.0
    %2062 = vmatpush1.msra.mxu0 0.0
    %2063 = vmatprep.subr.mxu0 0.0
    %2064 = vmatpush1.msra.mxu0 0.0
    %2065 = vmatprep.subr.mxu0 0.0
    %2066 = vmatpush1.msra.mxu0 0.0
    %2067 = vmatprep.subr.mxu0 0.0
    %2068 = vmatpush1.msra.mxu0 0.0
    %2069 = vmatprep.subr.mxu0 0.0
    %2070 = vmatpush1.msra.mxu0 0.0
    %2071 = vmatprep.subr.mxu0 0.0
    %2072 = vmatpush1.msra.mxu0 0.0
    %2073 = vmatprep.subr.mxu0 0.0
    %2074 = vmatpush1.msra.mxu0 0.0
    %2075 = vmatprep.subr.mxu0 0.0
    %2076 = vmatpush1.msra.mxu0 0.0
    %2077 = vmatprep.subr.mxu0 0.0
    %2078 = vmatpush1.msra.mxu0 0.0
    %2079 = vmatprep.subr.mxu0 0.0
    %2080 = vmatpush1.msra.mxu0 0.0
    %2081 = vmatprep.subr.mxu0 0.0
    %2082 = vmatpush1.msra.mxu0 0.0
    %2083 = vmatprep.subr.mxu0 0.0
    %2084 = vmatpush1.msra.mxu0 0.0
    %2085 = vmatprep.subr.mxu0 0.0
    %2086 = vmatpush1.msra.mxu0 0.0
    %2087 = vmatprep.subr.mxu0 0.0
    %2088 = vmatpush1.msra.mxu0 0.0
    %2089 = vmatprep.subr.mxu0 0.0
    %2090 = vmatpush1.msra.mxu0 0.0
    %2091 = vmatprep.subr.mxu0 0.0
    %2092 = vmatpush1.msra.mxu0 0.0
    %2093 = vmatprep.subr.mxu0 0.0
    %2094 = vmatpush1.msra.mxu0 0.0
    %2095 = vmatprep.subr.mxu0 0.0
    %2096 = vmatpush1.msra.mxu0 0.0
    %2097 = vmatprep.subr.mxu0 0.0
    %2098 = vmatpush1.msra.mxu0 0.0
    %2099 = vmatprep.subr.mxu0 0.0
    %2100 = vmatpush1.msra.mxu0 0.0
    %2101 = vmatprep.subr.mxu0 0.0
    %2102 = vmatpush1.msra.mxu0 0.0
    %2103 = vmatprep.mubr.f32.mxu0 0.0
    %2104 = vmatmul.mubr.f32.gmra.mrb[0].mxu0 %v2024
    %v2105 = vpop.f32.mrb[0].mxu0
    %v2106 = vadd.f32 %v2005, %v2105
    %v2107 = vpop.f32.mrb[0].mxu0
    %2108 = vmatprep.mubr.f32.mxu0 0.0
    %2109 = vmatmul.mubr.f32.gmra.mrb[0].mxu0 %v2027
    %v2110 = vpop.f32.mrb[0].mxu0
    %v2111 = vadd.f32 %v2010, %v2110
    %v2112 = vpop.f32.mrb[0].mxu0
    %2113 = vmatprep.mubr.f32.mxu0 0.0
    %2114 = vmatmul.mubr.f32.gmra.mrb[0].mxu0 %v2030
    %v2115 = vpop.f32.mrb[0].mxu0
    %v2116 = vadd.f32 %v2015, %v2115
    %v2117 = vpop.f32.mrb[0].mxu0
    %2118 = vmatprep.mubr.f32.mxu0 0.0
    %2119 = vmatmul.mubr.f32.gmra.mrb[0].mxu0 %v2033
    %v2120 = vpop.f32.mrb[0].mxu0
    %v2121 = vadd.f32 %v2020, %v2120
    %v2122 = vpop.f32.mrb[0].mxu0
    %2123 = vdwg.mxu0
    %v2124 = vxor.u32 %v2106, 2147483648
    %v2125 = vxor.u32 %v2111, 2147483648
    %v2126 = vxor.u32 %v2116, 2147483648
    %v2127 = vxor.u32 %v2121, 2147483648
    %v2128 = vmul.f32 %v2124, 1.442695
    %v2129 = vpow.pop %v2128
    %v2130 = vmul.f32 %v2125, 1.442695
    %v2131 = vpow.pop %v2130
    %v2132 = vmul.f32 %v2126, 1.442695
    %v2133 = vpow.pop %v2132
    %v2134 = vmul.f32 %v2127, 1.442695
    %v2135 = vpow.pop %v2134
    %v2136 = vadd.f32 %v2129, 1.0
    %v2137 = vadd.f32 %v2131, 1.0
    %v2138 = vadd.f32 %v2133, 1.0
    %v2139 = vadd.f32 %v2135, 1.0
    %v2140 = vrcp.pop %v2136
    %v2141 = vmul.f32 1.0, %v2140
    %v2142 = vrcp.pop %v2137
    %v2143 = vmul.f32 1.0, %v2142
    %v2144 = vrcp.pop %v2138
    %v2145 = vmul.f32 1.0, %v2144
    %v2146 = vrcp.pop %v2139
    %v2147 = vmul.f32 1.0, %v2146
    %v2148 = vld [vmem:[%s9] sm:$0xff]
    %v2149 = vlaneseq
    %v2150 = vshrl.u32 %v2149, 7
    %v2151 = vsub.s32 0, %v2150
    %v2152 = vrot.slane %v1667, %v2151
    %v2153 = vlaneseq
    %v2154 = vshrl.u32 %v2153, 7
    %v2155 = vsub.s32 0, %v2154
    %v2156 = vrot.slane %v1669, %v2155
    %v2157 = vlaneseq
    %v2158 = vshrl.u32 %v2157, 7
    %v2159 = vsub.s32 0, %v2158
    %v2160 = vrot.slane %v1671, %v2159
    %v2161 = vlaneseq
    %v2162 = vshrl.u32 %v2161, 7
    %v2163 = vsub.s32 0, %v2162
    %v2164 = vrot.slane %v1673, %v2163
    %v2166 = vcombine.high %v2148, %v2148
    %v2168 = vunpack.c.l.s4 1983009808
    %v2169 = vunpack.c.0.s8 %v2168
    %v2170 = vlaneseq
    %v2171 = vshrl.u32 %v2170, 7
    %v2172 = vsub.s32 %v2169, %v2171
    %v2173 = vrot.slane %v2148, %v2172
    %v2175 = vunpack.c.l.s4 1983009808
    %v2176 = vunpack.c.0.s8 %v2175
    %v2177 = vlaneseq
    %v2178 = vshrl.u32 %v2177, 7
    %v2179 = vsub.s32 %v2176, %v2178
    %v2180 = vrot.slane %v2166, %v2179
    %v2181 = vcombine.high %v2173, %v2173
    %v2182 = vcombine.high %v2180, %v2180
    %v2184 = vsel %vm2022, %v2141, 0
    %v2187 = vsel %vm2022, %v2143, 0
    %v2190 = vsel %vm2022, %v2145, 0
    %v2193 = vsel %vm2022, %v2147, 0
    %v2195 = vsel %vm2035, %v2173, 0
    %v2197 = vsel %vm2035, %v2181, 0
    %v2199 = vsel %vm2035, %v2180, 0
    %v2201 = vsel %vm2035, %v2182, 0
    %2203 = vmatprep.subr.mxu0 %v2197
    %2204 = vmatpush1.msra.mxu0 %v2195
    %2205 = vmatprep.subr.mxu0 0.0
    %2206 = vmatpush1.msra.mxu0 0.0
    %2207 = vmatprep.subr.mxu0 0.0
    %2208 = vmatpush1.msra.mxu0 0.0
    %2209 = vmatprep.subr.mxu0 0.0
    %2210 = vmatpush1.msra.mxu0 0.0
    %2211 = vmatprep.subr.mxu0 0.0
    %2212 = vmatpush1.msra.mxu0 0.0
    %2213 = vmatprep.subr.mxu0 0.0
    %2214 = vmatpush1.msra.mxu0 0.0
    %2215 = vmatprep.subr.mxu0 0.0
    %2216 = vmatpush1.msra.mxu0 0.0
    %2217 = vmatprep.subr.mxu0 0.0
    %2218 = vmatpush1.msra.mxu0 0.0
    %2219 = vmatprep.subr.mxu0 0.0
    %2220 = vmatpush1.msra.mxu0 0.0
    %2221 = vmatprep.subr.mxu0 0.0
    %2222 = vmatpush1.msra.mxu0 0.0
    %2223 = vmatprep.subr.mxu0 0.0
    %2224 = vmatpush1.msra.mxu0 0.0
    %2225 = vmatprep.subr.mxu0 0.0
    %2226 = vmatpush1.msra.mxu0 0.0
    %2227 = vmatprep.subr.mxu0 0.0
    %2228 = vmatpush1.msra.mxu0 0.0
    %2229 = vmatprep.subr.mxu0 0.0
    %2230 = vmatpush1.msra.mxu0 0.0
    %2231 = vmatprep.subr.mxu0 0.0
    %2232 = vmatpush1.msra.mxu0 0.0
    %2233 = vmatprep.subr.mxu0 0.0
    %2234 = vmatpush1.msra.mxu0 0.0
    %2235 = vmatprep.subr.mxu0 0.0
    %2236 = vmatpush1.msra.mxu0 0.0
    %2237 = vmatprep.subr.mxu0 0.0
    %2238 = vmatpush1.msra.mxu0 0.0
    %2239 = vmatprep.subr.mxu0 0.0
    %2240 = vmatpush1.msra.mxu0 0.0
    %2241 = vmatprep.subr.mxu0 0.0
    %2242 = vmatpush1.msra.mxu0 0.0
    %2243 = vmatprep.subr.mxu0 0.0
    %2244 = vmatpush1.msra.mxu0 0.0
    %2245 = vmatprep.subr.mxu0 0.0
    %2246 = vmatpush1.msra.mxu0 0.0
    %2247 = vmatprep.subr.mxu0 0.0
    %2248 = vmatpush1.msra.mxu0 0.0
    %2249 = vmatprep.subr.mxu0 0.0
    %2250 = vmatpush1.msra.mxu0 0.0
    %2251 = vmatprep.subr.mxu0 0.0
    %2252 = vmatpush1.msra.mxu0 0.0
    %2253 = vmatprep.subr.mxu0 0.0
    %2254 = vmatpush1.msra.mxu0 0.0
    %2255 = vmatprep.subr.mxu0 0.0
    %2256 = vmatpush1.msra.mxu0 0.0
    %2257 = vmatprep.subr.mxu0 0.0
    %2258 = vmatpush1.msra.mxu0 0.0
    %2259 = vmatprep.subr.mxu0 0.0
    %2260 = vmatpush1.msra.mxu0 0.0
    %2261 = vmatprep.subr.mxu0 0.0
    %2262 = vmatpush1.msra.mxu0 0.0
    %2263 = vmatprep.subr.mxu0 0.0
    %2264 = vmatpush1.msra.mxu0 0.0
    %2265 = vmatprep.subr.mxu0 0.0
    %2266 = vmatpush1.msra.mxu0 0.0
    %2267 = vmatprep.mubr.f32.mxu0 0.0
    %2268 = vmatmul.mubr.f32.gmra.mrb[0].mxu0 %v2184
    %v2269 = vpop.f32.mrb[0].mxu0
    %v2270 = vadd.f32 %v2152, %v2269
    %v2271 = vpop.f32.mrb[0].mxu0
    %v2272 = vadd.f32 %v2156, %v2271
    %2273 = vmatprep.mubr.f32.mxu0 0.0
    %2274 = vmatmul.mubr.f32.gmra.mrb[0].mxu0 %v2187
    %v2275 = vpop.f32.mrb[0].mxu0
    %v2276 = vadd.f32 %v2152, %v2275
    %v2277 = vpop.f32.mrb[0].mxu0
    %v2278 = vadd.f32 %v2156, %v2277
    %2279 = vmatprep.mubr.f32.mxu0 0.0
    %2280 = vmatmul.mubr.f32.gmra.mrb[0].mxu0 %v2190
    %v2281 = vpop.f32.mrb[0].mxu0
    %v2282 = vadd.f32 %v2152, %v2281
    %v2283 = vpop.f32.mrb[0].mxu0
    %v2284 = vadd.f32 %v2156, %v2283
    %2285 = vmatprep.mubr.f32.mxu0 0.0
    %2286 = vmatmul.mubr.f32.gmra.mrb[0].mxu0 %v2193
    %v2287 = vpop.f32.mrb[0].mxu0
    %v2288 = vadd.f32 %v2152, %v2287
    %v2289 = vpop.f32.mrb[0].mxu0
    %v2290 = vadd.f32 %v2156, %v2289
    %2291 = vdwg.mxu0
    %2292 = vmatprep.subr.mxu0 %v2201
    %2293 = vmatpush1.msra.mxu0 %v2199
    %2294 = vmatprep.subr.mxu0 0.0
    %2295 = vmatpush1.msra.mxu0 0.0
    %2296 = vmatprep.subr.mxu0 0.0
    %2297 = vmatpush1.msra.mxu0 0.0
    %2298 = vmatprep.subr.mxu0 0.0
    %2299 = vmatpush1.msra.mxu0 0.0
    %2300 = vmatprep.subr.mxu0 0.0
    %2301 = vmatpush1.msra.mxu0 0.0
    %2302 = vmatprep.subr.mxu0 0.0
    %2303 = vmatpush1.msra.mxu0 0.0
    %2304 = vmatprep.subr.mxu0 0.0
    %2305 = vmatpush1.msra.mxu0 0.0
    %2306 = vmatprep.subr.mxu0 0.0
    %2307 = vmatpush1.msra.mxu0 0.0
    %2308 = vmatprep.subr.mxu0 0.0
    %2309 = vmatpush1.msra.mxu0 0.0
    %2310 = vmatprep.subr.mxu0 0.0
    %2311 = vmatpush1.msra.mxu0 0.0
    %2312 = vmatprep.subr.mxu0 0.0
    %2313 = vmatpush1.msra.mxu0 0.0
    %2314 = vmatprep.subr.mxu0 0.0
    %2315 = vmatpush1.msra.mxu0 0.0
    %2316 = vmatprep.subr.mxu0 0.0
    %2317 = vmatpush1.msra.mxu0 0.0
    %2318 = vmatprep.subr.mxu0 0.0
    %2319 = vmatpush1.msra.mxu0 0.0
    %2320 = vmatprep.subr.mxu0 0.0
    %2321 = vmatpush1.msra.mxu0 0.0
    %2322 = vmatprep.subr.mxu0 0.0
    %2323 = vmatpush1.msra.mxu0 0.0
    %2324 = vmatprep.subr.mxu0 0.0
    %2325 = vmatpush1.msra.mxu0 0.0
    %2326 = vmatprep.subr.mxu0 0.0
    %2327 = vmatpush1.msra.mxu0 0.0
    %2328 = vmatprep.subr.mxu0 0.0
    %2329 = vmatpush1.msra.mxu0 0.0
    %2330 = vmatprep.subr.mxu0 0.0
    %2331 = vmatpush1.msra.mxu0 0.0
    %2332 = vmatprep.subr.mxu0 0.0
    %2333 = vmatpush1.msra.mxu0 0.0
    %2334 = vmatprep.subr.mxu0 0.0
    %2335 = vmatpush1.msra.mxu0 0.0
    %2336 = vmatprep.subr.mxu0 0.0
    %2337 = vmatpush1.msra.mxu0 0.0
    %2338 = vmatprep.subr.mxu0 0.0
    %2339 = vmatpush1.msra.mxu0 0.0
    %2340 = vmatprep.subr.mxu0 0.0
    %2341 = vmatpush1.msra.mxu0 0.0
    %2342 = vmatprep.subr.mxu0 0.0
    %2343 = vmatpush1.msra.mxu0 0.0
    %2344 = vmatprep.subr.mxu0 0.0
    %2345 = vmatpush1.msra.mxu0 0.0
    %2346 = vmatprep.subr.mxu0 0.0
    %2347 = vmatpush1.msra.mxu0 0.0
    %2348 = vmatprep.subr.mxu0 0.0
    %2349 = vmatpush1.msra.mxu0 0.0
    %2350 = vmatprep.subr.mxu0 0.0
    %2351 = vmatpush1.msra.mxu0 0.0
    %2352 = vmatprep.subr.mxu0 0.0
    %2353 = vmatpush1.msra.mxu0 0.0
    %2354 = vmatprep.subr.mxu0 0.0
    %2355 = vmatpush1.msra.mxu0 0.0
    %2356 = vmatprep.mubr.f32.mxu0 0.0
    %2357 = vmatmul.mubr.f32.gmra.mrb[0].mxu0 %v2184
    %v2358 = vpop.f32.mrb[0].mxu0
    %v2359 = vadd.f32 %v2160, %v2358
    %v2360 = vpop.f32.mrb[0].mxu0
    %v2361 = vadd.f32 %v2164, %v2360
    %2362 = vmatprep.mubr.f32.mxu0 0.0
    %2363 = vmatmul.mubr.f32.gmra.mrb[0].mxu0 %v2187
    %v2364 = vpop.f32.mrb[0].mxu0
    %v2365 = vadd.f32 %v2160, %v2364
    %v2366 = vpop.f32.mrb[0].mxu0
    %v2367 = vadd.f32 %v2164, %v2366
    %2368 = vmatprep.mubr.f32.mxu0 0.0
    %2369 = vmatmul.mubr.f32.gmra.mrb[0].mxu0 %v2190
    %v2370 = vpop.f32.mrb[0].mxu0
    %v2371 = vadd.f32 %v2160, %v2370
    %v2372 = vpop.f32.mrb[0].mxu0
    %v2373 = vadd.f32 %v2164, %v2372
    %2374 = vmatprep.mubr.f32.mxu0 0.0
    %2375 = vmatmul.mubr.f32.gmra.mrb[0].mxu0 %v2193
    %v2376 = vpop.f32.mrb[0].mxu0
    %v2377 = vadd.f32 %v2160, %v2376
    %v2378 = vpop.f32.mrb[0].mxu0
    %v2379 = vadd.f32 %v2164, %v2378
    %2380 = vdwg.mxu0
    %v2381 = vmul.f32 %v221, %v2270
    %v2382 = vmul.f32 %v223, %v2272
    %v2383 = vmul.f32 %v352, %v2359
    %v2384 = vmul.f32 %v354, %v2361
    %v2385 = vmul.f32 %v227, %v2276
    %v2386 = vmul.f32 %v229, %v2278
    %v2387 = vmul.f32 %v358, %v2365
    %v2388 = vmul.f32 %v360, %v2367
    %v2389 = vmul.f32 %v233, %v2282
    %v2390 = vmul.f32 %v235, %v2284
    %v2391 = vmul.f32 %v364, %v2371
    %v2392 = vmul.f32 %v366, %v2373
    %v2393 = vmul.f32 %v239, %v2288
    %v2394 = vmul.f32 %v241, %v2290
    %v2395 = vmul.f32 %v370, %v2377
    %v2396 = vmul.f32 %v372, %v2379
    %2397 = vmatprep.subr.mxu0 0.0
    %2398 = vmatpush1.msra.mxu0 %v1674
    %2399 = vmatprep.subr.mxu0 0.0
    %2400 = vmatpush1.msra.mxu0 %v1675
    %2401 = vmatprep.subr.mxu0 0.0
    %2402 = vmatpush1.msra.mxu0 %v1676
    %2403 = vmatprep.subr.mxu0 0.0
    %2404 = vmatpush1.msra.mxu0 %v1677
    %2405 = vmatprep.subr.mxu0 0.0
    %2406 = vmatpush1.msra.mxu0 %v1678
    %2407 = vmatprep.subr.mxu0 0.0
    %2408 = vmatpush1.msra.mxu0 %v1679
    %2409 = vmatprep.subr.mxu0 0.0
    %2410 = vmatpush1.msra.mxu0 %v1680
    %2411 = vmatprep.subr.mxu0 0.0
    %2412 = vmatpush1.msra.mxu0 %v1681
    %2413 = vmatprep.subr.mxu0 0.0
    %2414 = vmatpush1.msra.mxu0 %v1682
    %2415 = vmatprep.subr.mxu0 0.0
    %2416 = vmatpush1.msra.mxu0 %v1683
    %2417 = vmatprep.subr.mxu0 0.0
    %2418 = vmatpush1.msra.mxu0 %v1684
    %2419 = vmatprep.subr.mxu0 0.0
    %2420 = vmatpush1.msra.mxu0 %v1685
    %2421 = vmatprep.subr.mxu0 0.0
    %2422 = vmatpush1.msra.mxu0 %v1686
    %2423 = vmatprep.subr.mxu0 0.0
    %2424 = vmatpush1.msra.mxu0 %v1687
    %2425 = vmatprep.subr.mxu0 0.0
    %2426 = vmatpush1.msra.mxu0 %v1688
    %2427 = vmatprep.subr.mxu0 0.0
    %2428 = vmatpush1.msra.mxu0 %v1689
    %2429 = vmatprep.subr.mxu0 0.0
    %2430 = vmatpush1.msra.mxu0 %v1690
    %2431 = vmatprep.subr.mxu0 0.0
    %2432 = vmatpush1.msra.mxu0 %v1691
    %2433 = vmatprep.subr.mxu0 0.0
    %2434 = vmatpush1.msra.mxu0 %v1692
    %2435 = vmatprep.subr.mxu0 0.0
    %2436 = vmatpush1.msra.mxu0 %v1693
    %2437 = vmatprep.subr.mxu0 0.0
    %2438 = vmatpush1.msra.mxu0 %v1694
    %2439 = vmatprep.subr.mxu0 0.0
    %2440 = vmatpush1.msra.mxu0 %v1695
    %2441 = vmatprep.subr.mxu0 0.0
    %2442 = vmatpush1.msra.mxu0 %v1696
    %2443 = vmatprep.subr.mxu0 0.0
    %2444 = vmatpush1.msra.mxu0 %v1697
    %2445 = vmatprep.subr.mxu0 0.0
    %2446 = vmatpush1.msra.mxu0 %v1698
    %2447 = vmatprep.subr.mxu0 0.0
    %2448 = vmatpush1.msra.mxu0 %v1699
    %2449 = vmatprep.subr.mxu0 0.0
    %2450 = vmatpush1.msra.mxu0 %v1700
    %2451 = vmatprep.subr.mxu0 0.0
    %2452 = vmatpush1.msra.mxu0 %v1701
    %2453 = vmatprep.subr.mxu0 0.0
    %2454 = vmatpush1.msra.mxu0 %v1702
    %2455 = vmatprep.subr.mxu0 0.0
    %2456 = vmatpush1.msra.mxu0 %v1703
    %2457 = vmatprep.subr.mxu0 0.0
    %2458 = vmatpush1.msra.mxu0 %v1704
    %2459 = vmatprep.subr.mxu0 0.0
    %2460 = vmatpush1.msra.mxu0 %v1705
    %2461 = vmatprep.mubr.f32.mxu0 %v2382
    %2462 = vmatmul.mubr.f32.gmra.mrb[0].mxu0 %v2381
    %v2463 = vpop.f32.mrb[0].mxu0
    %v2464 = vadd.f32 0.0, %v2463
    %v2465 = vpop.f32.mrb[0].mxu0
    %2466 = vmatprep.mubr.f32.mxu0 %v2386
    %2467 = vmatmul.mubr.f32.gmra.mrb[0].mxu0 %v2385
    %v2468 = vpop.f32.mrb[0].mxu0
    %v2469 = vadd.f32 0.0, %v2468
    %v2470 = vpop.f32.mrb[0].mxu0
    %2471 = vmatprep.mubr.f32.mxu0 %v2390
    %2472 = vmatmul.mubr.f32.gmra.mrb[0].mxu0 %v2389
    %v2473 = vpop.f32.mrb[0].mxu0
    %v2474 = vadd.f32 0.0, %v2473
    %v2475 = vpop.f32.mrb[0].mxu0
    %2476 = vmatprep.mubr.f32.mxu0 %v2394
    %2477 = vmatmul.mubr.f32.gmra.mrb[0].mxu0 %v2393
    %v2478 = vpop.f32.mrb[0].mxu0
    %v2479 = vadd.f32 0.0, %v2478
    %v2480 = vpop.f32.mrb[0].mxu0
    %2481 = vdwg.mxu0
    %2482 = vmatprep.subr.mxu0 0.0
    %2483 = vmatpush1.msra.mxu0 %v1706
    %2484 = vmatprep.subr.mxu0 0.0
    %2485 = vmatpush1.msra.mxu0 %v1707
    %2486 = vmatprep.subr.mxu0 0.0
    %2487 = vmatpush1.msra.mxu0 %v1708
    %2488 = vmatprep.subr.mxu0 0.0
    %2489 = vmatpush1.msra.mxu0 %v1709
    %2490 = vmatprep.subr.mxu0 0.0
    %2491 = vmatpush1.msra.mxu0 %v1710
    %2492 = vmatprep.subr.mxu0 0.0
    %2493 = vmatpush1.msra.mxu0 %v1711
    %2494 = vmatprep.subr.mxu0 0.0
    %2495 = vmatpush1.msra.mxu0 %v1712
    %2496 = vmatprep.subr.mxu0 0.0
    %2497 = vmatpush1.msra.mxu0 %v1713
    %2498 = vmatprep.subr.mxu0 0.0
    %2499 = vmatpush1.msra.mxu0 %v1714
    %2500 = vmatprep.subr.mxu0 0.0
    %2501 = vmatpush1.msra.mxu0 %v1715
    %2502 = vmatprep.subr.mxu0 0.0
    %2503 = vmatpush1.msra.mxu0 %v1716
    %2504 = vmatprep.subr.mxu0 0.0
    %2505 = vmatpush1.msra.mxu0 %v1717
    %2506 = vmatprep.subr.mxu0 0.0
    %2507 = vmatpush1.msra.mxu0 %v1718
    %2508 = vmatprep.subr.mxu0 0.0
    %2509 = vmatpush1.msra.mxu0 %v1719
    %2510 = vmatprep.subr.mxu0 0.0
    %2511 = vmatpush1.msra.mxu0 %v1720
    %2512 = vmatprep.subr.mxu0 0.0
    %2513 = vmatpush1.msra.mxu0 %v1721
    %2514 = vmatprep.subr.mxu0 0.0
    %2515 = vmatpush1.msra.mxu0 %v1722
    %2516 = vmatprep.subr.mxu0 0.0
    %2517 = vmatpush1.msra.mxu0 %v1723
    %2518 = vmatprep.subr.mxu0 0.0
    %2519 = vmatpush1.msra.mxu0 %v1724
    %2520 = vmatprep.subr.mxu0 0.0
    %2521 = vmatpush1.msra.mxu0 %v1725
    %2522 = vmatprep.subr.mxu0 0.0
    %2523 = vmatpush1.msra.mxu0 %v1726
    %2524 = vmatprep.subr.mxu0 0.0
    %2525 = vmatpush1.msra.mxu0 %v1727
    %2526 = vmatprep.subr.mxu0 0.0
    %2527 = vmatpush1.msra.mxu0 %v1728
    %2528 = vmatprep.subr.mxu0 0.0
    %2529 = vmatpush1.msra.mxu0 %v1729
    %2530 = vmatprep.subr.mxu0 0.0
    %2531 = vmatpush1.msra.mxu0 %v1730
    %2532 = vmatprep.subr.mxu0 0.0
    %2533 = vmatpush1.msra.mxu0 %v1731
    %2534 = vmatprep.subr.mxu0 0.0
    %2535 = vmatpush1.msra.mxu0 %v1732
    %2536 = vmatprep.subr.mxu0 0.0
    %2537 = vmatpush1.msra.mxu0 %v1733
    %2538 = vmatprep.subr.mxu0 0.0
    %2539 = vmatpush1.msra.mxu0 %v1734
    %2540 = vmatprep.subr.mxu0 0.0
    %2541 = vmatpush1.msra.mxu0 %v1735
    %2542 = vmatprep.subr.mxu0 0.0
    %2543 = vmatpush1.msra.mxu0 %v1736
    %2544 = vmatprep.subr.mxu0 0.0
    %2545 = vmatpush1.msra.mxu0 %v1737
    %2546 = vmatprep.mubr.f32.mxu0 %v2384
    %2547 = vmatmul.mubr.f32.gmra.mrb[0].mxu0 %v2383
    %v2548 = vpop.f32.mrb[0].mxu0
    %v2549 = vadd.f32 %v2464, %v2548
    %v2550 = vpop.f32.mrb[0].mxu0
    %2551 = vmatprep.mubr.f32.mxu0 %v2388
    %2552 = vmatmul.mubr.f32.gmra.mrb[0].mxu0 %v2387
    %v2553 = vpop.f32.mrb[0].mxu0
    %v2554 = vadd.f32 %v2469, %v2553
    %v2555 = vpop.f32.mrb[0].mxu0
    %2556 = vmatprep.mubr.f32.mxu0 %v2392
    %2557 = vmatmul.mubr.f32.gmra.mrb[0].mxu0 %v2391
    %v2558 = vpop.f32.mrb[0].mxu0
    %v2559 = vadd.f32 %v2474, %v2558
    %v2560 = vpop.f32.mrb[0].mxu0
    %2561 = vmatprep.mubr.f32.mxu0 %v2396
    %2562 = vmatmul.mubr.f32.gmra.mrb[0].mxu0 %v2395
    %v2563 = vpop.f32.mrb[0].mxu0
    %v2564 = vadd.f32 %v2479, %v2563
    %v2565 = vpop.f32.mrb[0].mxu0
    %2566 = vdwg.mxu0
    %v2567 = vmul.f32 %v2549, 0.00390625
    %v2568 = vmul.f32 %v2554, 0.00390625
    %v2569 = vmul.f32 %v2559, 0.00390625
    %v2570 = vmul.f32 %v2564, 0.00390625
    %v2571 = vld [vmem:[%s1] sm:$0xff]
    %v2572 = vld [vmem:[%s1 + $0x8] sm:$0xff]
    %v2573 = vld [vmem:[%s1 + $0x10] sm:$0xff]
    %v2574 = vld [vmem:[%s1 + $0x18] sm:$0xff]
    %v2575 = vmul.f32 %v2571, %v2567
    %v2576 = vmul.f32 %v2572, %v2568
    %v2577 = vmul.f32 %v2573, %v2569
    %v2578 = vmul.f32 %v2574, %v2570
    %v2580 = vsel %vm2022, %v2575, 0
    %v2583 = vsel %vm2022, %v2576, 0
    %v2586 = vsel %vm2022, %v2577, 0
    %v2589 = vsel %vm2022, %v2578, 0
    %2591 = vmatprep.subr.mxu0 %v2197
    %2592 = vmatpush1.msra.mxu0 %v2195
    %2593 = vmatprep.subr.mxu0 0.0
    %2594 = vmatpush1.msra.mxu0 0.0
    %2595 = vmatprep.subr.mxu0 0.0
    %2596 = vmatpush1.msra.mxu0 0.0
    %2597 = vmatprep.subr.mxu0 0.0
    %2598 = vmatpush1.msra.mxu0 0.0
    %2599 = vmatprep.subr.mxu0 0.0
    %2600 = vmatpush1.msra.mxu0 0.0
    %2601 = vmatprep.subr.mxu0 0.0
    %2602 = vmatpush1.msra.mxu0 0.0
    %2603 = vmatprep.subr.mxu0 0.0
    %2604 = vmatpush1.msra.mxu0 0.0
    %2605 = vmatprep.subr.mxu0 0.0
    %2606 = vmatpush1.msra.mxu0 0.0
    %2607 = vmatprep.subr.mxu0 0.0
    %2608 = vmatpush1.msra.mxu0 0.0
    %2609 = vmatprep.subr.mxu0 0.0
    %2610 = vmatpush1.msra.mxu0 0.0
    %2611 = vmatprep.subr.mxu0 0.0
    %2612 = vmatpush1.msra.mxu0 0.0
    %2613 = vmatprep.subr.mxu0 0.0
    %2614 = vmatpush1.msra.mxu0 0.0
    %2615 = vmatprep.subr.mxu0 0.0
    %2616 = vmatpush1.msra.mxu0 0.0
    %2617 = vmatprep.subr.mxu0 0.0
    %2618 = vmatpush1.msra.mxu0 0.0
    %2619 = vmatprep.subr.mxu0 0.0
    %2620 = vmatpush1.msra.mxu0 0.0
    %2621 = vmatprep.subr.mxu0 0.0
    %2622 = vmatpush1.msra.mxu0 0.0
    %2623 = vmatprep.subr.mxu0 0.0
    %2624 = vmatpush1.msra.mxu0 0.0
    %2625 = vmatprep.subr.mxu0 0.0
    %2626 = vmatpush1.msra.mxu0 0.0
    %2627 = vmatprep.subr.mxu0 0.0
    %2628 = vmatpush1.msra.mxu0 0.0
    %2629 = vmatprep.subr.mxu0 0.0
    %2630 = vmatpush1.msra.mxu0 0.0
    %2631 = vmatprep.subr.mxu0 0.0
    %2632 = vmatpush1.msra.mxu0 0.0
    %2633 = vmatprep.subr.mxu0 0.0
    %2634 = vmatpush1.msra.mxu0 0.0
    %2635 = vmatprep.subr.mxu0 0.0
    %2636 = vmatpush1.msra.mxu0 0.0
    %2637 = vmatprep.subr.mxu0 0.0
    %2638 = vmatpush1.msra.mxu0 0.0
    %2639 = vmatprep.subr.mxu0 0.0
    %2640 = vmatpush1.msra.mxu0 0.0
    %2641 = vmatprep.subr.mxu0 0.0
    %2642 = vmatpush1.msra.mxu0 0.0
    %2643 = vmatprep.subr.mxu0 0.0
    %2644 = vmatpush1.msra.mxu0 0.0
    %2645 = vmatprep.subr.mxu0 0.0
    %2646 = vmatpush1.msra.mxu0 0.0
    %2647 = vmatprep.subr.mxu0 0.0
    %2648 = vmatpush1.msra.mxu0 0.0
    %2649 = vmatprep.subr.mxu0 0.0
    %2650 = vmatpush1.msra.mxu0 0.0
    %2651 = vmatprep.subr.mxu0 0.0
    %2652 = vmatpush1.msra.mxu0 0.0
    %2653 = vmatprep.subr.mxu0 0.0
    %2654 = vmatpush1.msra.mxu0 0.0
    %2655 = vmatprep.mubr.f32.mxu0 0.0
    %2656 = vmatmul.mubr.f32.gmra.mrb[0].mxu0 %v2580
    %v2657 = vpop.f32.mrb[0].mxu0
    %v2658 = vadd.f32 %v2381, %v2657
    %v2659 = vpop.f32.mrb[0].mxu0
    %v2660 = vadd.f32 %v2382, %v2659
    %2661 = vmatprep.mubr.f32.mxu0 0.0
    %2662 = vmatmul.mubr.f32.gmra.mrb[0].mxu0 %v2583
    %v2663 = vpop.f32.mrb[0].mxu0
    %v2664 = vadd.f32 %v2385, %v2663
    %v2665 = vpop.f32.mrb[0].mxu0
    %v2666 = vadd.f32 %v2386, %v2665
    %2667 = vmatprep.mubr.f32.mxu0 0.0
    %2668 = vmatmul.mubr.f32.gmra.mrb[0].mxu0 %v2586
    %v2669 = vpop.f32.mrb[0].mxu0
    %v2670 = vadd.f32 %v2389, %v2669
    %v2671 = vpop.f32.mrb[0].mxu0
    %v2672 = vadd.f32 %v2390, %v2671
    %2673 = vmatprep.mubr.f32.mxu0 0.0
    %2674 = vmatmul.mubr.f32.gmra.mrb[0].mxu0 %v2589
    %v2675 = vpop.f32.mrb[0].mxu0
    %v2676 = vadd.f32 %v2393, %v2675
    %v2677 = vpop.f32.mrb[0].mxu0
    %v2678 = vadd.f32 %v2394, %v2677
    %2679 = vdwg.mxu0
    %2680 = vmatprep.subr.mxu0 %v2201
    %2681 = vmatpush1.msra.mxu0 %v2199
    %2682 = vmatprep.subr.mxu0 0.0
    %2683 = vmatpush1.msra.mxu0 0.0
    %2684 = vmatprep.subr.mxu0 0.0
    %2685 = vmatpush1.msra.mxu0 0.0
    %2686 = vmatprep.subr.mxu0 0.0
    %2687 = vmatpush1.msra.mxu0 0.0
    %2688 = vmatprep.subr.mxu0 0.0
    %2689 = vmatpush1.msra.mxu0 0.0
    %2690 = vmatprep.subr.mxu0 0.0
    %2691 = vmatpush1.msra.mxu0 0.0
    %2692 = vmatprep.subr.mxu0 0.0
    %2693 = vmatpush1.msra.mxu0 0.0
    %2694 = vmatprep.subr.mxu0 0.0
    %2695 = vmatpush1.msra.mxu0 0.0
    %2696 = vmatprep.subr.mxu0 0.0
    %2697 = vmatpush1.msra.mxu0 0.0
    %2698 = vmatprep.subr.mxu0 0.0
    %2699 = vmatpush1.msra.mxu0 0.0
    %2700 = vmatprep.subr.mxu0 0.0
    %2701 = vmatpush1.msra.mxu0 0.0
    %2702 = vmatprep.subr.mxu0 0.0
    %2703 = vmatpush1.msra.mxu0 0.0
    %2704 = vmatprep.subr.mxu0 0.0
    %2705 = vmatpush1.msra.mxu0 0.0
    %2706 = vmatprep.subr.mxu0 0.0
    %2707 = vmatpush1.msra.mxu0 0.0
    %2708 = vmatprep.subr.mxu0 0.0
    %2709 = vmatpush1.msra.mxu0 0.0
    %2710 = vmatprep.subr.mxu0 0.0
    %2711 = vmatpush1.msra.mxu0 0.0
    %2712 = vmatprep.subr.mxu0 0.0
    %2713 = vmatpush1.msra.mxu0 0.0
    %2714 = vmatprep.subr.mxu0 0.0
    %2715 = vmatpush1.msra.mxu0 0.0
    %2716 = vmatprep.subr.mxu0 0.0
    %2717 = vmatpush1.msra.mxu0 0.0
    %2718 = vmatprep.subr.mxu0 0.0
    %2719 = vmatpush1.msra.mxu0 0.0
    %2720 = vmatprep.subr.mxu0 0.0
    %2721 = vmatpush1.msra.mxu0 0.0
    %2722 = vmatprep.subr.mxu0 0.0
    %2723 = vmatpush1.msra.mxu0 0.0
    %2724 = vmatprep.subr.mxu0 0.0
    %2725 = vmatpush1.msra.mxu0 0.0
    %2726 = vmatprep.subr.mxu0 0.0
    %2727 = vmatpush1.msra.mxu0 0.0
    %2728 = vmatprep.subr.mxu0 0.0
    %2729 = vmatpush1.msra.mxu0 0.0
    %2730 = vmatprep.subr.mxu0 0.0
    %2731 = vmatpush1.msra.mxu0 0.0
    %2732 = vmatprep.subr.mxu0 0.0
    %2733 = vmatpush1.msra.mxu0 0.0
    %2734 = vmatprep.subr.mxu0 0.0
    %2735 = vmatpush1.msra.mxu0 0.0
    %2736 = vmatprep.subr.mxu0 0.0
    %2737 = vmatpush1.msra.mxu0 0.0
    %2738 = vmatprep.subr.mxu0 0.0
    %2739 = vmatpush1.msra.mxu0 0.0
    %2740 = vmatprep.subr.mxu0 0.0
    %2741 = vmatpush1.msra.mxu0 0.0
    %2742 = vmatprep.subr.mxu0 0.0
    %2743 = vmatpush1.msra.mxu0 0.0
    %2744 = vmatprep.mubr.f32.mxu0 0.0
    %2745 = vmatmul.mubr.f32.gmra.mrb[0].mxu0 %v2580
    %v2746 = vpop.f32.mrb[0].mxu0
    %v2747 = vadd.f32 %v2383, %v2746
    %v2748 = vpop.f32.mrb[0].mxu0
    %v2749 = vadd.f32 %v2384, %v2748
    %2750 = vmatprep.mubr.f32.mxu0 0.0
    %2751 = vmatmul.mubr.f32.gmra.mrb[0].mxu0 %v2583
    %v2752 = vpop.f32.mrb[0].mxu0
    %v2753 = vadd.f32 %v2387, %v2752
    %v2754 = vpop.f32.mrb[0].mxu0
    %v2755 = vadd.f32 %v2388, %v2754
    %2756 = vmatprep.mubr.f32.mxu0 0.0
    %2757 = vmatmul.mubr.f32.gmra.mrb[0].mxu0 %v2586
    %v2758 = vpop.f32.mrb[0].mxu0
    %v2759 = vadd.f32 %v2391, %v2758
    %v2760 = vpop.f32.mrb[0].mxu0
    %v2761 = vadd.f32 %v2392, %v2760
    %2762 = vmatprep.mubr.f32.mxu0 0.0
    %2763 = vmatmul.mubr.f32.gmra.mrb[0].mxu0 %v2589
    %v2764 = vpop.f32.mrb[0].mxu0
    %v2765 = vadd.f32 %v2395, %v2764
    %v2766 = vpop.f32.mrb[0].mxu0
    %v2767 = vadd.f32 %v2396, %v2766
    %2768 = vdwg.mxu0
    %2769 = vst [vmem:[#allocation2] sm:$0xff] %v2658
    %2770 = vst [vmem:[#allocation2 + $0x8] sm:$0xff] %v2660
    %2771 = vst [vmem:[#allocation2 + $0x10] sm:$0xff] %v2747
    %2772 = vst [vmem:[#allocation2 + $0x18] sm:$0xff] %v2749
    %2773 = vst [vmem:[#allocation2 + $0x20] sm:$0xff] %v2664
    %2774 = vst [vmem:[#allocation2 + $0x28] sm:$0xff] %v2666
    %2775 = vst [vmem:[#allocation2 + $0x30] sm:$0xff] %v2753
    %2776 = vst [vmem:[#allocation2 + $0x38] sm:$0xff] %v2755
    %2777 = vst [vmem:[#allocation2 + $0x40] sm:$0xff] %v2670
    %2778 = vst [vmem:[#allocation2 + $0x48] sm:$0xff] %v2672
    %2779 = vst [vmem:[#allocation2 + $0x50] sm:$0xff] %v2759
    %2780 = vst [vmem:[#allocation2 + $0x58] sm:$0xff] %v2761
    %2781 = vst [vmem:[#allocation2 + $0x60] sm:$0xff] %v2676
    %2782 = vst [vmem:[#allocation2 + $0x68] sm:$0xff] %v2678
    %2783 = vst [vmem:[#allocation2 + $0x70] sm:$0xff] %v2765
    %2784 = vst [vmem:[#allocation2 + $0x78] sm:$0xff] %v2767
    // Predicated region
    $region46: #{tpu_custom_call.1} parent=1 // pred_check
      _
    $region47: #{tpu_custom_call.1} parent=1 // pred_check_branch
      %2786 = sbr.rel (0) target = $region49
    $region48: #{tpu_custom_call.1} parent=1 // pred_region
      %s2788 = ssub.s32 2048, 2048
      %2789 = vsyncadd [#allocation3], %s2788
      %s2790 = sshll.u32 [#allocation2], 4
      %s2791 = int_to_ptr.vmem [resolvable:$true] %s2790
      %2796 = dma.vmem_to_hbm [thread:$0]  %s2791, 2048, %s11, [#allocation3], 512, 512, 32
    $region49: #{tpu_custom_call.1} parent=1 // pred_fallthru
      _
    // Predicated region
    $region50: #{tpu_custom_call.1} parent=1 // pred_check
      _
    $region51: #{tpu_custom_call.1} parent=1 // pred_check_branch
      %2798 = sbr.rel (0) target = $region53
    $region52: #{tpu_custom_call.1} parent=1 // pred_region
      %2799 = dma.done [#allocation3], 2048
    $region53: #{tpu_custom_call.1} parent=1 // pred_fallthru
      _
    %2800 = vsyncpa [#allocation3], 1

</llo_original>
